<compile_context>
chip_gen: v7x
topology: tpu7x:2x2x1
jax: 0.10.0
libtpu: 0.0.40
codegen_flags: <defaults>
</compile_context>

<pallas_src>
import functools

import jax
import jax.numpy as jnp
import numpy as np
from jax.experimental import pallas as pl
from jax.experimental.pallas import tpu as pltpu

MXU_DTYPE = jnp.bfloat16      # matmul operand dtype (f32 accumulation on MXU)
LN_EPS = 1e-5


# ------------------------- in-kernel helpers -------------------------
def _layernorm(x, g, b):
    """LayerNorm over last axis; x (T, C) f32, g/b (1, C) f32."""
    mu = jnp.mean(x, axis=-1, keepdims=True)
    var = jnp.mean(jnp.square(x - mu), axis=-1, keepdims=True)
    return (x - mu) * jax.lax.rsqrt(var + LN_EPS) * g + b


def _time_shift(x):
    """RWKV time shift: row t sees row t-1, row 0 zeroed.  x (T, C) f32."""
    T, C = x.shape
    xs = pltpu.roll(x, 1, 0)                       # xs[t] = x[t-1] (row 0 wraps)
    row = jax.lax.broadcasted_iota(jnp.int32, (T, C), 0)
    return jnp.where(row == 0, 0.0, xs)


def _const_spec(shape):
    """Whole-array block, same block every grid step (VMEM resident).
    Single-buffered: the index map is constant so no double buffer is needed."""
    nd = len(shape)
    idx = lambda i: (0,) * nd
    try:
        return pl.BlockSpec(shape, idx, pipeline_mode=pl.Buffered(1))
    except TypeError:                               # older jax: no pipeline_mode
        return pl.BlockSpec(shape, idx)


# ------------------------- fused Block kernel -------------------------
def _block_kernel(x_ref, xemb_ref, pos_ref,
                  ln0g_ref, ln0b_ref, ln1g_ref, ln1b_ref,
                  ln2g_ref, ln2b_ref, tlng_ref, tlnb_ref,
                  amk_ref, amv_ref, amr_ref, w_ref, u_ref,
                  awk_ref, awv_ref, awr_ref, awo_ref,
                  fmk_ref, fmr_ref, fwk_ref, fwv_ref, fwr_ref,
                  twq_ref, twk_ref, twv_ref,
                  o_ref,
                  k_s, v_s, sr_s, wkv_s,
                  *, n_b, scale):
    T, C = x_ref.shape[1], x_ref.shape[2]
    mxu = awk_ref.dtype

    # ---- stage 1: ln0 + pos_emb, ln1 + time-shift mix, R/K/V projections ----
    # (per-sequence static loop; results land in interleaved (T, n_b*C) scratch)
    x0 = []
    for b in range(n_b):
        x0b = _layernorm(x_ref[b], ln0g_ref[...], ln0b_ref[...]) + pos_ref[...]
        x0.append(x0b)
        xx = _layernorm(x0b, ln1g_ref[...], ln1b_ref[...])
        xs = _time_shift(xx)
        mk, mv, mr = amk_ref[...], amv_ref[...], amr_ref[...]
        xk = xx * mk + xs * (1.0 - mk)
        xv = xx * mv + xs * (1.0 - mv)
        xr = xx * mr + xs * (1.0 - mr)
        cols = slice(b * C, (b + 1) * C)
        k_s[:, cols] = jnp.dot(xk.astype(mxu), awk_ref[...],
                               preferred_element_type=jnp.float32)
        v_s[:, cols] = jnp.dot(xv.astype(mxu), awv_ref[...],
                               preferred_element_type=jnp.float32)
        sr_s[:, cols] = jax.nn.sigmoid(
            jnp.dot(xr.astype(mxu), awr_ref[...],
                    preferred_element_type=jnp.float32))

    # ---- stage 2: WKV recurrence, n_b sequences interleaved, f32 ------------
    BC = n_b * C
    w = w_ref[...]                                  # (1, n_b*C): -exp(time_decay), tiled
    u = u_ref[...]                                  # (1, n_b*C): time_first, tiled

    def body(t, carry):
        aa, bb, pp = carry
        kk = k_s[pl.ds(t, 1), :]
        vv = v_s[pl.ds(t, 1), :]
        ww = u + kk
        qq = jnp.maximum(pp, ww)
        e1 = jnp.exp(pp - qq)
        e2 = jnp.exp(ww - qq)
        num = e1 * aa + e2 * vv
        den = e1 * bb + e2
        inv = pl.reciprocal(den, approx=True)       # EUP slot
        inv = inv * (2.0 - den * inv)               # one Newton step (~f32 accurate)
        # sigmoid gate fused into the store (no post-loop gating pass)
        wkv_s[pl.ds(t, 1), :] = sr_s[pl.ds(t, 1), :] * num * inv
        ww = w + pp
        qq = jnp.maximum(ww, kk)
        e1 = jnp.exp(ww - qq)
        e2 = jnp.exp(kk - qq)
        return (e1 * aa + e2 * vv, e1 * bb + e2, qq)

    init = (jnp.zeros((1, BC), jnp.float32),
            jnp.zeros((1, BC), jnp.float32),
            jnp.full((1, BC), -1e38, jnp.float32))
    jax.lax.fori_loop(0, T, body, init, unroll=min(T, 8))

    # ---- stage 3: wo proj + residual, ChannelMix, tiny attention ------------
    for b in range(n_b):
        cols = slice(b * C, (b + 1) * C)
        att = jnp.dot(wkv_s[:, cols].astype(mxu), awo_ref[...],
                      preferred_element_type=jnp.float32)
        x1 = x0[b] + att

        # ChannelMix (squared-ReLU FFN), fused.
        xx = _layernorm(x1, ln2g_ref[...], ln2b_ref[...])
        xs = _time_shift(xx)
        mk, mr = fmk_ref[...], fmr_ref[...]
        xk = xx * mk + xs * (1.0 - mk)
        xr = xx * mr + xs * (1.0 - mr)
        kf = jnp.dot(xk.astype(mxu), fwk_ref[...],
                     preferred_element_type=jnp.float32)
        kf = jnp.square(jnp.maximum(kf, 0.0))
        kv = jnp.dot(kf.astype(mxu), fwv_ref[...],
                     preferred_element_type=jnp.float32)
        r = jnp.dot(xr.astype(mxu), fwr_ref[...],
                    preferred_element_type=jnp.float32)
        x2 = x1 + jax.nn.sigmoid(r) * kv

        # Tiny attention (causal, masked_fill(…, 0), no softmax), fused.
        xx = _layernorm(x2, tlng_ref[...], tlnb_ref[...])
        xm = xx.astype(mxu)
        q = jnp.dot(xm, twq_ref[...], preferred_element_type=jnp.float32)
        k = jnp.dot(xm, twk_ref[...], preferred_element_type=jnp.float32)
        v = jnp.dot(xemb_ref[b].astype(mxu), twv_ref[...],
                    preferred_element_type=jnp.float32)
        # q @ k^T via dot_general contracting the last dims (no XLU transpose);
        # q/k last dim is zero-padded to 128 lanes -> result unchanged.
        c = jax.lax.dot_general(
            q.astype(mxu), k.astype(mxu),
            dimension_numbers=(((1,), (1,)), ((), ())),
            preferred_element_type=jnp.float32) * scale
        row = jax.lax.broadcasted_iota(jnp.int32, (T, T), 0)
        col = jax.lax.broadcasted_iota(jnp.int32, (T, T), 1)
        c = jnp.where(row >= col, c, 0.0)           # masked_fill(mask==0, 0)
        att2 = jnp.dot(c.astype(mxu), v.astype(mxu),
                       preferred_element_type=jnp.float32)
        o_ref[b] = (x2 + att2).astype(o_ref.dtype)


# ------------------------- wrapper -------------------------
def _vmem_limit_bytes(n_b, T, C, F, Dp):
    f32, bf16 = 4, 2
    act = 3 * 2 * n_b * T * C * f32                  # x / x_emb / out (double-buffered)
    weights = (6 * C * C + 2 * C * F + 2 * C * Dp) * bf16
    scratch = 4 * T * n_b * C * f32                  # k / v / sr / wkv
    live = (T * F + T * T + 10 * T * C + 2 * T * Dp + n_b * T * C) * f32
    est = act + 2 * weights + scratch + live
    return int(min(max(2 * est + (8 << 20), 32 << 20), 64 << 20))


def block_forward(params, x, x_emb, tiny_dim, n_b=None):
    B, T, C = x.shape
    att, ffn, tp = params["att"], params["ffn"], params["tiny"]
    F = ffn["wk"].shape[1]
    D = tp["wq"].shape[1]
    Dp = max(128, -(-D // 128) * 128)                # lane-dense tiny q/k width
    if n_b is None:                                   # sequences interleaved per step
        n_b = next(c for c in (4, 2, 1) if B % c == 0)

    vec = lambda a: a.reshape(1, C).astype(jnp.float32)
    # layer_id == 0: 2-D positional embedding (P*P == T+1)
    pos = (params["pos_emb_x"] + params["pos_emb_y"]).reshape(T + 1, -1)[:-1, :]
    pos = pos.astype(jnp.float32)
    w_t = jnp.tile(-jnp.exp(att["time_decay"].astype(jnp.float32)).reshape(1, C),
                   (1, n_b))
    u_t = jnp.tile(att["time_first"].astype(jnp.float32).reshape(1, C), (1, n_b))
    twq = jnp.pad(tp["wq"], ((0, 0), (0, Dp - D)))   # zero-pad to 128 lanes
    twk = jnp.pad(tp["wk"], ((0, 0), (0, Dp - D)))

    seq_spec = pl.BlockSpec((n_b, T, C), lambda i: (i, 0, 0))
    in_specs = ([seq_spec, seq_spec, _const_spec((T, C))]
                + [_const_spec((1, C))] * 8                       # ln0/1/2 + tiny-ln g,b
                + [_const_spec((1, C))] * 3                       # att mix_k/v/r
                + [_const_spec((1, n_b * C))] * 2                 # w, u (tiled)
                + [_const_spec((C, C))] * 4                       # att wk/wv/wr/wo
                + [_const_spec((1, C))] * 2                       # ffn mix_k/r
                + [_const_spec((C, F)), _const_spec((F, C)), _const_spec((C, C))]
                + [_const_spec((C, Dp)), _const_spec((C, Dp)), _const_spec((C, C))])

    kernel = functools.partial(_block_kernel, n_b=n_b,
                               scale=float(tiny_dim) ** -0.5)
    return pl.pallas_call(
        kernel,
        out_shape=jax.ShapeDtypeStruct((B, T, C), jnp.float32),
        grid=(B // n_b,),
        in_specs=in_specs,
        out_specs=seq_spec,
        scratch_shapes=[pltpu.VMEM((T, n_b * C), jnp.float32) for _ in range(4)],
        compiler_params=pltpu.CompilerParams(
            dimension_semantics=("parallel",),
            vmem_limit_bytes=_vmem_limit_bytes(n_b, T, C, F, Dp)),
    )(x, x_emb, pos,
      vec(params["ln0"]["g"]), vec(params["ln0"]["b"]),
      vec(params["ln1"]["g"]), vec(params["ln1"]["b"]),
      vec(params["ln2"]["g"]), vec(params["ln2"]["b"]),
      vec(tp["ln_g"]), vec(tp["ln_b"]),
      vec(att["mix_k"]), vec(att["mix_v"]), vec(att["mix_r"]),
      w_t, u_t,
      att["wk"], att["wv"], att["wr"], att["wo"],
      vec(ffn["mix_k"]), vec(ffn["mix_r"]),
      ffn["wk"], ffn["wv"], ffn["wr"],
      twq, twk, tp["wv"])


# ------------------------- pure-JAX reference (correctness check) -----------
def _ln_ref(x, g, b):
    mu = jnp.mean(x, axis=-1, keepdims=True)
    var = jnp.mean(jnp.square(x - mu), axis=-1, keepdims=True)
    return (x - mu) * jax.lax.rsqrt(var + LN_EPS) * g + b


def _shift_ref(x):
    return jnp.pad(x, ((0, 0), (1, 0), (0, 0)))[:, :-1, :]


def _mm(a, w):
    return jnp.dot(a.astype(MXU_DTYPE), w.astype(MXU_DTYPE),
                   preferred_element_type=jnp.float32)


def block_forward_ref(params, x, x_emb, tiny_dim):
    B, T, C = x.shape
    pos = (params["pos_emb_x"] + params["pos_emb_y"]).reshape(T + 1, -1)[:-1, :]
    x = _ln_ref(x, params["ln0"]["g"], params["ln0"]["b"]) + pos[None]

    att = params["att"]
    xx = _ln_ref(x, params["ln1"]["g"], params["ln1"]["b"])
    xs = _shift_ref(xx)
    xk = xx * att["mix_k"] + xs * (1.0 - att["mix_k"])
    xv = xx * att["mix_v"] + xs * (1.0 - att["mix_v"])
    xr = xx * att["mix_r"] + xs * (1.0 - att["mix_r"])
    k = _mm(xk, att["wk"])
    v = _mm(xv, att["wv"])
    sr = jax.nn.sigmoid(_mm(xr, att["wr"]))
    w = -jnp.exp(att["time_decay"])
    u = att["time_first"]

    def step(carry, kv_t):
        aa, bb, pp = carry
        kk, vv = kv_t
        ww = u + kk
        qq = jnp.maximum(pp, ww)
        e1, e2 = jnp.exp(pp - qq), jnp.exp(ww - qq)
        out = (e1 * aa + e2 * vv) / (e1 * bb + e2)
        ww = w + pp
        qq = jnp.maximum(ww, kk)
        e1, e2 = jnp.exp(ww - qq), jnp.exp(kk - qq)
        return (e1 * aa + e2 * vv, e1 * bb + e2, qq), out

    init = (jnp.zeros((B, C), jnp.float32), jnp.zeros((B, C), jnp.float32),
            jnp.full((B, C), -1e38, jnp.float32))
    _, wkv = jax.lax.scan(step, init,
                          (k.transpose(1, 0, 2), v.transpose(1, 0, 2)))
    x = x + _mm(sr * wkv.transpose(1, 0, 2), att["wo"])

    ffn = params["ffn"]
    xx = _ln_ref(x, params["ln2"]["g"], params["ln2"]["b"])
    xs = _shift_ref(xx)
    xk = xx * ffn["mix_k"] + xs * (1.0 - ffn["mix_k"])
    xr = xx * ffn["mix_r"] + xs * (1.0 - ffn["mix_r"])
    kk = jnp.square(jnp.maximum(_mm(xk, ffn["wk"]), 0.0))
    x = x + jax.nn.sigmoid(_mm(xr, ffn["wr"])) * _mm(kk, ffn["wv"])

    tp = params["tiny"]
    xx = _ln_ref(x, tp["ln_g"], tp["ln_b"])
    q = _mm(xx, tp["wq"])
    kq = _mm(xx, tp["wk"])
    v = _mm(x_emb, tp["wv"])
    c = jnp.einsum("btd,bsd->bts", q.astype(MXU_DTYPE), kq.astype(MXU_DTYPE),
                   preferred_element_type=jnp.float32) * (float(tiny_dim) ** -0.5)
    mask = jnp.tril(jnp.ones((T, T), bool))
    c = jnp.where(mask[None], c, 0.0)
    x = x + jnp.einsum("bts,bsc->btc", c.astype(MXU_DTYPE), v.astype(MXU_DTYPE),
                       preferred_element_type=jnp.float32)
    return x


# ------------------------- deterministic parameter init ---------------------
def init_params(key, C, F, D, P):
    ks = jax.random.split(key, 13)

    def w(k, shape, scale=0.02, dtype=MXU_DTYPE):
        return (scale * jax.random.normal(k, shape, jnp.float32)).astype(dtype)

    def ln():
        return {"g": jnp.ones((C,), jnp.float32), "b": jnp.zeros((C,), jnp.float32)}

    ramp = (jnp.arange(C, dtype=jnp.float32) / C).reshape(1, 1, C)
    params = {
        "ln0": ln(), "ln1": ln(), "ln2": ln(),
        "pos_emb_x": w(ks[0], (1, P, C), 0.1, jnp.float32),
        "pos_emb_y": w(ks[1], (P, 1, C), 0.1, jnp.float32),
        "att": {
            "mix_k": ramp, "mix_v": 0.25 + 0.5 * ramp, "mix_r": 0.5 * ramp,
            "time_decay": jnp.linspace(-3.0, 1.0, C, dtype=jnp.float32),
            "time_first": jnp.full((C,), 0.3, jnp.float32),
            "wk": w(ks[2], (C, C)), "wv": w(ks[3], (C, C)),
            "wr": w(ks[4], (C, C)), "wo": w(ks[5], (C, C)),
        },
        "ffn": {
            "mix_k": ramp, "mix_r": 0.5 * ramp,
            "wk": w(ks[6], (C, F)), "wv": w(ks[7], (F, C)), "wr": w(ks[8], (C, C)),
        },
        "tiny": {
            "ln_g": jnp.ones((C,), jnp.float32), "ln_b": jnp.zeros((C,), jnp.float32),
            "wq": w(ks[9], (C, D)), "wk": w(ks[10], (C, D)), "wv": w(ks[11], (C, C)),
        },
    }
    return params, ks[12]


if __name__ == "__main__":
    B, T, C = 2, 8, 32       # batch, seq, n_embd
    P = 3                    # my_pos_emb (P*P == T+1)
    F = 4 * C                # ffn hidden dim
    D = 16                   # tiny_att_dim

    key = jax.random.PRNGKey(0)
    params, key = init_params(key, C, F, D, P)
    kx, ke = jax.random.split(key)
    x = jax.random.normal(kx, (B, T, C), jnp.float32)
    x_emb = jax.random.normal(ke, (B, T, C), jnp.float32)

    fwd = jax.jit(block_forward, static_argnames=("tiny_dim", "n_b"))
    y = jax.block_until_ready(fwd(params, x, x_emb, tiny_dim=D))
    assert y.shape == (B, T, C) and y.dtype == jnp.float32
    assert bool(jnp.all(jnp.isfinite(y)))

    # pure-JAX reference check (same bf16 matmul operand rounding; tolerance
    # covers MXU accumulation order + Newton-refined reciprocal in WKV denom).
    y_ref = jax.block_until_ready(block_forward_ref(params, x, x_emb, tiny_dim=D))
    np.testing.assert_allclose(np.asarray(y), np.asarray(y_ref), rtol=2e-2, atol=2e-2)

    print("KERNEL_OK")
</pallas_src>

<mosaic_0001>
module attributes {stable_mosaic.version = 11 : i64} {
  func.func @_block_kernel(%arg0: i32, %arg1: memref<2x8x32xf32, #tpu.memory_space<vmem>>, %arg2: memref<2x8x32xf32, #tpu.memory_space<vmem>>, %arg3: memref<8x32xf32, #tpu.memory_space<vmem>>, %arg4: memref<1x32xf32, #tpu.memory_space<vmem>>, %arg5: memref<1x32xf32, #tpu.memory_space<vmem>>, %arg6: memref<1x32xf32, #tpu.memory_space<vmem>>, %arg7: memref<1x32xf32, #tpu.memory_space<vmem>>, %arg8: memref<1x32xf32, #tpu.memory_space<vmem>>, %arg9: memref<1x32xf32, #tpu.memory_space<vmem>>, %arg10: memref<1x32xf32, #tpu.memory_space<vmem>>, %arg11: memref<1x32xf32, #tpu.memory_space<vmem>>, %arg12: memref<1x32xf32, #tpu.memory_space<vmem>>, %arg13: memref<1x32xf32, #tpu.memory_space<vmem>>, %arg14: memref<1x32xf32, #tpu.memory_space<vmem>>, %arg15: memref<1x64xf32, #tpu.memory_space<vmem>>, %arg16: memref<1x64xf32, #tpu.memory_space<vmem>>, %arg17: memref<32x32xbf16, #tpu.memory_space<vmem>>, %arg18: memref<32x32xbf16, #tpu.memory_space<vmem>>, %arg19: memref<32x32xbf16, #tpu.memory_space<vmem>>, %arg20: memref<32x32xbf16, #tpu.memory_space<vmem>>, %arg21: memref<1x32xf32, #tpu.memory_space<vmem>>, %arg22: memref<1x32xf32, #tpu.memory_space<vmem>>, %arg23: memref<32x128xbf16, #tpu.memory_space<vmem>>, %arg24: memref<128x32xbf16, #tpu.memory_space<vmem>>, %arg25: memref<32x32xbf16, #tpu.memory_space<vmem>>, %arg26: memref<32x128xbf16, #tpu.memory_space<vmem>>, %arg27: memref<32x128xbf16, #tpu.memory_space<vmem>>, %arg28: memref<32x32xbf16, #tpu.memory_space<vmem>>, %arg29: memref<2x8x32xf32, #tpu.memory_space<vmem>>, %arg30: memref<8x64xf32, #tpu.memory_space<vmem>>, %arg31: memref<8x64xf32, #tpu.memory_space<vmem>>, %arg32: memref<8x64xf32, #tpu.memory_space<vmem>>, %arg33: memref<8x64xf32, #tpu.memory_space<vmem>>) attributes {dimension_semantics = [#tpu.dimension_semantics<parallel>], iteration_bounds = array<i64: 1>, scalar_prefetch = 0 : i64, scratch_operands = 4 : i64, tpu.core_type = #tpu.core_type<tc>, window_params = [{transform_indices = @transform_0, window_bounds = array<i64: 2, 8, 32>}, {transform_indices = @transform_1, window_bounds = array<i64: 2, 8, 32>}, {pipeline_mode = #tpu.pipeline_mode<synchronous>, transform_indices = @transform_2, window_bounds = array<i64: 8, 32>}, {pipeline_mode = #tpu.pipeline_mode<synchronous>, transform_indices = @transform_3, window_bounds = array<i64: 1, 32>}, {pipeline_mode = #tpu.pipeline_mode<synchronous>, transform_indices = @transform_4, window_bounds = array<i64: 1, 32>}, {pipeline_mode = #tpu.pipeline_mode<synchronous>, transform_indices = @transform_5, window_bounds = array<i64: 1, 32>}, {pipeline_mode = #tpu.pipeline_mode<synchronous>, transform_indices = @transform_6, window_bounds = array<i64: 1, 32>}, {pipeline_mode = #tpu.pipeline_mode<synchronous>, transform_indices = @transform_7, window_bounds = array<i64: 1, 32>}, {pipeline_mode = #tpu.pipeline_mode<synchronous>, transform_indices = @transform_8, window_bounds = array<i64: 1, 32>}, {pipeline_mode = #tpu.pipeline_mode<synchronous>, transform_indices = @transform_9, window_bounds = array<i64: 1, 32>}, {pipeline_mode = #tpu.pipeline_mode<synchronous>, transform_indices = @transform_10, window_bounds = array<i64: 1, 32>}, {pipeline_mode = #tpu.pipeline_mode<synchronous>, transform_indices = @transform_11, window_bounds = array<i64: 1, 32>}, {pipeline_mode = #tpu.pipeline_mode<synchronous>, transform_indices = @transform_12, window_bounds = array<i64: 1, 32>}, {pipeline_mode = #tpu.pipeline_mode<synchronous>, transform_indices = @transform_13, window_bounds = array<i64: 1, 32>}, {pipeline_mode = #tpu.pipeline_mode<synchronous>, transform_indices = @transform_14, window_bounds = array<i64: 1, 64>}, {pipeline_mode = #tpu.pipeline_mode<synchronous>, transform_indices = @transform_15, window_bounds = array<i64: 1, 64>}, {pipeline_mode = #tpu.pipeline_mode<synchronous>, transform_indices = @transform_16, window_bounds = array<i64: 32, 32>}, {pipeline_mode = #tpu.pipeline_mode<synchronous>, transform_indices = @transform_17, window_bounds = array<i64: 32, 32>}, {pipeline_mode = #tpu.pipeline_mode<synchronous>, transform_indices = @transform_18, window_bounds = array<i64: 32, 32>}, {pipeline_mode = #tpu.pipeline_mode<synchronous>, transform_indices = @transform_19, window_bounds = array<i64: 32, 32>}, {pipeline_mode = #tpu.pipeline_mode<synchronous>, transform_indices = @transform_20, window_bounds = array<i64: 1, 32>}, {pipeline_mode = #tpu.pipeline_mode<synchronous>, transform_indices = @transform_21, window_bounds = array<i64: 1, 32>}, {pipeline_mode = #tpu.pipeline_mode<synchronous>, transform_indices = @transform_22, window_bounds = array<i64: 32, 128>}, {pipeline_mode = #tpu.pipeline_mode<synchronous>, transform_indices = @transform_23, window_bounds = array<i64: 128, 32>}, {pipeline_mode = #tpu.pipeline_mode<synchronous>, transform_indices = @transform_24, window_bounds = array<i64: 32, 32>}, {pipeline_mode = #tpu.pipeline_mode<synchronous>, transform_indices = @transform_25, window_bounds = array<i64: 32, 128>}, {pipeline_mode = #tpu.pipeline_mode<synchronous>, transform_indices = @transform_26, window_bounds = array<i64: 32, 128>}, {pipeline_mode = #tpu.pipeline_mode<synchronous>, transform_indices = @transform_27, window_bounds = array<i64: 32, 32>}, {transform_indices = @transform_28, window_bounds = array<i64: 2, 8, 32>}]} {
    %c0 = arith.constant 0 : index
    %c0_0 = arith.constant 0 : index
    %c0_1 = arith.constant 0 : index
    %0 = vector.load %arg1[%c0, %c0_0, %c0_1] : memref<2x8x32xf32, #tpu.memory_space<vmem>>, vector<1x8x32xf32>
    %1 = vector.shape_cast %0 : vector<1x8x32xf32> to vector<8x32xf32>
    %c0_2 = arith.constant 0 : index
    %c0_3 = arith.constant 0 : index
    %2 = vector.load %arg4[%c0_2, %c0_3] : memref<1x32xf32, #tpu.memory_space<vmem>>, vector<1x32xf32>
    %c0_4 = arith.constant 0 : index
    %c0_5 = arith.constant 0 : index
    %3 = vector.load %arg5[%c0_4, %c0_5] : memref<1x32xf32, #tpu.memory_space<vmem>>, vector<1x32xf32>
    %cst = arith.constant dense<0.000000e+00> : vector<8xf32>
    %4 = vector.multi_reduction <add>, %1, %cst [1] : vector<8x32xf32> to vector<8xf32>
    %5 = vector.shape_cast %4 : vector<8xf32> to vector<8x1xf32>
    %cst_6 = arith.constant 3.200000e+01 : f32
    %6 = vector.broadcast %cst_6 : f32 to vector<8x1xf32>
    %7 = arith.divf %5, %6 : vector<8x1xf32>
    %8 = vector.broadcast %7 : vector<8x1xf32> to vector<8x32xf32>
    %9 = arith.subf %1, %8 : vector<8x32xf32>
    %10 = arith.mulf %9, %9 : vector<8x32xf32>
    %cst_7 = arith.constant dense<0.000000e+00> : vector<8xf32>
    %11 = vector.multi_reduction <add>, %10, %cst_7 [1] : vector<8x32xf32> to vector<8xf32>
    %12 = vector.shape_cast %11 : vector<8xf32> to vector<8x1xf32>
    %cst_8 = arith.constant 3.200000e+01 : f32
    %13 = vector.broadcast %cst_8 : f32 to vector<8x1xf32>
    %14 = arith.divf %12, %13 : vector<8x1xf32>
    %15 = vector.broadcast %7 : vector<8x1xf32> to vector<8x32xf32>
    %16 = arith.subf %1, %15 : vector<8x32xf32>
    %cst_9 = arith.constant 9.99999974E-6 : f32
    %17 = vector.broadcast %cst_9 : f32 to vector<8x1xf32>
    %18 = arith.addf %14, %17 : vector<8x1xf32>
    %19 = math.rsqrt %18 : vector<8x1xf32>
    %20 = vector.broadcast %19 : vector<8x1xf32> to vector<8x32xf32>
    %21 = arith.mulf %16, %20 : vector<8x32xf32>
    %22 = vector.broadcast %2 : vector<1x32xf32> to vector<8x32xf32>
    %23 = arith.mulf %21, %22 : vector<8x32xf32>
    %24 = vector.broadcast %3 : vector<1x32xf32> to vector<8x32xf32>
    %25 = arith.addf %23, %24 : vector<8x32xf32>
    %c0_10 = arith.constant 0 : index
    %c0_11 = arith.constant 0 : index
    %26 = vector.load %arg3[%c0_10, %c0_11] : memref<8x32xf32, #tpu.memory_space<vmem>>, vector<8x32xf32>
    %27 = arith.addf %25, %26 : vector<8x32xf32>
    %c0_12 = arith.constant 0 : index
    %c0_13 = arith.constant 0 : index
    %28 = vector.load %arg6[%c0_12, %c0_13] : memref<1x32xf32, #tpu.memory_space<vmem>>, vector<1x32xf32>
    %c0_14 = arith.constant 0 : index
    %c0_15 = arith.constant 0 : index
    %29 = vector.load %arg7[%c0_14, %c0_15] : memref<1x32xf32, #tpu.memory_space<vmem>>, vector<1x32xf32>
    %cst_16 = arith.constant dense<0.000000e+00> : vector<8xf32>
    %30 = vector.multi_reduction <add>, %27, %cst_16 [1] : vector<8x32xf32> to vector<8xf32>
    %31 = vector.shape_cast %30 : vector<8xf32> to vector<8x1xf32>
    %cst_17 = arith.constant 3.200000e+01 : f32
    %32 = vector.broadcast %cst_17 : f32 to vector<8x1xf32>
    %33 = arith.divf %31, %32 : vector<8x1xf32>
    %34 = vector.broadcast %33 : vector<8x1xf32> to vector<8x32xf32>
    %35 = arith.subf %27, %34 : vector<8x32xf32>
    %36 = arith.mulf %35, %35 : vector<8x32xf32>
    %cst_18 = arith.constant dense<0.000000e+00> : vector<8xf32>
    %37 = vector.multi_reduction <add>, %36, %cst_18 [1] : vector<8x32xf32> to vector<8xf32>
    %38 = vector.shape_cast %37 : vector<8xf32> to vector<8x1xf32>
    %cst_19 = arith.constant 3.200000e+01 : f32
    %39 = vector.broadcast %cst_19 : f32 to vector<8x1xf32>
    %40 = arith.divf %38, %39 : vector<8x1xf32>
    %41 = vector.broadcast %33 : vector<8x1xf32> to vector<8x32xf32>
    %42 = arith.subf %27, %41 : vector<8x32xf32>
    %cst_20 = arith.constant 9.99999974E-6 : f32
    %43 = vector.broadcast %cst_20 : f32 to vector<8x1xf32>
    %44 = arith.addf %40, %43 : vector<8x1xf32>
    %45 = math.rsqrt %44 : vector<8x1xf32>
    %46 = vector.broadcast %45 : vector<8x1xf32> to vector<8x32xf32>
    %47 = arith.mulf %42, %46 : vector<8x32xf32>
    %48 = vector.broadcast %28 : vector<1x32xf32> to vector<8x32xf32>
    %49 = arith.mulf %47, %48 : vector<8x32xf32>
    %50 = vector.broadcast %29 : vector<1x32xf32> to vector<8x32xf32>
    %51 = arith.addf %49, %50 : vector<8x32xf32>
    %c1_i32 = arith.constant 1 : i32
    %52 = tpu.dynamic_rotate %51 by %c1_i32 dim 0 : vector<8x32xf32>, i32 -> vector<8x32xf32>
    %53 = tpu.iota {dimensions = array<i32: 0>} : vector<8x32xi32>
    %c0_i32 = arith.constant 0 : i32
    %54 = vector.broadcast %c0_i32 : i32 to vector<8x32xi32>
    %55 = arith.cmpi eq, %53, %54 : vector<8x32xi32>
    %cst_21 = arith.constant 0.000000e+00 : f32
    %56 = vector.broadcast %cst_21 : f32 to vector<8x32xf32>
    %57 = arith.select %55, %56, %52 : vector<8x32xi1>, vector<8x32xf32>
    %c0_22 = arith.constant 0 : index
    %c0_23 = arith.constant 0 : index
    %58 = vector.load %arg12[%c0_22, %c0_23] : memref<1x32xf32, #tpu.memory_space<vmem>>, vector<1x32xf32>
    %c0_24 = arith.constant 0 : index
    %c0_25 = arith.constant 0 : index
    %59 = vector.load %arg13[%c0_24, %c0_25] : memref<1x32xf32, #tpu.memory_space<vmem>>, vector<1x32xf32>
    %c0_26 = arith.constant 0 : index
    %c0_27 = arith.constant 0 : index
    %60 = vector.load %arg14[%c0_26, %c0_27] : memref<1x32xf32, #tpu.memory_space<vmem>>, vector<1x32xf32>
    %61 = vector.broadcast %58 : vector<1x32xf32> to vector<8x32xf32>
    %62 = arith.mulf %51, %61 : vector<8x32xf32>
    %cst_28 = arith.constant 1.000000e+00 : f32
    %63 = vector.broadcast %cst_28 : f32 to vector<1x32xf32>
    %64 = arith.subf %63, %58 : vector<1x32xf32>
    %65 = vector.broadcast %64 : vector<1x32xf32> to vector<8x32xf32>
    %66 = arith.mulf %57, %65 : vector<8x32xf32>
    %67 = arith.addf %62, %66 : vector<8x32xf32>
    %68 = vector.broadcast %59 : vector<1x32xf32> to vector<8x32xf32>
    %69 = arith.mulf %51, %68 : vector<8x32xf32>
    %cst_29 = arith.constant 1.000000e+00 : f32
    %70 = vector.broadcast %cst_29 : f32 to vector<1x32xf32>
    %71 = arith.subf %70, %59 : vector<1x32xf32>
    %72 = vector.broadcast %71 : vector<1x32xf32> to vector<8x32xf32>
    %73 = arith.mulf %57, %72 : vector<8x32xf32>
    %74 = arith.addf %69, %73 : vector<8x32xf32>
    %75 = vector.broadcast %60 : vector<1x32xf32> to vector<8x32xf32>
    %76 = arith.mulf %51, %75 : vector<8x32xf32>
    %cst_30 = arith.constant 1.000000e+00 : f32
    %77 = vector.broadcast %cst_30 : f32 to vector<1x32xf32>
    %78 = arith.subf %77, %60 : vector<1x32xf32>
    %79 = vector.broadcast %78 : vector<1x32xf32> to vector<8x32xf32>
    %80 = arith.mulf %57, %79 : vector<8x32xf32>
    %81 = arith.addf %76, %80 : vector<8x32xf32>
    %82 = arith.truncf %67 : vector<8x32xf32> to vector<8x32xbf16>
    %c0_31 = arith.constant 0 : index
    %c0_32 = arith.constant 0 : index
    %83 = vector.load %arg17[%c0_31, %c0_32] : memref<32x32xbf16, #tpu.memory_space<vmem>>, vector<32x32xbf16>
    %cst_33 = arith.constant dense<0.000000e+00> : vector<8x32xf32>
    %84 = tpu.matmul %82, %83, %cst_33 {dimension_numbers = #tpu.dot_dimension_numbers<[1], [0], [0], [1], [0, 0, 1, 1], [], []>} : vector<8x32xbf16>, vector<32x32xbf16>, vector<8x32xf32> -> vector<8x32xf32>
    %c0_34 = arith.constant 0 : index
    %c0_35 = arith.constant 0 : index
    %85 = vector.load %arg30[%c0_34, %c0_35] : memref<8x64xf32, #tpu.memory_space<vmem>>, vector<8x32xf32>
    tpu.vector_store %arg30[%c0_34, %c0_35], %84 {strides = array<i32>} : memref<8x64xf32, #tpu.memory_space<vmem>>, vector<8x32xf32>,
    %86 = arith.truncf %74 : vector<8x32xf32> to vector<8x32xbf16>
    %c0_36 = arith.constant 0 : index
    %c0_37 = arith.constant 0 : index
    %87 = vector.load %arg18[%c0_36, %c0_37] : memref<32x32xbf16, #tpu.memory_space<vmem>>, vector<32x32xbf16>
    %cst_38 = arith.constant dense<0.000000e+00> : vector<8x32xf32>
    %88 = tpu.matmul %86, %87, %cst_38 {dimension_numbers = #tpu.dot_dimension_numbers<[1], [0], [0], [1], [0, 0, 1, 1], [], []>} : vector<8x32xbf16>, vector<32x32xbf16>, vector<8x32xf32> -> vector<8x32xf32>
    %c0_39 = arith.constant 0 : index
    %c0_40 = arith.constant 0 : index
    %89 = vector.load %arg31[%c0_39, %c0_40] : memref<8x64xf32, #tpu.memory_space<vmem>>, vector<8x32xf32>
    tpu.vector_store %arg31[%c0_39, %c0_40], %88 {strides = array<i32>} : memref<8x64xf32, #tpu.memory_space<vmem>>, vector<8x32xf32>,
    %90 = arith.truncf %81 : vector<8x32xf32> to vector<8x32xbf16>
    %c0_41 = arith.constant 0 : index
    %c0_42 = arith.constant 0 : index
    %91 = vector.load %arg19[%c0_41, %c0_42] : memref<32x32xbf16, #tpu.memory_space<vmem>>, vector<32x32xbf16>
    %cst_43 = arith.constant dense<0.000000e+00> : vector<8x32xf32>
    %92 = tpu.matmul %90, %91, %cst_43 {dimension_numbers = #tpu.dot_dimension_numbers<[1], [0], [0], [1], [0, 0, 1, 1], [], []>} : vector<8x32xbf16>, vector<32x32xbf16>, vector<8x32xf32> -> vector<8x32xf32>
    %93 = arith.negf %92 : vector<8x32xf32>
    %94 = math.exp %93 : vector<8x32xf32>
    %cst_44 = arith.constant 1.000000e+00 : f32
    %95 = vector.broadcast %cst_44 : f32 to vector<8x32xf32>
    %96 = arith.addf %95, %94 : vector<8x32xf32>
    %97 = arith.divf %95, %96 : vector<8x32xf32>
    %c0_45 = arith.constant 0 : index
    %c0_46 = arith.constant 0 : index
    %98 = vector.load %arg32[%c0_45, %c0_46] : memref<8x64xf32, #tpu.memory_space<vmem>>, vector<8x32xf32>
    tpu.vector_store %arg32[%c0_45, %c0_46], %97 {strides = array<i32>} : memref<8x64xf32, #tpu.memory_space<vmem>>, vector<8x32xf32>,
    %c1 = arith.constant 1 : index
    %c0_47 = arith.constant 0 : index
    %c0_48 = arith.constant 0 : index
    %99 = vector.load %arg1[%c1, %c0_47, %c0_48] : memref<2x8x32xf32, #tpu.memory_space<vmem>>, vector<1x8x32xf32>
    %100 = vector.shape_cast %99 : vector<1x8x32xf32> to vector<8x32xf32>
    %c0_49 = arith.constant 0 : index
    %c0_50 = arith.constant 0 : index
    %101 = vector.load %arg4[%c0_49, %c0_50] : memref<1x32xf32, #tpu.memory_space<vmem>>, vector<1x32xf32>
    %c0_51 = arith.constant 0 : index
    %c0_52 = arith.constant 0 : index
    %102 = vector.load %arg5[%c0_51, %c0_52] : memref<1x32xf32, #tpu.memory_space<vmem>>, vector<1x32xf32>
    %cst_53 = arith.constant dense<0.000000e+00> : vector<8xf32>
    %103 = vector.multi_reduction <add>, %100, %cst_53 [1] : vector<8x32xf32> to vector<8xf32>
    %104 = vector.shape_cast %103 : vector<8xf32> to vector<8x1xf32>
    %cst_54 = arith.constant 3.200000e+01 : f32
    %105 = vector.broadcast %cst_54 : f32 to vector<8x1xf32>
    %106 = arith.divf %104, %105 : vector<8x1xf32>
    %107 = vector.broadcast %106 : vector<8x1xf32> to vector<8x32xf32>
    %108 = arith.subf %100, %107 : vector<8x32xf32>
    %109 = arith.mulf %108, %108 : vector<8x32xf32>
    %cst_55 = arith.constant dense<0.000000e+00> : vector<8xf32>
    %110 = vector.multi_reduction <add>, %109, %cst_55 [1] : vector<8x32xf32> to vector<8xf32>
    %111 = vector.shape_cast %110 : vector<8xf32> to vector<8x1xf32>
    %cst_56 = arith.constant 3.200000e+01 : f32
    %112 = vector.broadcast %cst_56 : f32 to vector<8x1xf32>
    %113 = arith.divf %111, %112 : vector<8x1xf32>
    %114 = vector.broadcast %106 : vector<8x1xf32> to vector<8x32xf32>
    %115 = arith.subf %100, %114 : vector<8x32xf32>
    %cst_57 = arith.constant 9.99999974E-6 : f32
    %116 = vector.broadcast %cst_57 : f32 to vector<8x1xf32>
    %117 = arith.addf %113, %116 : vector<8x1xf32>
    %118 = math.rsqrt %117 : vector<8x1xf32>
    %119 = vector.broadcast %118 : vector<8x1xf32> to vector<8x32xf32>
    %120 = arith.mulf %115, %119 : vector<8x32xf32>
    %121 = vector.broadcast %101 : vector<1x32xf32> to vector<8x32xf32>
    %122 = arith.mulf %120, %121 : vector<8x32xf32>
    %123 = vector.broadcast %102 : vector<1x32xf32> to vector<8x32xf32>
    %124 = arith.addf %122, %123 : vector<8x32xf32>
    %c0_58 = arith.constant 0 : index
    %c0_59 = arith.constant 0 : index
    %125 = vector.load %arg3[%c0_58, %c0_59] : memref<8x32xf32, #tpu.memory_space<vmem>>, vector<8x32xf32>
    %126 = arith.addf %124, %125 : vector<8x32xf32>
    %c0_60 = arith.constant 0 : index
    %c0_61 = arith.constant 0 : index
    %127 = vector.load %arg6[%c0_60, %c0_61] : memref<1x32xf32, #tpu.memory_space<vmem>>, vector<1x32xf32>
    %c0_62 = arith.constant 0 : index
    %c0_63 = arith.constant 0 : index
    %128 = vector.load %arg7[%c0_62, %c0_63] : memref<1x32xf32, #tpu.memory_space<vmem>>, vector<1x32xf32>
    %cst_64 = arith.constant dense<0.000000e+00> : vector<8xf32>
    %129 = vector.multi_reduction <add>, %126, %cst_64 [1] : vector<8x32xf32> to vector<8xf32>
    %130 = vector.shape_cast %129 : vector<8xf32> to vector<8x1xf32>
    %cst_65 = arith.constant 3.200000e+01 : f32
    %131 = vector.broadcast %cst_65 : f32 to vector<8x1xf32>
    %132 = arith.divf %130, %131 : vector<8x1xf32>
    %133 = vector.broadcast %132 : vector<8x1xf32> to vector<8x32xf32>
    %134 = arith.subf %126, %133 : vector<8x32xf32>
    %135 = arith.mulf %134, %134 : vector<8x32xf32>
    %cst_66 = arith.constant dense<0.000000e+00> : vector<8xf32>
    %136 = vector.multi_reduction <add>, %135, %cst_66 [1] : vector<8x32xf32> to vector<8xf32>
    %137 = vector.shape_cast %136 : vector<8xf32> to vector<8x1xf32>
    %cst_67 = arith.constant 3.200000e+01 : f32
    %138 = vector.broadcast %cst_67 : f32 to vector<8x1xf32>
    %139 = arith.divf %137, %138 : vector<8x1xf32>
    %140 = vector.broadcast %132 : vector<8x1xf32> to vector<8x32xf32>
    %141 = arith.subf %126, %140 : vector<8x32xf32>
    %cst_68 = arith.constant 9.99999974E-6 : f32
    %142 = vector.broadcast %cst_68 : f32 to vector<8x1xf32>
    %143 = arith.addf %139, %142 : vector<8x1xf32>
    %144 = math.rsqrt %143 : vector<8x1xf32>
    %145 = vector.broadcast %144 : vector<8x1xf32> to vector<8x32xf32>
    %146 = arith.mulf %141, %145 : vector<8x32xf32>
    %147 = vector.broadcast %127 : vector<1x32xf32> to vector<8x32xf32>
    %148 = arith.mulf %146, %147 : vector<8x32xf32>
    %149 = vector.broadcast %128 : vector<1x32xf32> to vector<8x32xf32>
    %150 = arith.addf %148, %149 : vector<8x32xf32>
    %c1_i32_69 = arith.constant 1 : i32
    %151 = tpu.dynamic_rotate %150 by %c1_i32_69 dim 0 : vector<8x32xf32>, i32 -> vector<8x32xf32>
    %152 = tpu.iota {dimensions = array<i32: 0>} : vector<8x32xi32>
    %c0_i32_70 = arith.constant 0 : i32
    %153 = vector.broadcast %c0_i32_70 : i32 to vector<8x32xi32>
    %154 = arith.cmpi eq, %152, %153 : vector<8x32xi32>
    %cst_71 = arith.constant 0.000000e+00 : f32
    %155 = vector.broadcast %cst_71 : f32 to vector<8x32xf32>
    %156 = arith.select %154, %155, %151 : vector<8x32xi1>, vector<8x32xf32>
    %c0_72 = arith.constant 0 : index
    %c0_73 = arith.constant 0 : index
    %157 = vector.load %arg12[%c0_72, %c0_73] : memref<1x32xf32, #tpu.memory_space<vmem>>, vector<1x32xf32>
    %c0_74 = arith.constant 0 : index
    %c0_75 = arith.constant 0 : index
    %158 = vector.load %arg13[%c0_74, %c0_75] : memref<1x32xf32, #tpu.memory_space<vmem>>, vector<1x32xf32>
    %c0_76 = arith.constant 0 : index
    %c0_77 = arith.constant 0 : index
    %159 = vector.load %arg14[%c0_76, %c0_77] : memref<1x32xf32, #tpu.memory_space<vmem>>, vector<1x32xf32>
    %160 = vector.broadcast %157 : vector<1x32xf32> to vector<8x32xf32>
    %161 = arith.mulf %150, %160 : vector<8x32xf32>
    %cst_78 = arith.constant 1.000000e+00 : f32
    %162 = vector.broadcast %cst_78 : f32 to vector<1x32xf32>
    %163 = arith.subf %162, %157 : vector<1x32xf32>
    %164 = vector.broadcast %163 : vector<1x32xf32> to vector<8x32xf32>
    %165 = arith.mulf %156, %164 : vector<8x32xf32>
    %166 = arith.addf %161, %165 : vector<8x32xf32>
    %167 = vector.broadcast %158 : vector<1x32xf32> to vector<8x32xf32>
    %168 = arith.mulf %150, %167 : vector<8x32xf32>
    %cst_79 = arith.constant 1.000000e+00 : f32
    %169 = vector.broadcast %cst_79 : f32 to vector<1x32xf32>
    %170 = arith.subf %169, %158 : vector<1x32xf32>
    %171 = vector.broadcast %170 : vector<1x32xf32> to vector<8x32xf32>
    %172 = arith.mulf %156, %171 : vector<8x32xf32>
    %173 = arith.addf %168, %172 : vector<8x32xf32>
    %174 = vector.broadcast %159 : vector<1x32xf32> to vector<8x32xf32>
    %175 = arith.mulf %150, %174 : vector<8x32xf32>
    %cst_80 = arith.constant 1.000000e+00 : f32
    %176 = vector.broadcast %cst_80 : f32 to vector<1x32xf32>
    %177 = arith.subf %176, %159 : vector<1x32xf32>
    %178 = vector.broadcast %177 : vector<1x32xf32> to vector<8x32xf32>
    %179 = arith.mulf %156, %178 : vector<8x32xf32>
    %180 = arith.addf %175, %179 : vector<8x32xf32>
    %181 = arith.truncf %166 : vector<8x32xf32> to vector<8x32xbf16>
    %c0_81 = arith.constant 0 : index
    %c0_82 = arith.constant 0 : index
    %182 = vector.load %arg17[%c0_81, %c0_82] : memref<32x32xbf16, #tpu.memory_space<vmem>>, vector<32x32xbf16>
    %cst_83 = arith.constant dense<0.000000e+00> : vector<8x32xf32>
    %183 = tpu.matmul %181, %182, %cst_83 {dimension_numbers = #tpu.dot_dimension_numbers<[1], [0], [0], [1], [0, 0, 1, 1], [], []>} : vector<8x32xbf16>, vector<32x32xbf16>, vector<8x32xf32> -> vector<8x32xf32>
    %c0_84 = arith.constant 0 : index
    %c32 = arith.constant 32 : index
    %184 = vector.load %arg30[%c0_84, %c32] : memref<8x64xf32, #tpu.memory_space<vmem>>, vector<8x32xf32>
    tpu.vector_store %arg30[%c0_84, %c32], %183 {strides = array<i32>} : memref<8x64xf32, #tpu.memory_space<vmem>>, vector<8x32xf32>,
    %185 = arith.truncf %173 : vector<8x32xf32> to vector<8x32xbf16>
    %c0_85 = arith.constant 0 : index
    %c0_86 = arith.constant 0 : index
    %186 = vector.load %arg18[%c0_85, %c0_86] : memref<32x32xbf16, #tpu.memory_space<vmem>>, vector<32x32xbf16>
    %cst_87 = arith.constant dense<0.000000e+00> : vector<8x32xf32>
    %187 = tpu.matmul %185, %186, %cst_87 {dimension_numbers = #tpu.dot_dimension_numbers<[1], [0], [0], [1], [0, 0, 1, 1], [], []>} : vector<8x32xbf16>, vector<32x32xbf16>, vector<8x32xf32> -> vector<8x32xf32>
    %c0_88 = arith.constant 0 : index
    %c32_89 = arith.constant 32 : index
    %188 = vector.load %arg31[%c0_88, %c32_89] : memref<8x64xf32, #tpu.memory_space<vmem>>, vector<8x32xf32>
    tpu.vector_store %arg31[%c0_88, %c32_89], %187 {strides = array<i32>} : memref<8x64xf32, #tpu.memory_space<vmem>>, vector<8x32xf32>,
    %189 = arith.truncf %180 : vector<8x32xf32> to vector<8x32xbf16>
    %c0_90 = arith.constant 0 : index
    %c0_91 = arith.constant 0 : index
    %190 = vector.load %arg19[%c0_90, %c0_91] : memref<32x32xbf16, #tpu.memory_space<vmem>>, vector<32x32xbf16>
    %cst_92 = arith.constant dense<0.000000e+00> : vector<8x32xf32>
    %191 = tpu.matmul %189, %190, %cst_92 {dimension_numbers = #tpu.dot_dimension_numbers<[1], [0], [0], [1], [0, 0, 1, 1], [], []>} : vector<8x32xbf16>, vector<32x32xbf16>, vector<8x32xf32> -> vector<8x32xf32>
    %192 = arith.negf %191 : vector<8x32xf32>
    %193 = math.exp %192 : vector<8x32xf32>
    %cst_93 = arith.constant 1.000000e+00 : f32
    %194 = vector.broadcast %cst_93 : f32 to vector<8x32xf32>
    %195 = arith.addf %194, %193 : vector<8x32xf32>
    %196 = arith.divf %194, %195 : vector<8x32xf32>
    %c0_94 = arith.constant 0 : index
    %c32_95 = arith.constant 32 : index
    %197 = vector.load %arg32[%c0_94, %c32_95] : memref<8x64xf32, #tpu.memory_space<vmem>>, vector<8x32xf32>
    tpu.vector_store %arg32[%c0_94, %c32_95], %196 {strides = array<i32>} : memref<8x64xf32, #tpu.memory_space<vmem>>, vector<8x32xf32>,
    %c0_96 = arith.constant 0 : index
    %c0_97 = arith.constant 0 : index
    %198 = vector.load %arg15[%c0_96, %c0_97] : memref<1x64xf32, #tpu.memory_space<vmem>>, vector<1x64xf32>
    %c0_98 = arith.constant 0 : index
    %c0_99 = arith.constant 0 : index
    %199 = vector.load %arg16[%c0_98, %c0_99] : memref<1x64xf32, #tpu.memory_space<vmem>>, vector<1x64xf32>
    %cst_100 = arith.constant 0.000000e+00 : f32
    %200 = vector.broadcast %cst_100 : f32 to vector<1x64xf32>
    %cst_101 = arith.constant 0.000000e+00 : f32
    %201 = vector.broadcast %cst_101 : f32 to vector<1x64xf32>
    %cst_102 = arith.constant -9.99999968E+37 : f32
    %202 = vector.broadcast %cst_102 : f32 to vector<1x64xf32>
    %c0_i32_103 = arith.constant 0 : i32
    %203 = arith.index_cast %c0_i32_103 : i32 to index
    %c0_104 = arith.constant 0 : index
    %204 = vector.load %arg30[%203, %c0_104] : memref<8x64xf32, #tpu.memory_space<vmem>>, vector<1x64xf32>
    %205 = arith.index_cast %c0_i32_103 : i32 to index
    %c0_105 = arith.constant 0 : index
    %206 = vector.load %arg31[%205, %c0_105] : memref<8x64xf32, #tpu.memory_space<vmem>>, vector<1x64xf32>
    %207 = arith.addf %199, %204 : vector<1x64xf32>
    %208 = arith.maximumf %202, %207 : vector<1x64xf32>
    %209 = arith.subf %202, %208 : vector<1x64xf32>
    %210 = math.exp %209 : vector<1x64xf32>
    %211 = arith.subf %207, %208 : vector<1x64xf32>
    %212 = math.exp %211 : vector<1x64xf32>
    %213 = arith.mulf %210, %200 : vector<1x64xf32>
    %214 = arith.mulf %212, %206 : vector<1x64xf32>
    %215 = arith.addf %213, %214 : vector<1x64xf32>
    %216 = arith.mulf %210, %201 : vector<1x64xf32>
    %217 = arith.addf %216, %212 : vector<1x64xf32>
    %218 = tpu.reciprocal %217 {approx = true} : vector<1x64xf32> -> vector<1x64xf32>
    %219 = arith.mulf %217, %218 : vector<1x64xf32>
    %cst_106 = arith.constant 2.000000e+00 : f32
    %220 = vector.broadcast %cst_106 : f32 to vector<1x64xf32>
    %221 = arith.subf %220, %219 : vector<1x64xf32>
    %222 = arith.mulf %218, %221 : vector<1x64xf32>
    %223 = arith.index_cast %c0_i32_103 : i32 to index
    %c0_107 = arith.constant 0 : index
    %224 = vector.load %arg32[%223, %c0_107] : memref<8x64xf32, #tpu.memory_space<vmem>>, vector<1x64xf32>
    %225 = arith.mulf %224, %215 : vector<1x64xf32>
    %226 = arith.mulf %225, %222 : vector<1x64xf32>
    %227 = arith.index_cast %c0_i32_103 : i32 to index
    %c0_108 = arith.constant 0 : index
    %228 = vector.load %arg33[%227, %c0_108] : memref<8x64xf32, #tpu.memory_space<vmem>>, vector<1x64xf32>
    tpu.vector_store %arg33[%227, %c0_108], %226 {strides = array<i32>} : memref<8x64xf32, #tpu.memory_space<vmem>>, vector<1x64xf32>,
    %229 = arith.addf %198, %202 : vector<1x64xf32>
    %230 = arith.maximumf %229, %204 : vector<1x64xf32>
    %231 = arith.subf %229, %230 : vector<1x64xf32>
    %232 = math.exp %231 : vector<1x64xf32>
    %233 = arith.subf %204, %230 : vector<1x64xf32>
    %234 = math.exp %233 : vector<1x64xf32>
    %235 = arith.mulf %232, %200 : vector<1x64xf32>
    %236 = arith.mulf %234, %206 : vector<1x64xf32>
    %237 = arith.addf %235, %236 : vector<1x64xf32>
    %238 = arith.mulf %232, %201 : vector<1x64xf32>
    %239 = arith.addf %238, %234 : vector<1x64xf32>
    %c1_i32_109 = arith.constant 1 : i32
    %240 = arith.index_cast %c1_i32_109 : i32 to index
    %c0_110 = arith.constant 0 : index
    %241 = vector.load %arg30[%240, %c0_110] : memref<8x64xf32, #tpu.memory_space<vmem>>, vector<1x64xf32>
    %242 = arith.index_cast %c1_i32_109 : i32 to index
    %c0_111 = arith.constant 0 : index
    %243 = vector.load %arg31[%242, %c0_111] : memref<8x64xf32, #tpu.memory_space<vmem>>, vector<1x64xf32>
    %244 = arith.addf %199, %241 : vector<1x64xf32>
    %245 = arith.maximumf %230, %244 : vector<1x64xf32>
    %246 = arith.subf %230, %245 : vector<1x64xf32>
    %247 = math.exp %246 : vector<1x64xf32>
    %248 = arith.subf %244, %245 : vector<1x64xf32>
    %249 = math.exp %248 : vector<1x64xf32>
    %250 = arith.mulf %247, %237 : vector<1x64xf32>
    %251 = arith.mulf %249, %243 : vector<1x64xf32>
    %252 = arith.addf %250, %251 : vector<1x64xf32>
    %253 = arith.mulf %247, %239 : vector<1x64xf32>
    %254 = arith.addf %253, %249 : vector<1x64xf32>
    %255 = tpu.reciprocal %254 {approx = true} : vector<1x64xf32> -> vector<1x64xf32>
    %256 = arith.mulf %254, %255 : vector<1x64xf32>
    %cst_112 = arith.constant 2.000000e+00 : f32
    %257 = vector.broadcast %cst_112 : f32 to vector<1x64xf32>
    %258 = arith.subf %257, %256 : vector<1x64xf32>
    %259 = arith.mulf %255, %258 : vector<1x64xf32>
    %260 = arith.index_cast %c1_i32_109 : i32 to index
    %c0_113 = arith.constant 0 : index
    %261 = vector.load %arg32[%260, %c0_113] : memref<8x64xf32, #tpu.memory_space<vmem>>, vector<1x64xf32>
    %262 = arith.mulf %261, %252 : vector<1x64xf32>
    %263 = arith.mulf %262, %259 : vector<1x64xf32>
    %264 = arith.index_cast %c1_i32_109 : i32 to index
    %c0_114 = arith.constant 0 : index
    %265 = vector.load %arg33[%264, %c0_114] : memref<8x64xf32, #tpu.memory_space<vmem>>, vector<1x64xf32>
    tpu.vector_store %arg33[%264, %c0_114], %263 {strides = array<i32>} : memref<8x64xf32, #tpu.memory_space<vmem>>, vector<1x64xf32>,
    %266 = arith.addf %198, %230 : vector<1x64xf32>
    %267 = arith.maximumf %266, %241 : vector<1x64xf32>
    %268 = arith.subf %266, %267 : vector<1x64xf32>
    %269 = math.exp %268 : vector<1x64xf32>
    %270 = arith.subf %241, %267 : vector<1x64xf32>
    %271 = math.exp %270 : vector<1x64xf32>
    %272 = arith.mulf %269, %237 : vector<1x64xf32>
    %273 = arith.mulf %271, %243 : vector<1x64xf32>
    %274 = arith.addf %272, %273 : vector<1x64xf32>
    %275 = arith.mulf %269, %239 : vector<1x64xf32>
    %276 = arith.addf %275, %271 : vector<1x64xf32>
    %c2_i32 = arith.constant 2 : i32
    %277 = arith.index_cast %c2_i32 : i32 to index
    %c0_115 = arith.constant 0 : index
    %278 = vector.load %arg30[%277, %c0_115] : memref<8x64xf32, #tpu.memory_space<vmem>>, vector<1x64xf32>
    %279 = arith.index_cast %c2_i32 : i32 to index
    %c0_116 = arith.constant 0 : index
    %280 = vector.load %arg31[%279, %c0_116] : memref<8x64xf32, #tpu.memory_space<vmem>>, vector<1x64xf32>
    %281 = arith.addf %199, %278 : vector<1x64xf32>
    %282 = arith.maximumf %267, %281 : vector<1x64xf32>
    %283 = arith.subf %267, %282 : vector<1x64xf32>
    %284 = math.exp %283 : vector<1x64xf32>
    %285 = arith.subf %281, %282 : vector<1x64xf32>
    %286 = math.exp %285 : vector<1x64xf32>
    %287 = arith.mulf %284, %274 : vector<1x64xf32>
    %288 = arith.mulf %286, %280 : vector<1x64xf32>
    %289 = arith.addf %287, %288 : vector<1x64xf32>
    %290 = arith.mulf %284, %276 : vector<1x64xf32>
    %291 = arith.addf %290, %286 : vector<1x64xf32>
    %292 = tpu.reciprocal %291 {approx = true} : vector<1x64xf32> -> vector<1x64xf32>
    %293 = arith.mulf %291, %292 : vector<1x64xf32>
    %cst_117 = arith.constant 2.000000e+00 : f32
    %294 = vector.broadcast %cst_117 : f32 to vector<1x64xf32>
    %295 = arith.subf %294, %293 : vector<1x64xf32>
    %296 = arith.mulf %292, %295 : vector<1x64xf32>
    %297 = arith.index_cast %c2_i32 : i32 to index
    %c0_118 = arith.constant 0 : index
    %298 = vector.load %arg32[%297, %c0_118] : memref<8x64xf32, #tpu.memory_space<vmem>>, vector<1x64xf32>
    %299 = arith.mulf %298, %289 : vector<1x64xf32>
    %300 = arith.mulf %299, %296 : vector<1x64xf32>
    %301 = arith.index_cast %c2_i32 : i32 to index
    %c0_119 = arith.constant 0 : index
    %302 = vector.load %arg33[%301, %c0_119] : memref<8x64xf32, #tpu.memory_space<vmem>>, vector<1x64xf32>
    tpu.vector_store %arg33[%301, %c0_119], %300 {strides = array<i32>} : memref<8x64xf32, #tpu.memory_space<vmem>>, vector<1x64xf32>,
    %303 = arith.addf %198, %267 : vector<1x64xf32>
    %304 = arith.maximumf %303, %278 : vector<1x64xf32>
    %305 = arith.subf %303, %304 : vector<1x64xf32>
    %306 = math.exp %305 : vector<1x64xf32>
    %307 = arith.subf %278, %304 : vector<1x64xf32>
    %308 = math.exp %307 : vector<1x64xf32>
    %309 = arith.mulf %306, %274 : vector<1x64xf32>
    %310 = arith.mulf %308, %280 : vector<1x64xf32>
    %311 = arith.addf %309, %310 : vector<1x64xf32>
    %312 = arith.mulf %306, %276 : vector<1x64xf32>
    %313 = arith.addf %312, %308 : vector<1x64xf32>
    %c3_i32 = arith.constant 3 : i32
    %314 = arith.index_cast %c3_i32 : i32 to index
    %c0_120 = arith.constant 0 : index
    %315 = vector.load %arg30[%314, %c0_120] : memref<8x64xf32, #tpu.memory_space<vmem>>, vector<1x64xf32>
    %316 = arith.index_cast %c3_i32 : i32 to index
    %c0_121 = arith.constant 0 : index
    %317 = vector.load %arg31[%316, %c0_121] : memref<8x64xf32, #tpu.memory_space<vmem>>, vector<1x64xf32>
    %318 = arith.addf %199, %315 : vector<1x64xf32>
    %319 = arith.maximumf %304, %318 : vector<1x64xf32>
    %320 = arith.subf %304, %319 : vector<1x64xf32>
    %321 = math.exp %320 : vector<1x64xf32>
    %322 = arith.subf %318, %319 : vector<1x64xf32>
    %323 = math.exp %322 : vector<1x64xf32>
    %324 = arith.mulf %321, %311 : vector<1x64xf32>
    %325 = arith.mulf %323, %317 : vector<1x64xf32>
    %326 = arith.addf %324, %325 : vector<1x64xf32>
    %327 = arith.mulf %321, %313 : vector<1x64xf32>
    %328 = arith.addf %327, %323 : vector<1x64xf32>
    %329 = tpu.reciprocal %328 {approx = true} : vector<1x64xf32> -> vector<1x64xf32>
    %330 = arith.mulf %328, %329 : vector<1x64xf32>
    %cst_122 = arith.constant 2.000000e+00 : f32
    %331 = vector.broadcast %cst_122 : f32 to vector<1x64xf32>
    %332 = arith.subf %331, %330 : vector<1x64xf32>
    %333 = arith.mulf %329, %332 : vector<1x64xf32>
    %334 = arith.index_cast %c3_i32 : i32 to index
    %c0_123 = arith.constant 0 : index
    %335 = vector.load %arg32[%334, %c0_123] : memref<8x64xf32, #tpu.memory_space<vmem>>, vector<1x64xf32>
    %336 = arith.mulf %335, %326 : vector<1x64xf32>
    %337 = arith.mulf %336, %333 : vector<1x64xf32>
    %338 = arith.index_cast %c3_i32 : i32 to index
    %c0_124 = arith.constant 0 : index
    %339 = vector.load %arg33[%338, %c0_124] : memref<8x64xf32, #tpu.memory_space<vmem>>, vector<1x64xf32>
    tpu.vector_store %arg33[%338, %c0_124], %337 {strides = array<i32>} : memref<8x64xf32, #tpu.memory_space<vmem>>, vector<1x64xf32>,
    %340 = arith.addf %198, %304 : vector<1x64xf32>
    %341 = arith.maximumf %340, %315 : vector<1x64xf32>
    %342 = arith.subf %340, %341 : vector<1x64xf32>
    %343 = math.exp %342 : vector<1x64xf32>
    %344 = arith.subf %315, %341 : vector<1x64xf32>
    %345 = math.exp %344 : vector<1x64xf32>
    %346 = arith.mulf %343, %311 : vector<1x64xf32>
    %347 = arith.mulf %345, %317 : vector<1x64xf32>
    %348 = arith.addf %346, %347 : vector<1x64xf32>
    %349 = arith.mulf %343, %313 : vector<1x64xf32>
    %350 = arith.addf %349, %345 : vector<1x64xf32>
    %c4_i32 = arith.constant 4 : i32
    %351 = arith.index_cast %c4_i32 : i32 to index
    %c0_125 = arith.constant 0 : index
    %352 = vector.load %arg30[%351, %c0_125] : memref<8x64xf32, #tpu.memory_space<vmem>>, vector<1x64xf32>
    %353 = arith.index_cast %c4_i32 : i32 to index
    %c0_126 = arith.constant 0 : index
    %354 = vector.load %arg31[%353, %c0_126] : memref<8x64xf32, #tpu.memory_space<vmem>>, vector<1x64xf32>
    %355 = arith.addf %199, %352 : vector<1x64xf32>
    %356 = arith.maximumf %341, %355 : vector<1x64xf32>
    %357 = arith.subf %341, %356 : vector<1x64xf32>
    %358 = math.exp %357 : vector<1x64xf32>
    %359 = arith.subf %355, %356 : vector<1x64xf32>
    %360 = math.exp %359 : vector<1x64xf32>
    %361 = arith.mulf %358, %348 : vector<1x64xf32>
    %362 = arith.mulf %360, %354 : vector<1x64xf32>
    %363 = arith.addf %361, %362 : vector<1x64xf32>
    %364 = arith.mulf %358, %350 : vector<1x64xf32>
    %365 = arith.addf %364, %360 : vector<1x64xf32>
    %366 = tpu.reciprocal %365 {approx = true} : vector<1x64xf32> -> vector<1x64xf32>
    %367 = arith.mulf %365, %366 : vector<1x64xf32>
    %cst_127 = arith.constant 2.000000e+00 : f32
    %368 = vector.broadcast %cst_127 : f32 to vector<1x64xf32>
    %369 = arith.subf %368, %367 : vector<1x64xf32>
    %370 = arith.mulf %366, %369 : vector<1x64xf32>
    %371 = arith.index_cast %c4_i32 : i32 to index
    %c0_128 = arith.constant 0 : index
    %372 = vector.load %arg32[%371, %c0_128] : memref<8x64xf32, #tpu.memory_space<vmem>>, vector<1x64xf32>
    %373 = arith.mulf %372, %363 : vector<1x64xf32>
    %374 = arith.mulf %373, %370 : vector<1x64xf32>
    %375 = arith.index_cast %c4_i32 : i32 to index
    %c0_129 = arith.constant 0 : index
    %376 = vector.load %arg33[%375, %c0_129] : memref<8x64xf32, #tpu.memory_space<vmem>>, vector<1x64xf32>
    tpu.vector_store %arg33[%375, %c0_129], %374 {strides = array<i32>} : memref<8x64xf32, #tpu.memory_space<vmem>>, vector<1x64xf32>,
    %377 = arith.addf %198, %341 : vector<1x64xf32>
    %378 = arith.maximumf %377, %352 : vector<1x64xf32>
    %379 = arith.subf %377, %378 : vector<1x64xf32>
    %380 = math.exp %379 : vector<1x64xf32>
    %381 = arith.subf %352, %378 : vector<1x64xf32>
    %382 = math.exp %381 : vector<1x64xf32>
    %383 = arith.mulf %380, %348 : vector<1x64xf32>
    %384 = arith.mulf %382, %354 : vector<1x64xf32>
    %385 = arith.addf %383, %384 : vector<1x64xf32>
    %386 = arith.mulf %380, %350 : vector<1x64xf32>
    %387 = arith.addf %386, %382 : vector<1x64xf32>
    %c5_i32 = arith.constant 5 : i32
    %388 = arith.index_cast %c5_i32 : i32 to index
    %c0_130 = arith.constant 0 : index
    %389 = vector.load %arg30[%388, %c0_130] : memref<8x64xf32, #tpu.memory_space<vmem>>, vector<1x64xf32>
    %390 = arith.index_cast %c5_i32 : i32 to index
    %c0_131 = arith.constant 0 : index
    %391 = vector.load %arg31[%390, %c0_131] : memref<8x64xf32, #tpu.memory_space<vmem>>, vector<1x64xf32>
    %392 = arith.addf %199, %389 : vector<1x64xf32>
    %393 = arith.maximumf %378, %392 : vector<1x64xf32>
    %394 = arith.subf %378, %393 : vector<1x64xf32>
    %395 = math.exp %394 : vector<1x64xf32>
    %396 = arith.subf %392, %393 : vector<1x64xf32>
    %397 = math.exp %396 : vector<1x64xf32>
    %398 = arith.mulf %395, %385 : vector<1x64xf32>
    %399 = arith.mulf %397, %391 : vector<1x64xf32>
    %400 = arith.addf %398, %399 : vector<1x64xf32>
    %401 = arith.mulf %395, %387 : vector<1x64xf32>
    %402 = arith.addf %401, %397 : vector<1x64xf32>
    %403 = tpu.reciprocal %402 {approx = true} : vector<1x64xf32> -> vector<1x64xf32>
    %404 = arith.mulf %402, %403 : vector<1x64xf32>
    %cst_132 = arith.constant 2.000000e+00 : f32
    %405 = vector.broadcast %cst_132 : f32 to vector<1x64xf32>
    %406 = arith.subf %405, %404 : vector<1x64xf32>
    %407 = arith.mulf %403, %406 : vector<1x64xf32>
    %408 = arith.index_cast %c5_i32 : i32 to index
    %c0_133 = arith.constant 0 : index
    %409 = vector.load %arg32[%408, %c0_133] : memref<8x64xf32, #tpu.memory_space<vmem>>, vector<1x64xf32>
    %410 = arith.mulf %409, %400 : vector<1x64xf32>
    %411 = arith.mulf %410, %407 : vector<1x64xf32>
    %412 = arith.index_cast %c5_i32 : i32 to index
    %c0_134 = arith.constant 0 : index
    %413 = vector.load %arg33[%412, %c0_134] : memref<8x64xf32, #tpu.memory_space<vmem>>, vector<1x64xf32>
    tpu.vector_store %arg33[%412, %c0_134], %411 {strides = array<i32>} : memref<8x64xf32, #tpu.memory_space<vmem>>, vector<1x64xf32>,
    %414 = arith.addf %198, %378 : vector<1x64xf32>
    %415 = arith.maximumf %414, %389 : vector<1x64xf32>
    %416 = arith.subf %414, %415 : vector<1x64xf32>
    %417 = math.exp %416 : vector<1x64xf32>
    %418 = arith.subf %389, %415 : vector<1x64xf32>
    %419 = math.exp %418 : vector<1x64xf32>
    %420 = arith.mulf %417, %385 : vector<1x64xf32>
    %421 = arith.mulf %419, %391 : vector<1x64xf32>
    %422 = arith.addf %420, %421 : vector<1x64xf32>
    %423 = arith.mulf %417, %387 : vector<1x64xf32>
    %424 = arith.addf %423, %419 : vector<1x64xf32>
    %c6_i32 = arith.constant 6 : i32
    %425 = arith.index_cast %c6_i32 : i32 to index
    %c0_135 = arith.constant 0 : index
    %426 = vector.load %arg30[%425, %c0_135] : memref<8x64xf32, #tpu.memory_space<vmem>>, vector<1x64xf32>
    %427 = arith.index_cast %c6_i32 : i32 to index
    %c0_136 = arith.constant 0 : index
    %428 = vector.load %arg31[%427, %c0_136] : memref<8x64xf32, #tpu.memory_space<vmem>>, vector<1x64xf32>
    %429 = arith.addf %199, %426 : vector<1x64xf32>
    %430 = arith.maximumf %415, %429 : vector<1x64xf32>
    %431 = arith.subf %415, %430 : vector<1x64xf32>
    %432 = math.exp %431 : vector<1x64xf32>
    %433 = arith.subf %429, %430 : vector<1x64xf32>
    %434 = math.exp %433 : vector<1x64xf32>
    %435 = arith.mulf %432, %422 : vector<1x64xf32>
    %436 = arith.mulf %434, %428 : vector<1x64xf32>
    %437 = arith.addf %435, %436 : vector<1x64xf32>
    %438 = arith.mulf %432, %424 : vector<1x64xf32>
    %439 = arith.addf %438, %434 : vector<1x64xf32>
    %440 = tpu.reciprocal %439 {approx = true} : vector<1x64xf32> -> vector<1x64xf32>
    %441 = arith.mulf %439, %440 : vector<1x64xf32>
    %cst_137 = arith.constant 2.000000e+00 : f32
    %442 = vector.broadcast %cst_137 : f32 to vector<1x64xf32>
    %443 = arith.subf %442, %441 : vector<1x64xf32>
    %444 = arith.mulf %440, %443 : vector<1x64xf32>
    %445 = arith.index_cast %c6_i32 : i32 to index
    %c0_138 = arith.constant 0 : index
    %446 = vector.load %arg32[%445, %c0_138] : memref<8x64xf32, #tpu.memory_space<vmem>>, vector<1x64xf32>
    %447 = arith.mulf %446, %437 : vector<1x64xf32>
    %448 = arith.mulf %447, %444 : vector<1x64xf32>
    %449 = arith.index_cast %c6_i32 : i32 to index
    %c0_139 = arith.constant 0 : index
    %450 = vector.load %arg33[%449, %c0_139] : memref<8x64xf32, #tpu.memory_space<vmem>>, vector<1x64xf32>
    tpu.vector_store %arg33[%449, %c0_139], %448 {strides = array<i32>} : memref<8x64xf32, #tpu.memory_space<vmem>>, vector<1x64xf32>,
    %451 = arith.addf %198, %415 : vector<1x64xf32>
    %452 = arith.maximumf %451, %426 : vector<1x64xf32>
    %453 = arith.subf %451, %452 : vector<1x64xf32>
    %454 = math.exp %453 : vector<1x64xf32>
    %455 = arith.subf %426, %452 : vector<1x64xf32>
    %456 = math.exp %455 : vector<1x64xf32>
    %457 = arith.mulf %454, %422 : vector<1x64xf32>
    %458 = arith.mulf %456, %428 : vector<1x64xf32>
    %459 = arith.addf %457, %458 : vector<1x64xf32>
    %460 = arith.mulf %454, %424 : vector<1x64xf32>
    %461 = arith.addf %460, %456 : vector<1x64xf32>
    %c7_i32 = arith.constant 7 : i32
    %462 = arith.index_cast %c7_i32 : i32 to index
    %c0_140 = arith.constant 0 : index
    %463 = vector.load %arg30[%462, %c0_140] : memref<8x64xf32, #tpu.memory_space<vmem>>, vector<1x64xf32>
    %464 = arith.index_cast %c7_i32 : i32 to index
    %c0_141 = arith.constant 0 : index
    %465 = vector.load %arg31[%464, %c0_141] : memref<8x64xf32, #tpu.memory_space<vmem>>, vector<1x64xf32>
    %466 = arith.addf %199, %463 : vector<1x64xf32>
    %467 = arith.maximumf %452, %466 : vector<1x64xf32>
    %468 = arith.subf %452, %467 : vector<1x64xf32>
    %469 = math.exp %468 : vector<1x64xf32>
    %470 = arith.subf %466, %467 : vector<1x64xf32>
    %471 = math.exp %470 : vector<1x64xf32>
    %472 = arith.mulf %469, %459 : vector<1x64xf32>
    %473 = arith.mulf %471, %465 : vector<1x64xf32>
    %474 = arith.addf %472, %473 : vector<1x64xf32>
    %475 = arith.mulf %469, %461 : vector<1x64xf32>
    %476 = arith.addf %475, %471 : vector<1x64xf32>
    %477 = tpu.reciprocal %476 {approx = true} : vector<1x64xf32> -> vector<1x64xf32>
    %478 = arith.mulf %476, %477 : vector<1x64xf32>
    %cst_142 = arith.constant 2.000000e+00 : f32
    %479 = vector.broadcast %cst_142 : f32 to vector<1x64xf32>
    %480 = arith.subf %479, %478 : vector<1x64xf32>
    %481 = arith.mulf %477, %480 : vector<1x64xf32>
    %482 = arith.index_cast %c7_i32 : i32 to index
    %c0_143 = arith.constant 0 : index
    %483 = vector.load %arg32[%482, %c0_143] : memref<8x64xf32, #tpu.memory_space<vmem>>, vector<1x64xf32>
    %484 = arith.mulf %483, %474 : vector<1x64xf32>
    %485 = arith.mulf %484, %481 : vector<1x64xf32>
    %486 = arith.index_cast %c7_i32 : i32 to index
    %c0_144 = arith.constant 0 : index
    %487 = vector.load %arg33[%486, %c0_144] : memref<8x64xf32, #tpu.memory_space<vmem>>, vector<1x64xf32>
    tpu.vector_store %arg33[%486, %c0_144], %485 {strides = array<i32>} : memref<8x64xf32, #tpu.memory_space<vmem>>, vector<1x64xf32>,
    %488 = arith.addf %198, %452 : vector<1x64xf32>
    %489 = arith.maximumf %488, %463 : vector<1x64xf32>
    %490 = arith.subf %488, %489 : vector<1x64xf32>
    %491 = math.exp %490 : vector<1x64xf32>
    %492 = arith.subf %463, %489 : vector<1x64xf32>
    %493 = math.exp %492 : vector<1x64xf32>
    %494 = arith.mulf %491, %459 : vector<1x64xf32>
    %495 = arith.mulf %493, %465 : vector<1x64xf32>
    %496 = arith.addf %494, %495 : vector<1x64xf32>
    %497 = arith.mulf %491, %461 : vector<1x64xf32>
    %498 = arith.addf %497, %493 : vector<1x64xf32>
    %c8_i32 = arith.constant 8 : i32
    %c0_145 = arith.constant 0 : index
    %c0_146 = arith.constant 0 : index
    %499 = vector.load %arg33[%c0_145, %c0_146] : memref<8x64xf32, #tpu.memory_space<vmem>>, vector<8x32xf32>
    %500 = arith.truncf %499 : vector<8x32xf32> to vector<8x32xbf16>
    %c0_147 = arith.constant 0 : index
    %c0_148 = arith.constant 0 : index
    %501 = vector.load %arg20[%c0_147, %c0_148] : memref<32x32xbf16, #tpu.memory_space<vmem>>, vector<32x32xbf16>
    %cst_149 = arith.constant dense<0.000000e+00> : vector<8x32xf32>
    %502 = tpu.matmul %500, %501, %cst_149 {dimension_numbers = #tpu.dot_dimension_numbers<[1], [0], [0], [1], [0, 0, 1, 1], [], []>} : vector<8x32xbf16>, vector<32x32xbf16>, vector<8x32xf32> -> vector<8x32xf32>
    %503 = arith.addf %27, %502 : vector<8x32xf32>
    %c0_150 = arith.constant 0 : index
    %c0_151 = arith.constant 0 : index
    %504 = vector.load %arg8[%c0_150, %c0_151] : memref<1x32xf32, #tpu.memory_space<vmem>>, vector<1x32xf32>
    %c0_152 = arith.constant 0 : index
    %c0_153 = arith.constant 0 : index
    %505 = vector.load %arg9[%c0_152, %c0_153] : memref<1x32xf32, #tpu.memory_space<vmem>>, vector<1x32xf32>
    %cst_154 = arith.constant dense<0.000000e+00> : vector<8xf32>
    %506 = vector.multi_reduction <add>, %503, %cst_154 [1] : vector<8x32xf32> to vector<8xf32>
    %507 = vector.shape_cast %506 : vector<8xf32> to vector<8x1xf32>
    %cst_155 = arith.constant 3.200000e+01 : f32
    %508 = vector.broadcast %cst_155 : f32 to vector<8x1xf32>
    %509 = arith.divf %507, %508 : vector<8x1xf32>
    %510 = vector.broadcast %509 : vector<8x1xf32> to vector<8x32xf32>
    %511 = arith.subf %503, %510 : vector<8x32xf32>
    %512 = arith.mulf %511, %511 : vector<8x32xf32>
    %cst_156 = arith.constant dense<0.000000e+00> : vector<8xf32>
    %513 = vector.multi_reduction <add>, %512, %cst_156 [1] : vector<8x32xf32> to vector<8xf32>
    %514 = vector.shape_cast %513 : vector<8xf32> to vector<8x1xf32>
    %cst_157 = arith.constant 3.200000e+01 : f32
    %515 = vector.broadcast %cst_157 : f32 to vector<8x1xf32>
    %516 = arith.divf %514, %515 : vector<8x1xf32>
    %517 = vector.broadcast %509 : vector<8x1xf32> to vector<8x32xf32>
    %518 = arith.subf %503, %517 : vector<8x32xf32>
    %cst_158 = arith.constant 9.99999974E-6 : f32
    %519 = vector.broadcast %cst_158 : f32 to vector<8x1xf32>
    %520 = arith.addf %516, %519 : vector<8x1xf32>
    %521 = math.rsqrt %520 : vector<8x1xf32>
    %522 = vector.broadcast %521 : vector<8x1xf32> to vector<8x32xf32>
    %523 = arith.mulf %518, %522 : vector<8x32xf32>
    %524 = vector.broadcast %504 : vector<1x32xf32> to vector<8x32xf32>
    %525 = arith.mulf %523, %524 : vector<8x32xf32>
    %526 = vector.broadcast %505 : vector<1x32xf32> to vector<8x32xf32>
    %527 = arith.addf %525, %526 : vector<8x32xf32>
    %c1_i32_159 = arith.constant 1 : i32
    %528 = tpu.dynamic_rotate %527 by %c1_i32_159 dim 0 : vector<8x32xf32>, i32 -> vector<8x32xf32>
    %529 = tpu.iota {dimensions = array<i32: 0>} : vector<8x32xi32>
    %c0_i32_160 = arith.constant 0 : i32
    %530 = vector.broadcast %c0_i32_160 : i32 to vector<8x32xi32>
    %531 = arith.cmpi eq, %529, %530 : vector<8x32xi32>
    %cst_161 = arith.constant 0.000000e+00 : f32
    %532 = vector.broadcast %cst_161 : f32 to vector<8x32xf32>
    %533 = arith.select %531, %532, %528 : vector<8x32xi1>, vector<8x32xf32>
    %c0_162 = arith.constant 0 : index
    %c0_163 = arith.constant 0 : index
    %534 = vector.load %arg21[%c0_162, %c0_163] : memref<1x32xf32, #tpu.memory_space<vmem>>, vector<1x32xf32>
    %c0_164 = arith.constant 0 : index
    %c0_165 = arith.constant 0 : index
    %535 = vector.load %arg22[%c0_164, %c0_165] : memref<1x32xf32, #tpu.memory_space<vmem>>, vector<1x32xf32>
    %536 = vector.broadcast %534 : vector<1x32xf32> to vector<8x32xf32>
    %537 = arith.mulf %527, %536 : vector<8x32xf32>
    %cst_166 = arith.constant 1.000000e+00 : f32
    %538 = vector.broadcast %cst_166 : f32 to vector<1x32xf32>
    %539 = arith.subf %538, %534 : vector<1x32xf32>
    %540 = vector.broadcast %539 : vector<1x32xf32> to vector<8x32xf32>
    %541 = arith.mulf %533, %540 : vector<8x32xf32>
    %542 = arith.addf %537, %541 : vector<8x32xf32>
    %543 = vector.broadcast %535 : vector<1x32xf32> to vector<8x32xf32>
    %544 = arith.mulf %527, %543 : vector<8x32xf32>
    %cst_167 = arith.constant 1.000000e+00 : f32
    %545 = vector.broadcast %cst_167 : f32 to vector<1x32xf32>
    %546 = arith.subf %545, %535 : vector<1x32xf32>
    %547 = vector.broadcast %546 : vector<1x32xf32> to vector<8x32xf32>
    %548 = arith.mulf %533, %547 : vector<8x32xf32>
    %549 = arith.addf %544, %548 : vector<8x32xf32>
    %550 = arith.truncf %542 : vector<8x32xf32> to vector<8x32xbf16>
    %c0_168 = arith.constant 0 : index
    %c0_169 = arith.constant 0 : index
    %551 = vector.load %arg23[%c0_168, %c0_169] : memref<32x128xbf16, #tpu.memory_space<vmem>>, vector<32x128xbf16>
    %cst_170 = arith.constant dense<0.000000e+00> : vector<8x128xf32>
    %552 = tpu.matmul %550, %551, %cst_170 {dimension_numbers = #tpu.dot_dimension_numbers<[1], [0], [0], [1], [0, 0, 1, 1], [], []>} : vector<8x32xbf16>, vector<32x128xbf16>, vector<8x128xf32> -> vector<8x128xf32>
    %cst_171 = arith.constant 0.000000e+00 : f32
    %553 = vector.broadcast %cst_171 : f32 to vector<8x128xf32>
    %554 = arith.maximumf %552, %553 : vector<8x128xf32>
    %555 = arith.mulf %554, %554 : vector<8x128xf32>
    %556 = arith.truncf %555 : vector<8x128xf32> to vector<8x128xbf16>
    %c0_172 = arith.constant 0 : index
    %c0_173 = arith.constant 0 : index
    %557 = vector.load %arg24[%c0_172, %c0_173] : memref<128x32xbf16, #tpu.memory_space<vmem>>, vector<128x32xbf16>
    %cst_174 = arith.constant dense<0.000000e+00> : vector<8x32xf32>
    %558 = tpu.matmul %556, %557, %cst_174 {dimension_numbers = #tpu.dot_dimension_numbers<[1], [0], [0], [1], [0, 0, 1, 1], [], []>} : vector<8x128xbf16>, vector<128x32xbf16>, vector<8x32xf32> -> vector<8x32xf32>
    %559 = arith.truncf %549 : vector<8x32xf32> to vector<8x32xbf16>
    %c0_175 = arith.constant 0 : index
    %c0_176 = arith.constant 0 : index
    %560 = vector.load %arg25[%c0_175, %c0_176] : memref<32x32xbf16, #tpu.memory_space<vmem>>, vector<32x32xbf16>
    %cst_177 = arith.constant dense<0.000000e+00> : vector<8x32xf32>
    %561 = tpu.matmul %559, %560, %cst_177 {dimension_numbers = #tpu.dot_dimension_numbers<[1], [0], [0], [1], [0, 0, 1, 1], [], []>} : vector<8x32xbf16>, vector<32x32xbf16>, vector<8x32xf32> -> vector<8x32xf32>
    %562 = arith.negf %561 : vector<8x32xf32>
    %563 = math.exp %562 : vector<8x32xf32>
    %cst_178 = arith.constant 1.000000e+00 : f32
    %564 = vector.broadcast %cst_178 : f32 to vector<8x32xf32>
    %565 = arith.addf %564, %563 : vector<8x32xf32>
    %566 = arith.divf %564, %565 : vector<8x32xf32>
    %567 = arith.mulf %566, %558 : vector<8x32xf32>
    %568 = arith.addf %503, %567 : vector<8x32xf32>
    %c0_179 = arith.constant 0 : index
    %c0_180 = arith.constant 0 : index
    %569 = vector.load %arg10[%c0_179, %c0_180] : memref<1x32xf32, #tpu.memory_space<vmem>>, vector<1x32xf32>
    %c0_181 = arith.constant 0 : index
    %c0_182 = arith.constant 0 : index
    %570 = vector.load %arg11[%c0_181, %c0_182] : memref<1x32xf32, #tpu.memory_space<vmem>>, vector<1x32xf32>
    %cst_183 = arith.constant dense<0.000000e+00> : vector<8xf32>
    %571 = vector.multi_reduction <add>, %568, %cst_183 [1] : vector<8x32xf32> to vector<8xf32>
    %572 = vector.shape_cast %571 : vector<8xf32> to vector<8x1xf32>
    %cst_184 = arith.constant 3.200000e+01 : f32
    %573 = vector.broadcast %cst_184 : f32 to vector<8x1xf32>
    %574 = arith.divf %572, %573 : vector<8x1xf32>
    %575 = vector.broadcast %574 : vector<8x1xf32> to vector<8x32xf32>
    %576 = arith.subf %568, %575 : vector<8x32xf32>
    %577 = arith.mulf %576, %576 : vector<8x32xf32>
    %cst_185 = arith.constant dense<0.000000e+00> : vector<8xf32>
    %578 = vector.multi_reduction <add>, %577, %cst_185 [1] : vector<8x32xf32> to vector<8xf32>
    %579 = vector.shape_cast %578 : vector<8xf32> to vector<8x1xf32>
    %cst_186 = arith.constant 3.200000e+01 : f32
    %580 = vector.broadcast %cst_186 : f32 to vector<8x1xf32>
    %581 = arith.divf %579, %580 : vector<8x1xf32>
    %582 = vector.broadcast %574 : vector<8x1xf32> to vector<8x32xf32>
    %583 = arith.subf %568, %582 : vector<8x32xf32>
    %cst_187 = arith.constant 9.99999974E-6 : f32
    %584 = vector.broadcast %cst_187 : f32 to vector<8x1xf32>
    %585 = arith.addf %581, %584 : vector<8x1xf32>
    %586 = math.rsqrt %585 : vector<8x1xf32>
    %587 = vector.broadcast %586 : vector<8x1xf32> to vector<8x32xf32>
    %588 = arith.mulf %583, %587 : vector<8x32xf32>
    %589 = vector.broadcast %569 : vector<1x32xf32> to vector<8x32xf32>
    %590 = arith.mulf %588, %589 : vector<8x32xf32>
    %591 = vector.broadcast %570 : vector<1x32xf32> to vector<8x32xf32>
    %592 = arith.addf %590, %591 : vector<8x32xf32>
    %593 = arith.truncf %592 : vector<8x32xf32> to vector<8x32xbf16>
    %c0_188 = arith.constant 0 : index
    %c0_189 = arith.constant 0 : index
    %594 = vector.load %arg26[%c0_188, %c0_189] : memref<32x128xbf16, #tpu.memory_space<vmem>>, vector<32x128xbf16>
    %cst_190 = arith.constant dense<0.000000e+00> : vector<8x128xf32>
    %595 = tpu.matmul %593, %594, %cst_190 {dimension_numbers = #tpu.dot_dimension_numbers<[1], [0], [0], [1], [0, 0, 1, 1], [], []>} : vector<8x32xbf16>, vector<32x128xbf16>, vector<8x128xf32> -> vector<8x128xf32>
    %c0_191 = arith.constant 0 : index
    %c0_192 = arith.constant 0 : index
    %596 = vector.load %arg27[%c0_191, %c0_192] : memref<32x128xbf16, #tpu.memory_space<vmem>>, vector<32x128xbf16>
    %cst_193 = arith.constant dense<0.000000e+00> : vector<8x128xf32>
    %597 = tpu.matmul %593, %596, %cst_193 {dimension_numbers = #tpu.dot_dimension_numbers<[1], [0], [0], [1], [0, 0, 1, 1], [], []>} : vector<8x32xbf16>, vector<32x128xbf16>, vector<8x128xf32> -> vector<8x128xf32>
    %c0_194 = arith.constant 0 : index
    %c0_195 = arith.constant 0 : index
    %c0_196 = arith.constant 0 : index
    %598 = vector.load %arg2[%c0_194, %c0_195, %c0_196] : memref<2x8x32xf32, #tpu.memory_space<vmem>>, vector<1x8x32xf32>
    %599 = vector.shape_cast %598 : vector<1x8x32xf32> to vector<8x32xf32>
    %600 = arith.truncf %599 : vector<8x32xf32> to vector<8x32xbf16>
    %c0_197 = arith.constant 0 : index
    %c0_198 = arith.constant 0 : index
    %601 = vector.load %arg28[%c0_197, %c0_198] : memref<32x32xbf16, #tpu.memory_space<vmem>>, vector<32x32xbf16>
    %cst_199 = arith.constant dense<0.000000e+00> : vector<8x32xf32>
    %602 = tpu.matmul %600, %601, %cst_199 {dimension_numbers = #tpu.dot_dimension_numbers<[1], [0], [0], [1], [0, 0, 1, 1], [], []>} : vector<8x32xbf16>, vector<32x32xbf16>, vector<8x32xf32> -> vector<8x32xf32>
    %603 = arith.truncf %595 : vector<8x128xf32> to vector<8x128xbf16>
    %604 = arith.truncf %597 : vector<8x128xf32> to vector<8x128xbf16>
    %cst_200 = arith.constant dense<0.000000e+00> : vector<8x8xf32>
    %605 = tpu.matmul %603, %604, %cst_200 {dimension_numbers = #tpu.dot_dimension_numbers<[1], [1], [0], [0], [0, 0, 1, 0], [], []>} : vector<8x128xbf16>, vector<8x128xbf16>, vector<8x8xf32> -> vector<8x8xf32>
    %cst_201 = arith.constant 2.500000e-01 : f32
    %606 = vector.broadcast %cst_201 : f32 to vector<8x8xf32>
    %607 = arith.mulf %605, %606 : vector<8x8xf32>
    %608 = tpu.iota {dimensions = array<i32: 0>} : vector<8x8xi32>
    %609 = tpu.iota {dimensions = array<i32: 1>} : vector<8x8xi32>
    %610 = arith.cmpi sge, %608, %609 : vector<8x8xi32>
    %cst_202 = arith.constant 0.000000e+00 : f32
    %611 = vector.broadcast %cst_202 : f32 to vector<8x8xf32>
    %612 = arith.select %610, %607, %611 : vector<8x8xi1>, vector<8x8xf32>
    %613 = arith.truncf %612 : vector<8x8xf32> to vector<8x8xbf16>
    %614 = arith.truncf %602 : vector<8x32xf32> to vector<8x32xbf16>
    %cst_203 = arith.constant dense<0.000000e+00> : vector<8x32xf32>
    %615 = tpu.matmul %613, %614, %cst_203 {dimension_numbers = #tpu.dot_dimension_numbers<[1], [0], [0], [1], [0, 0, 1, 1], [], []>} : vector<8x8xbf16>, vector<8x32xbf16>, vector<8x32xf32> -> vector<8x32xf32>
    %616 = arith.addf %568, %615 : vector<8x32xf32>
    %c0_204 = arith.constant 0 : index
    %c0_205 = arith.constant 0 : index
    %c0_206 = arith.constant 0 : index
    %617 = vector.load %arg29[%c0_204, %c0_205, %c0_206] : memref<2x8x32xf32, #tpu.memory_space<vmem>>, vector<1x8x32xf32>
    %618 = vector.shape_cast %617 : vector<1x8x32xf32> to vector<8x32xf32>
    %619 = vector.shape_cast %616 : vector<8x32xf32> to vector<1x8x32xf32>
    tpu.vector_store %arg29[%c0_204, %c0_205, %c0_206], %619 {strides = array<i32>} : memref<2x8x32xf32, #tpu.memory_space<vmem>>, vector<1x8x32xf32>,
    %c0_207 = arith.constant 0 : index
    %c32_208 = arith.constant 32 : index
    %620 = vector.load %arg33[%c0_207, %c32_208] : memref<8x64xf32, #tpu.memory_space<vmem>>, vector<8x32xf32>
    %621 = arith.truncf %620 : vector<8x32xf32> to vector<8x32xbf16>
    %c0_209 = arith.constant 0 : index
    %c0_210 = arith.constant 0 : index
    %622 = vector.load %arg20[%c0_209, %c0_210] : memref<32x32xbf16, #tpu.memory_space<vmem>>, vector<32x32xbf16>
    %cst_211 = arith.constant dense<0.000000e+00> : vector<8x32xf32>
    %623 = tpu.matmul %621, %622, %cst_211 {dimension_numbers = #tpu.dot_dimension_numbers<[1], [0], [0], [1], [0, 0, 1, 1], [], []>} : vector<8x32xbf16>, vector<32x32xbf16>, vector<8x32xf32> -> vector<8x32xf32>
    %624 = arith.addf %126, %623 : vector<8x32xf32>
    %c0_212 = arith.constant 0 : index
    %c0_213 = arith.constant 0 : index
    %625 = vector.load %arg8[%c0_212, %c0_213] : memref<1x32xf32, #tpu.memory_space<vmem>>, vector<1x32xf32>
    %c0_214 = arith.constant 0 : index
    %c0_215 = arith.constant 0 : index
    %626 = vector.load %arg9[%c0_214, %c0_215] : memref<1x32xf32, #tpu.memory_space<vmem>>, vector<1x32xf32>
    %cst_216 = arith.constant dense<0.000000e+00> : vector<8xf32>
    %627 = vector.multi_reduction <add>, %624, %cst_216 [1] : vector<8x32xf32> to vector<8xf32>
    %628 = vector.shape_cast %627 : vector<8xf32> to vector<8x1xf32>
    %cst_217 = arith.constant 3.200000e+01 : f32
    %629 = vector.broadcast %cst_217 : f32 to vector<8x1xf32>
    %630 = arith.divf %628, %629 : vector<8x1xf32>
    %631 = vector.broadcast %630 : vector<8x1xf32> to vector<8x32xf32>
    %632 = arith.subf %624, %631 : vector<8x32xf32>
    %633 = arith.mulf %632, %632 : vector<8x32xf32>
    %cst_218 = arith.constant dense<0.000000e+00> : vector<8xf32>
    %634 = vector.multi_reduction <add>, %633, %cst_218 [1] : vector<8x32xf32> to vector<8xf32>
    %635 = vector.shape_cast %634 : vector<8xf32> to vector<8x1xf32>
    %cst_219 = arith.constant 3.200000e+01 : f32
    %636 = vector.broadcast %cst_219 : f32 to vector<8x1xf32>
    %637 = arith.divf %635, %636 : vector<8x1xf32>
    %638 = vector.broadcast %630 : vector<8x1xf32> to vector<8x32xf32>
    %639 = arith.subf %624, %638 : vector<8x32xf32>
    %cst_220 = arith.constant 9.99999974E-6 : f32
    %640 = vector.broadcast %cst_220 : f32 to vector<8x1xf32>
    %641 = arith.addf %637, %640 : vector<8x1xf32>
    %642 = math.rsqrt %641 : vector<8x1xf32>
    %643 = vector.broadcast %642 : vector<8x1xf32> to vector<8x32xf32>
    %644 = arith.mulf %639, %643 : vector<8x32xf32>
    %645 = vector.broadcast %625 : vector<1x32xf32> to vector<8x32xf32>
    %646 = arith.mulf %644, %645 : vector<8x32xf32>
    %647 = vector.broadcast %626 : vector<1x32xf32> to vector<8x32xf32>
    %648 = arith.addf %646, %647 : vector<8x32xf32>
    %c1_i32_221 = arith.constant 1 : i32
    %649 = tpu.dynamic_rotate %648 by %c1_i32_221 dim 0 : vector<8x32xf32>, i32 -> vector<8x32xf32>
    %650 = tpu.iota {dimensions = array<i32: 0>} : vector<8x32xi32>
    %c0_i32_222 = arith.constant 0 : i32
    %651 = vector.broadcast %c0_i32_222 : i32 to vector<8x32xi32>
    %652 = arith.cmpi eq, %650, %651 : vector<8x32xi32>
    %cst_223 = arith.constant 0.000000e+00 : f32
    %653 = vector.broadcast %cst_223 : f32 to vector<8x32xf32>
    %654 = arith.select %652, %653, %649 : vector<8x32xi1>, vector<8x32xf32>
    %c0_224 = arith.constant 0 : index
    %c0_225 = arith.constant 0 : index
    %655 = vector.load %arg21[%c0_224, %c0_225] : memref<1x32xf32, #tpu.memory_space<vmem>>, vector<1x32xf32>
    %c0_226 = arith.constant 0 : index
    %c0_227 = arith.constant 0 : index
    %656 = vector.load %arg22[%c0_226, %c0_227] : memref<1x32xf32, #tpu.memory_space<vmem>>, vector<1x32xf32>
    %657 = vector.broadcast %655 : vector<1x32xf32> to vector<8x32xf32>
    %658 = arith.mulf %648, %657 : vector<8x32xf32>
    %cst_228 = arith.constant 1.000000e+00 : f32
    %659 = vector.broadcast %cst_228 : f32 to vector<1x32xf32>
    %660 = arith.subf %659, %655 : vector<1x32xf32>
    %661 = vector.broadcast %660 : vector<1x32xf32> to vector<8x32xf32>
    %662 = arith.mulf %654, %661 : vector<8x32xf32>
    %663 = arith.addf %658, %662 : vector<8x32xf32>
    %664 = vector.broadcast %656 : vector<1x32xf32> to vector<8x32xf32>
    %665 = arith.mulf %648, %664 : vector<8x32xf32>
    %cst_229 = arith.constant 1.000000e+00 : f32
    %666 = vector.broadcast %cst_229 : f32 to vector<1x32xf32>
    %667 = arith.subf %666, %656 : vector<1x32xf32>
    %668 = vector.broadcast %667 : vector<1x32xf32> to vector<8x32xf32>
    %669 = arith.mulf %654, %668 : vector<8x32xf32>
    %670 = arith.addf %665, %669 : vector<8x32xf32>
    %671 = arith.truncf %663 : vector<8x32xf32> to vector<8x32xbf16>
    %c0_230 = arith.constant 0 : index
    %c0_231 = arith.constant 0 : index
    %672 = vector.load %arg23[%c0_230, %c0_231] : memref<32x128xbf16, #tpu.memory_space<vmem>>, vector<32x128xbf16>
    %cst_232 = arith.constant dense<0.000000e+00> : vector<8x128xf32>
    %673 = tpu.matmul %671, %672, %cst_232 {dimension_numbers = #tpu.dot_dimension_numbers<[1], [0], [0], [1], [0, 0, 1, 1], [], []>} : vector<8x32xbf16>, vector<32x128xbf16>, vector<8x128xf32> -> vector<8x128xf32>
    %cst_233 = arith.constant 0.000000e+00 : f32
    %674 = vector.broadcast %cst_233 : f32 to vector<8x128xf32>
    %675 = arith.maximumf %673, %674 : vector<8x128xf32>
    %676 = arith.mulf %675, %675 : vector<8x128xf32>
    %677 = arith.truncf %676 : vector<8x128xf32> to vector<8x128xbf16>
    %c0_234 = arith.constant 0 : index
    %c0_235 = arith.constant 0 : index
    %678 = vector.load %arg24[%c0_234, %c0_235] : memref<128x32xbf16, #tpu.memory_space<vmem>>, vector<128x32xbf16>
    %cst_236 = arith.constant dense<0.000000e+00> : vector<8x32xf32>
    %679 = tpu.matmul %677, %678, %cst_236 {dimension_numbers = #tpu.dot_dimension_numbers<[1], [0], [0], [1], [0, 0, 1, 1], [], []>} : vector<8x128xbf16>, vector<128x32xbf16>, vector<8x32xf32> -> vector<8x32xf32>
    %680 = arith.truncf %670 : vector<8x32xf32> to vector<8x32xbf16>
    %c0_237 = arith.constant 0 : index
    %c0_238 = arith.constant 0 : index
    %681 = vector.load %arg25[%c0_237, %c0_238] : memref<32x32xbf16, #tpu.memory_space<vmem>>, vector<32x32xbf16>
    %cst_239 = arith.constant dense<0.000000e+00> : vector<8x32xf32>
    %682 = tpu.matmul %680, %681, %cst_239 {dimension_numbers = #tpu.dot_dimension_numbers<[1], [0], [0], [1], [0, 0, 1, 1], [], []>} : vector<8x32xbf16>, vector<32x32xbf16>, vector<8x32xf32> -> vector<8x32xf32>
    %683 = arith.negf %682 : vector<8x32xf32>
    %684 = math.exp %683 : vector<8x32xf32>
    %cst_240 = arith.constant 1.000000e+00 : f32
    %685 = vector.broadcast %cst_240 : f32 to vector<8x32xf32>
    %686 = arith.addf %685, %684 : vector<8x32xf32>
    %687 = arith.divf %685, %686 : vector<8x32xf32>
    %688 = arith.mulf %687, %679 : vector<8x32xf32>
    %689 = arith.addf %624, %688 : vector<8x32xf32>
    %c0_241 = arith.constant 0 : index
    %c0_242 = arith.constant 0 : index
    %690 = vector.load %arg10[%c0_241, %c0_242] : memref<1x32xf32, #tpu.memory_space<vmem>>, vector<1x32xf32>
    %c0_243 = arith.constant 0 : index
    %c0_244 = arith.constant 0 : index
    %691 = vector.load %arg11[%c0_243, %c0_244] : memref<1x32xf32, #tpu.memory_space<vmem>>, vector<1x32xf32>
    %cst_245 = arith.constant dense<0.000000e+00> : vector<8xf32>
    %692 = vector.multi_reduction <add>, %689, %cst_245 [1] : vector<8x32xf32> to vector<8xf32>
    %693 = vector.shape_cast %692 : vector<8xf32> to vector<8x1xf32>
    %cst_246 = arith.constant 3.200000e+01 : f32
    %694 = vector.broadcast %cst_246 : f32 to vector<8x1xf32>
    %695 = arith.divf %693, %694 : vector<8x1xf32>
    %696 = vector.broadcast %695 : vector<8x1xf32> to vector<8x32xf32>
    %697 = arith.subf %689, %696 : vector<8x32xf32>
    %698 = arith.mulf %697, %697 : vector<8x32xf32>
    %cst_247 = arith.constant dense<0.000000e+00> : vector<8xf32>
    %699 = vector.multi_reduction <add>, %698, %cst_247 [1] : vector<8x32xf32> to vector<8xf32>
    %700 = vector.shape_cast %699 : vector<8xf32> to vector<8x1xf32>
    %cst_248 = arith.constant 3.200000e+01 : f32
    %701 = vector.broadcast %cst_248 : f32 to vector<8x1xf32>
    %702 = arith.divf %700, %701 : vector<8x1xf32>
    %703 = vector.broadcast %695 : vector<8x1xf32> to vector<8x32xf32>
    %704 = arith.subf %689, %703 : vector<8x32xf32>
    %cst_249 = arith.constant 9.99999974E-6 : f32
    %705 = vector.broadcast %cst_249 : f32 to vector<8x1xf32>
    %706 = arith.addf %702, %705 : vector<8x1xf32>
    %707 = math.rsqrt %706 : vector<8x1xf32>
    %708 = vector.broadcast %707 : vector<8x1xf32> to vector<8x32xf32>
    %709 = arith.mulf %704, %708 : vector<8x32xf32>
    %710 = vector.broadcast %690 : vector<1x32xf32> to vector<8x32xf32>
    %711 = arith.mulf %709, %710 : vector<8x32xf32>
    %712 = vector.broadcast %691 : vector<1x32xf32> to vector<8x32xf32>
    %713 = arith.addf %711, %712 : vector<8x32xf32>
    %714 = arith.truncf %713 : vector<8x32xf32> to vector<8x32xbf16>
    %c0_250 = arith.constant 0 : index
    %c0_251 = arith.constant 0 : index
    %715 = vector.load %arg26[%c0_250, %c0_251] : memref<32x128xbf16, #tpu.memory_space<vmem>>, vector<32x128xbf16>
    %cst_252 = arith.constant dense<0.000000e+00> : vector<8x128xf32>
    %716 = tpu.matmul %714, %715, %cst_252 {dimension_numbers = #tpu.dot_dimension_numbers<[1], [0], [0], [1], [0, 0, 1, 1], [], []>} : vector<8x32xbf16>, vector<32x128xbf16>, vector<8x128xf32> -> vector<8x128xf32>
    %c0_253 = arith.constant 0 : index
    %c0_254 = arith.constant 0 : index
    %717 = vector.load %arg27[%c0_253, %c0_254] : memref<32x128xbf16, #tpu.memory_space<vmem>>, vector<32x128xbf16>
    %cst_255 = arith.constant dense<0.000000e+00> : vector<8x128xf32>
    %718 = tpu.matmul %714, %717, %cst_255 {dimension_numbers = #tpu.dot_dimension_numbers<[1], [0], [0], [1], [0, 0, 1, 1], [], []>} : vector<8x32xbf16>, vector<32x128xbf16>, vector<8x128xf32> -> vector<8x128xf32>
    %c1_256 = arith.constant 1 : index
    %c0_257 = arith.constant 0 : index
    %c0_258 = arith.constant 0 : index
    %719 = vector.load %arg2[%c1_256, %c0_257, %c0_258] : memref<2x8x32xf32, #tpu.memory_space<vmem>>, vector<1x8x32xf32>
    %720 = vector.shape_cast %719 : vector<1x8x32xf32> to vector<8x32xf32>
    %721 = arith.truncf %720 : vector<8x32xf32> to vector<8x32xbf16>
    %c0_259 = arith.constant 0 : index
    %c0_260 = arith.constant 0 : index
    %722 = vector.load %arg28[%c0_259, %c0_260] : memref<32x32xbf16, #tpu.memory_space<vmem>>, vector<32x32xbf16>
    %cst_261 = arith.constant dense<0.000000e+00> : vector<8x32xf32>
    %723 = tpu.matmul %721, %722, %cst_261 {dimension_numbers = #tpu.dot_dimension_numbers<[1], [0], [0], [1], [0, 0, 1, 1], [], []>} : vector<8x32xbf16>, vector<32x32xbf16>, vector<8x32xf32> -> vector<8x32xf32>
    %724 = arith.truncf %716 : vector<8x128xf32> to vector<8x128xbf16>
    %725 = arith.truncf %718 : vector<8x128xf32> to vector<8x128xbf16>
    %cst_262 = arith.constant dense<0.000000e+00> : vector<8x8xf32>
    %726 = tpu.matmul %724, %725, %cst_262 {dimension_numbers = #tpu.dot_dimension_numbers<[1], [1], [0], [0], [0, 0, 1, 0], [], []>} : vector<8x128xbf16>, vector<8x128xbf16>, vector<8x8xf32> -> vector<8x8xf32>
    %cst_263 = arith.constant 2.500000e-01 : f32
    %727 = vector.broadcast %cst_263 : f32 to vector<8x8xf32>
    %728 = arith.mulf %726, %727 : vector<8x8xf32>
    %729 = tpu.iota {dimensions = array<i32: 0>} : vector<8x8xi32>
    %730 = tpu.iota {dimensions = array<i32: 1>} : vector<8x8xi32>
    %731 = arith.cmpi sge, %729, %730 : vector<8x8xi32>
    %cst_264 = arith.constant 0.000000e+00 : f32
    %732 = vector.broadcast %cst_264 : f32 to vector<8x8xf32>
    %733 = arith.select %731, %728, %732 : vector<8x8xi1>, vector<8x8xf32>
    %734 = arith.truncf %733 : vector<8x8xf32> to vector<8x8xbf16>
    %735 = arith.truncf %723 : vector<8x32xf32> to vector<8x32xbf16>
    %cst_265 = arith.constant dense<0.000000e+00> : vector<8x32xf32>
    %736 = tpu.matmul %734, %735, %cst_265 {dimension_numbers = #tpu.dot_dimension_numbers<[1], [0], [0], [1], [0, 0, 1, 1], [], []>} : vector<8x8xbf16>, vector<8x32xbf16>, vector<8x32xf32> -> vector<8x32xf32>
    %737 = arith.addf %689, %736 : vector<8x32xf32>
    %c1_266 = arith.constant 1 : index
    %c0_267 = arith.constant 0 : index
    %c0_268 = arith.constant 0 : index
    %738 = vector.load %arg29[%c1_266, %c0_267, %c0_268] : memref<2x8x32xf32, #tpu.memory_space<vmem>>, vector<1x8x32xf32>
    %739 = vector.shape_cast %738 : vector<1x8x32xf32> to vector<8x32xf32>
    %740 = vector.shape_cast %737 : vector<8x32xf32> to vector<1x8x32xf32>
    tpu.vector_store %arg29[%c1_266, %c0_267, %c0_268], %740 {strides = array<i32>} : memref<2x8x32xf32, #tpu.memory_space<vmem>>, vector<1x8x32xf32>,
    return
  }
  func.func @transform_0(%arg0: i32) -> (i32, i32, i32) {
    %c0_i32 = arith.constant 0 : i32
    %c0_i32_0 = arith.constant 0 : i32
    %c0_i32_1 = arith.constant 0 : i32
    return %arg0, %c0_i32, %c0_i32_0 : i32, i32, i32
  }
  func.func @transform_1(%arg0: i32) -> (i32, i32, i32) {
    %c0_i32 = arith.constant 0 : i32
    %c0_i32_0 = arith.constant 0 : i32
    %c0_i32_1 = arith.constant 0 : i32
    return %arg0, %c0_i32, %c0_i32_0 : i32, i32, i32
  }
  func.func @transform_2(%arg0: i32) -> (i32, i32) {
    %c0_i32 = arith.constant 0 : i32
    %c0_i32_0 = arith.constant 0 : i32
    %c0_i32_1 = arith.constant 0 : i32
    return %c0_i32, %c0_i32_0 : i32, i32
  }
  func.func @transform_3(%arg0: i32) -> (i32, i32) {
    %c0_i32 = arith.constant 0 : i32
    %c0_i32_0 = arith.constant 0 : i32
    %c0_i32_1 = arith.constant 0 : i32
    return %c0_i32, %c0_i32_0 : i32, i32
  }
  func.func @transform_4(%arg0: i32) -> (i32, i32) {
    %c0_i32 = arith.constant 0 : i32
    %c0_i32_0 = arith.constant 0 : i32
    %c0_i32_1 = arith.constant 0 : i32
    return %c0_i32, %c0_i32_0 : i32, i32
  }
  func.func @transform_5(%arg0: i32) -> (i32, i32) {
    %c0_i32 = arith.constant 0 : i32
    %c0_i32_0 = arith.constant 0 : i32
    %c0_i32_1 = arith.constant 0 : i32
    return %c0_i32, %c0_i32_0 : i32, i32
  }
  func.func @transform_6(%arg0: i32) -> (i32, i32) {
    %c0_i32 = arith.constant 0 : i32
    %c0_i32_0 = arith.constant 0 : i32
    %c0_i32_1 = arith.constant 0 : i32
    return %c0_i32, %c0_i32_0 : i32, i32
  }
  func.func @transform_7(%arg0: i32) -> (i32, i32) {
    %c0_i32 = arith.constant 0 : i32
    %c0_i32_0 = arith.constant 0 : i32
    %c0_i32_1 = arith.constant 0 : i32
    return %c0_i32, %c0_i32_0 : i32, i32
  }
  func.func @transform_8(%arg0: i32) -> (i32, i32) {
    %c0_i32 = arith.constant 0 : i32
    %c0_i32_0 = arith.constant 0 : i32
    %c0_i32_1 = arith.constant 0 : i32
    return %c0_i32, %c0_i32_0 : i32, i32
  }
  func.func @transform_9(%arg0: i32) -> (i32, i32) {
    %c0_i32 = arith.constant 0 : i32
    %c0_i32_0 = arith.constant 0 : i32
    %c0_i32_1 = arith.constant 0 : i32
    return %c0_i32, %c0_i32_0 : i32, i32
  }
  func.func @transform_10(%arg0: i32) -> (i32, i32) {
    %c0_i32 = arith.constant 0 : i32
    %c0_i32_0 = arith.constant 0 : i32
    %c0_i32_1 = arith.constant 0 : i32
    return %c0_i32, %c0_i32_0 : i32, i32
  }
  func.func @transform_11(%arg0: i32) -> (i32, i32) {
    %c0_i32 = arith.constant 0 : i32
    %c0_i32_0 = arith.constant 0 : i32
    %c0_i32_1 = arith.constant 0 : i32
    return %c0_i32, %c0_i32_0 : i32, i32
  }
  func.func @transform_12(%arg0: i32) -> (i32, i32) {
    %c0_i32 = arith.constant 0 : i32
    %c0_i32_0 = arith.constant 0 : i32
    %c0_i32_1 = arith.constant 0 : i32
    return %c0_i32, %c0_i32_0 : i32, i32
  }
  func.func @transform_13(%arg0: i32) -> (i32, i32) {
    %c0_i32 = arith.constant 0 : i32
    %c0_i32_0 = arith.constant 0 : i32
    %c0_i32_1 = arith.constant 0 : i32
    return %c0_i32, %c0_i32_0 : i32, i32
  }
  func.func @transform_14(%arg0: i32) -> (i32, i32) {
    %c0_i32 = arith.constant 0 : i32
    %c0_i32_0 = arith.constant 0 : i32
    %c0_i32_1 = arith.constant 0 : i32
    return %c0_i32, %c0_i32_0 : i32, i32
  }
  func.func @transform_15(%arg0: i32) -> (i32, i32) {
    %c0_i32 = arith.constant 0 : i32
    %c0_i32_0 = arith.constant 0 : i32
    %c0_i32_1 = arith.constant 0 : i32
    return %c0_i32, %c0_i32_0 : i32, i32
  }
  func.func @transform_16(%arg0: i32) -> (i32, i32) {
    %c0_i32 = arith.constant 0 : i32
    %c0_i32_0 = arith.constant 0 : i32
    %c0_i32_1 = arith.constant 0 : i32
    return %c0_i32, %c0_i32_0 : i32, i32
  }
  func.func @transform_17(%arg0: i32) -> (i32, i32) {
    %c0_i32 = arith.constant 0 : i32
    %c0_i32_0 = arith.constant 0 : i32
    %c0_i32_1 = arith.constant 0 : i32
    return %c0_i32, %c0_i32_0 : i32, i32
  }
  func.func @transform_18(%arg0: i32) -> (i32, i32) {
    %c0_i32 = arith.constant 0 : i32
    %c0_i32_0 = arith.constant 0 : i32
    %c0_i32_1 = arith.constant 0 : i32
    return %c0_i32, %c0_i32_0 : i32, i32
  }
  func.func @transform_19(%arg0: i32) -> (i32, i32) {
    %c0_i32 = arith.constant 0 : i32
    %c0_i32_0 = arith.constant 0 : i32
    %c0_i32_1 = arith.constant 0 : i32
    return %c0_i32, %c0_i32_0 : i32, i32
  }
  func.func @transform_20(%arg0: i32) -> (i32, i32) {
    %c0_i32 = arith.constant 0 : i32
    %c0_i32_0 = arith.constant 0 : i32
    %c0_i32_1 = arith.constant 0 : i32
    return %c0_i32, %c0_i32_0 : i32, i32
  }
  func.func @transform_21(%arg0: i32) -> (i32, i32) {
    %c0_i32 = arith.constant 0 : i32
    %c0_i32_0 = arith.constant 0 : i32
    %c0_i32_1 = arith.constant 0 : i32
    return %c0_i32, %c0_i32_0 : i32, i32
  }
  func.func @transform_22(%arg0: i32) -> (i32, i32) {
    %c0_i32 = arith.constant 0 : i32
    %c0_i32_0 = arith.constant 0 : i32
    %c0_i32_1 = arith.constant 0 : i32
    return %c0_i32, %c0_i32_0 : i32, i32
  }
  func.func @transform_23(%arg0: i32) -> (i32, i32) {
    %c0_i32 = arith.constant 0 : i32
    %c0_i32_0 = arith.constant 0 : i32
    %c0_i32_1 = arith.constant 0 : i32
    return %c0_i32, %c0_i32_0 : i32, i32
  }
  func.func @transform_24(%arg0: i32) -> (i32, i32) {
    %c0_i32 = arith.constant 0 : i32
    %c0_i32_0 = arith.constant 0 : i32
    %c0_i32_1 = arith.constant 0 : i32
    return %c0_i32, %c0_i32_0 : i32, i32
  }
  func.func @transform_25(%arg0: i32) -> (i32, i32) {
    %c0_i32 = arith.constant 0 : i32
    %c0_i32_0 = arith.constant 0 : i32
    %c0_i32_1 = arith.constant 0 : i32
    return %c0_i32, %c0_i32_0 : i32, i32
  }
  func.func @transform_26(%arg0: i32) -> (i32, i32) {
    %c0_i32 = arith.constant 0 : i32
    %c0_i32_0 = arith.constant 0 : i32
    %c0_i32_1 = arith.constant 0 : i32
    return %c0_i32, %c0_i32_0 : i32, i32
  }
  func.func @transform_27(%arg0: i32) -> (i32, i32) {
    %c0_i32 = arith.constant 0 : i32
    %c0_i32_0 = arith.constant 0 : i32
    %c0_i32_1 = arith.constant 0 : i32
    return %c0_i32, %c0_i32_0 : i32, i32
  }
  func.func @transform_28(%arg0: i32) -> (i32, i32, i32) {
    %c0_i32 = arith.constant 0 : i32
    %c0_i32_0 = arith.constant 0 : i32
    %c0_i32_1 = arith.constant 0 : i32
    return %arg0, %c0_i32, %c0_i32_0 : i32, i32, i32
  }
}

</mosaic_0001>

<llo_original>
// kernel: block_forward.1
$region0: #{block_forward.1}
  #allocation0 [shape = 'u32[]', space=smem, size = 0x4, offset = 0x4, fixed_abs, tag = 'smem constant byte address 0x4 - core index']
  #allocation1 [shape = 'u32[144,128]{1,0:T(1,128)}', space=vmem, size = 0x12000, scoped, tag = 'internal scratch']
  #allocation2 [shape = 'f32[8,64]{1,0:T(8,128)}', space=vmem, size = 0x1000, scoped, tag = 'scratch operand']
  #allocation3 [shape = 'f32[8,64]{1,0:T(8,128)}', space=vmem, size = 0x1000, scoped, tag = 'scratch operand']
  #allocation4 [shape = 'f32[8,64]{1,0:T(8,128)}', space=vmem, size = 0x1000, scoped, tag = 'scratch operand']
  #allocation5 [shape = 'f32[8,64]{1,0:T(8,128)}', space=vmem, size = 0x1000, scoped, tag = 'scratch operand']
  %s0 = inlined_call_operand.vmem [shape: f32[2,8,32], index: 0, kind: input, shape index: {}]
  %s1 = inlined_call_operand.vmem [shape: f32[2,8,32], index: 1, kind: input, shape index: {}]
  %s2 = inlined_call_operand.vmem [shape: f32[8,32], index: 2, kind: input, shape index: {}]
  %s3 = inlined_call_operand.vmem [shape: f32[1,32], index: 3, kind: input, shape index: {}]
  %s4 = inlined_call_operand.vmem [shape: f32[1,32], index: 4, kind: input, shape index: {}]
  %s5 = inlined_call_operand.vmem [shape: f32[1,32], index: 5, kind: input, shape index: {}]
  %s6 = inlined_call_operand.vmem [shape: f32[1,32], index: 6, kind: input, shape index: {}]
  %s7 = inlined_call_operand.vmem [shape: f32[1,32], index: 7, kind: input, shape index: {}]
  %s8 = inlined_call_operand.vmem [shape: f32[1,32], index: 8, kind: input, shape index: {}]
  %s9 = inlined_call_operand.vmem [shape: f32[1,32], index: 9, kind: input, shape index: {}]
  %s10 = inlined_call_operand.vmem [shape: f32[1,32], index: 10, kind: input, shape index: {}]
  %s11 = inlined_call_operand.vmem [shape: f32[1,32], index: 11, kind: input, shape index: {}]
  %s12 = inlined_call_operand.vmem [shape: f32[1,32], index: 12, kind: input, shape index: {}]
  %s13 = inlined_call_operand.vmem [shape: f32[1,32], index: 13, kind: input, shape index: {}]
  %s14 = inlined_call_operand.vmem [shape: f32[1,64], index: 14, kind: input, shape index: {}]
  %s15 = inlined_call_operand.vmem [shape: f32[1,64], index: 15, kind: input, shape index: {}]
  %s16 = inlined_call_operand.vmem [shape: bf16[32,32], index: 16, kind: input, shape index: {}]
  %s17 = inlined_call_operand.vmem [shape: bf16[32,32], index: 17, kind: input, shape index: {}]
  %s18 = inlined_call_operand.vmem [shape: bf16[32,32], index: 18, kind: input, shape index: {}]
  %s19 = inlined_call_operand.vmem [shape: bf16[32,32], index: 19, kind: input, shape index: {}]
  %s20 = inlined_call_operand.vmem [shape: f32[1,32], index: 20, kind: input, shape index: {}]
  %s21 = inlined_call_operand.vmem [shape: f32[1,32], index: 21, kind: input, shape index: {}]
  %s22 = inlined_call_operand.vmem [shape: bf16[32,128], index: 22, kind: input, shape index: {}]
  %s23 = inlined_call_operand.vmem [shape: bf16[128,32], index: 23, kind: input, shape index: {}]
  %s24 = inlined_call_operand.vmem [shape: bf16[32,32], index: 24, kind: input, shape index: {}]
  %s25 = inlined_call_operand.vmem [shape: bf16[32,128], index: 25, kind: input, shape index: {}]
  %s26 = inlined_call_operand.vmem [shape: bf16[32,128], index: 26, kind: input, shape index: {}]
  %s27 = inlined_call_operand.vmem [shape: bf16[32,32], index: 27, kind: input, shape index: {}]
  %s28 = inlined_call_operand.hbm [shape: f32[2,8,32], index: 28, kind: output, shape index: {}]
  %s29 = sld [smem:[#allocation0]]
  $region122: #{block_forward.1} parent=0
    _
  %s31 = ssub.s32 1, %s29
  %s32 = scalar_select 0, %s31, %s29
  $region1: #{block_forward.1} parent=0
    #allocation6 [shape = 'u8[8192]{0}', space=vmem, size = 0x2000, scoped, tag = 'output window, operand 0, single buffered']
    #allocation7 [shape = 's32[1]{0}', space=sflag, size = 0x4, scoped, tag = 'scoped memory for block_forward.1']
    %33 = vsyncpa [#allocation7], 0
    // Predicated region
    $region2: #{block_forward.1} parent=1 // pred_check
      _
    $region3: #{block_forward.1} parent=1 // pred_check_branch
      %35 = sbr.rel (0) target = $region5
    $region4: #{block_forward.1} parent=1 // pred_region
      _
    $region5: #{block_forward.1} parent=1 // pred_fallthru
      _
    // Predicated region
    $region6: #{block_forward.1} parent=1 // pred_check
      _
    $region7: #{block_forward.1} parent=1 // pred_check_branch
      %37 = sbr.rel (0) target = $region9
    $region8: #{block_forward.1} parent=1 // pred_region
      _
    $region9: #{block_forward.1} parent=1 // pred_fallthru
      _
    // Predicated region
    $region10: #{block_forward.1} parent=1 // pred_check
      _
    $region11: #{block_forward.1} parent=1 // pred_check_branch
      %39 = sbr.rel (0) target = $region13
    $region12: #{block_forward.1} parent=1 // pred_region
      _
    $region13: #{block_forward.1} parent=1 // pred_fallthru
      _
    // Predicated region
    $region14: #{block_forward.1} parent=1 // pred_check
      _
    $region15: #{block_forward.1} parent=1 // pred_check_branch
      %41 = sbr.rel (0) target = $region17
    $region16: #{block_forward.1} parent=1 // pred_region
      _
    $region17: #{block_forward.1} parent=1 // pred_fallthru
      _
    // Predicated region
    $region18: #{block_forward.1} parent=1 // pred_check
      _
    $region19: #{block_forward.1} parent=1 // pred_check_branch
      %43 = sbr.rel (0) target = $region21
    $region20: #{block_forward.1} parent=1 // pred_region
      _
    $region21: #{block_forward.1} parent=1 // pred_fallthru
      _
    // Predicated region
    $region22: #{block_forward.1} parent=1 // pred_check
      _
    $region23: #{block_forward.1} parent=1 // pred_check_branch
      %45 = sbr.rel (0) target = $region25
    $region24: #{block_forward.1} parent=1 // pred_region
      _
    $region25: #{block_forward.1} parent=1 // pred_fallthru
      _
    // Predicated region
    $region26: #{block_forward.1} parent=1 // pred_check
      _
    $region27: #{block_forward.1} parent=1 // pred_check_branch
      %47 = sbr.rel (0) target = $region29
    $region28: #{block_forward.1} parent=1 // pred_region
      _
    $region29: #{block_forward.1} parent=1 // pred_fallthru
      _
    // Predicated region
    $region30: #{block_forward.1} parent=1 // pred_check
      _
    $region31: #{block_forward.1} parent=1 // pred_check_branch
      %49 = sbr.rel (0) target = $region33
    $region32: #{block_forward.1} parent=1 // pred_region
      _
    $region33: #{block_forward.1} parent=1 // pred_fallthru
      _
    // Predicated region
    $region34: #{block_forward.1} parent=1 // pred_check
      _
    $region35: #{block_forward.1} parent=1 // pred_check_branch
      %51 = sbr.rel (0) target = $region37
    $region36: #{block_forward.1} parent=1 // pred_region
      _
    $region37: #{block_forward.1} parent=1 // pred_fallthru
      _
    // Predicated region
    $region38: #{block_forward.1} parent=1 // pred_check
      _
    $region39: #{block_forward.1} parent=1 // pred_check_branch
      %53 = sbr.rel (0) target = $region41
    $region40: #{block_forward.1} parent=1 // pred_region
      _
    $region41: #{block_forward.1} parent=1 // pred_fallthru
      _
    // Predicated region
    $region42: #{block_forward.1} parent=1 // pred_check
      _
    $region43: #{block_forward.1} parent=1 // pred_check_branch
      %55 = sbr.rel (0) target = $region45
    $region44: #{block_forward.1} parent=1 // pred_region
      _
    $region45: #{block_forward.1} parent=1 // pred_fallthru
      _
    // Predicated region
    $region46: #{block_forward.1} parent=1 // pred_check
      _
    $region47: #{block_forward.1} parent=1 // pred_check_branch
      %57 = sbr.rel (0) target = $region49
    $region48: #{block_forward.1} parent=1 // pred_region
      _
    $region49: #{block_forward.1} parent=1 // pred_fallthru
      _
    // Predicated region
    $region50: #{block_forward.1} parent=1 // pred_check
      _
    $region51: #{block_forward.1} parent=1 // pred_check_branch
      %59 = sbr.rel (0) target = $region53
    $region52: #{block_forward.1} parent=1 // pred_region
      _
    $region53: #{block_forward.1} parent=1 // pred_fallthru
      _
    // Predicated region
    $region54: #{block_forward.1} parent=1 // pred_check
      _
    $region55: #{block_forward.1} parent=1 // pred_check_branch
      %61 = sbr.rel (0) target = $region57
    $region56: #{block_forward.1} parent=1 // pred_region
      _
    $region57: #{block_forward.1} parent=1 // pred_fallthru
      _
    // Predicated region
    $region58: #{block_forward.1} parent=1 // pred_check
      _
    $region59: #{block_forward.1} parent=1 // pred_check_branch
      %63 = sbr.rel (0) target = $region61
    $region60: #{block_forward.1} parent=1 // pred_region
      _
    $region61: #{block_forward.1} parent=1 // pred_fallthru
      _
    // Predicated region
    $region62: #{block_forward.1} parent=1 // pred_check
      _
    $region63: #{block_forward.1} parent=1 // pred_check_branch
      %65 = sbr.rel (0) target = $region65
    $region64: #{block_forward.1} parent=1 // pred_region
      _
    $region65: #{block_forward.1} parent=1 // pred_fallthru
      _
    // Predicated region
    $region66: #{block_forward.1} parent=1 // pred_check
      _
    $region67: #{block_forward.1} parent=1 // pred_check_branch
      %67 = sbr.rel (0) target = $region69
    $region68: #{block_forward.1} parent=1 // pred_region
      _
    $region69: #{block_forward.1} parent=1 // pred_fallthru
      _
    // Predicated region
    $region70: #{block_forward.1} parent=1 // pred_check
      _
    $region71: #{block_forward.1} parent=1 // pred_check_branch
      %69 = sbr.rel (0) target = $region73
    $region72: #{block_forward.1} parent=1 // pred_region
      _
    $region73: #{block_forward.1} parent=1 // pred_fallthru
      _
    // Predicated region
    $region74: #{block_forward.1} parent=1 // pred_check
      _
    $region75: #{block_forward.1} parent=1 // pred_check_branch
      %71 = sbr.rel (0) target = $region77
    $region76: #{block_forward.1} parent=1 // pred_region
      _
    $region77: #{block_forward.1} parent=1 // pred_fallthru
      _
    // Predicated region
    $region78: #{block_forward.1} parent=1 // pred_check
      _
    $region79: #{block_forward.1} parent=1 // pred_check_branch
      %73 = sbr.rel (0) target = $region81
    $region80: #{block_forward.1} parent=1 // pred_region
      _
    $region81: #{block_forward.1} parent=1 // pred_fallthru
      _
    // Predicated region
    $region82: #{block_forward.1} parent=1 // pred_check
      _
    $region83: #{block_forward.1} parent=1 // pred_check_branch
      %75 = sbr.rel (0) target = $region85
    $region84: #{block_forward.1} parent=1 // pred_region
      _
    $region85: #{block_forward.1} parent=1 // pred_fallthru
      _
    // Predicated region
    $region86: #{block_forward.1} parent=1 // pred_check
      _
    $region87: #{block_forward.1} parent=1 // pred_check_branch
      %77 = sbr.rel (0) target = $region89
    $region88: #{block_forward.1} parent=1 // pred_region
      _
    $region89: #{block_forward.1} parent=1 // pred_fallthru
      _
    // Predicated region
    $region90: #{block_forward.1} parent=1 // pred_check
      _
    $region91: #{block_forward.1} parent=1 // pred_check_branch
      %79 = sbr.rel (0) target = $region93
    $region92: #{block_forward.1} parent=1 // pred_region
      _
    $region93: #{block_forward.1} parent=1 // pred_fallthru
      _
    // Predicated region
    $region94: #{block_forward.1} parent=1 // pred_check
      _
    $region95: #{block_forward.1} parent=1 // pred_check_branch
      %81 = sbr.rel (0) target = $region97
    $region96: #{block_forward.1} parent=1 // pred_region
      _
    $region97: #{block_forward.1} parent=1 // pred_fallthru
      _
    // Predicated region
    $region98: #{block_forward.1} parent=1 // pred_check
      _
    $region99: #{block_forward.1} parent=1 // pred_check_branch
      %83 = sbr.rel (0) target = $region101
    $region100: #{block_forward.1} parent=1 // pred_region
      _
    $region101: #{block_forward.1} parent=1 // pred_fallthru
      _
    // Predicated region
    $region102: #{block_forward.1} parent=1 // pred_check
      _
    $region103: #{block_forward.1} parent=1 // pred_check_branch
      %85 = sbr.rel (0) target = $region105
    $region104: #{block_forward.1} parent=1 // pred_region
      _
    $region105: #{block_forward.1} parent=1 // pred_fallthru
      _
    // Predicated region
    $region106: #{block_forward.1} parent=1 // pred_check
      _
    $region107: #{block_forward.1} parent=1 // pred_check_branch
      %87 = sbr.rel (0) target = $region109
    $region108: #{block_forward.1} parent=1 // pred_region
      _
    $region109: #{block_forward.1} parent=1 // pred_fallthru
      _
    // Predicated region
    $region110: #{block_forward.1} parent=1 // pred_check
      _
    $region111: #{block_forward.1} parent=1 // pred_check_branch
      %89 = sbr.rel (0) target = $region113
    $region112: #{block_forward.1} parent=1 // pred_region
      _
    $region113: #{block_forward.1} parent=1 // pred_fallthru
      _
    %v91 = vld [vmem:[%s0] sm:$0xff]
    %v92 = vld [vmem:[%s3] sm:$0x1]
    %v93 = vld [vmem:[%s4] sm:$0x1]
    %vm94 = vcmask 261120
    %v95 = vsel %vm94, %v91, 0.0
    %96 = vadd.xlane.f32.xlu0 %v95
    %v97 = vpop.xlane.xlu0 %96
    %v98 = vrcp.pop 32.0
    %v99 = vmul.f32 %v97, %v98
    %v100 = vsub.f32 %v91, %v99
    %v101 = vmul.f32 %v100, %v100
    %v102 = vsel %vm94, %v101, 0.0
    %103 = vadd.xlane.f32.xlu0 %v102
    %v104 = vpop.xlane.xlu0 %103
    %v105 = vmul.f32 %v104, %v98
    %v106 = vadd.f32 %v105, 1e-05
    %v107 = vrsqrt.pop %v106
    %v108 = vmul.f32 %v100, %v107
    %v110 = vlaneseq
    %v111 = vshrl.u32 %v110, 7
    %v112 = vsub.s32 0, %v111
    %v113 = vrot.slane %v92, %v112
    %v115 = vmul.f32 %v108, %v113
    %v117 = vlaneseq
    %v118 = vshrl.u32 %v117, 7
    %v119 = vsub.s32 0, %v118
    %v120 = vrot.slane %v93, %v119
    %v122 = vadd.f32 %v115, %v120
    %v123 = vld [vmem:[%s2] sm:$0xff]
    %v124 = vadd.f32 %v122, %v123
    %v125 = vld [vmem:[%s5] sm:$0x1]
    %v126 = vld [vmem:[%s6] sm:$0x1]
    %v127 = vsel %vm94, %v124, 0.0
    %128 = vadd.xlane.f32.xlu0 %v127
    %v129 = vpop.xlane.xlu0 %128
    %v130 = vmul.f32 %v129, %v98
    %v131 = vsub.f32 %v124, %v130
    %v132 = vmul.f32 %v131, %v131
    %v133 = vsel %vm94, %v132, 0.0
    %134 = vadd.xlane.f32.xlu0 %v133
    %v135 = vpop.xlane.xlu0 %134
    %v136 = vmul.f32 %v135, %v98
    %v137 = vadd.f32 %v136, 1e-05
    %v138 = vrsqrt.pop %v137
    %v139 = vmul.f32 %v131, %v138
    %v141 = vlaneseq
    %v142 = vshrl.u32 %v141, 7
    %v143 = vsub.s32 0, %v142
    %v144 = vrot.slane %v125, %v143
    %v146 = vmul.f32 %v139, %v144
    %v148 = vlaneseq
    %v149 = vshrl.u32 %v148, 7
    %v150 = vsub.s32 0, %v149
    %v151 = vrot.slane %v126, %v150
    %v153 = vadd.f32 %v146, %v151
    %v154 = vrot.slane %v153, 7
    %v155 = vlaneseq
    %v156 = vshrl.u32 %v155, 7
    %vm157 = vcmp.eq.s32.totalorder %v156, 0
    %v158 = vsel %vm157, 0.0, %v154
    %v159 = vld [vmem:[%s11] sm:$0x1]
    %v160 = vld [vmem:[%s12] sm:$0x1]
    %v161 = vld [vmem:[%s13] sm:$0x1]
    %v163 = vlaneseq
    %v164 = vshrl.u32 %v163, 7
    %v165 = vsub.s32 0, %v164
    %v166 = vrot.slane %v159, %v165
    %v168 = vmul.f32 %v153, %v166
    %v169 = vsub.f32 1.0, %v159
    %v171 = vlaneseq
    %v172 = vshrl.u32 %v171, 7
    %v173 = vsub.s32 0, %v172
    %v174 = vrot.slane %v169, %v173
    %v176 = vmul.f32 %v158, %v174
    %v177 = vadd.f32 %v168, %v176
    %v179 = vlaneseq
    %v180 = vshrl.u32 %v179, 7
    %v181 = vsub.s32 0, %v180
    %v182 = vrot.slane %v160, %v181
    %v184 = vmul.f32 %v153, %v182
    %v185 = vsub.f32 1.0, %v160
    %v187 = vlaneseq
    %v188 = vshrl.u32 %v187, 7
    %v189 = vsub.s32 0, %v188
    %v190 = vrot.slane %v185, %v189
    %v192 = vmul.f32 %v158, %v190
    %v193 = vadd.f32 %v184, %v192
    %v195 = vlaneseq
    %v196 = vshrl.u32 %v195, 7
    %v197 = vsub.s32 0, %v196
    %v198 = vrot.slane %v161, %v197
    %v200 = vmul.f32 %v153, %v198
    %v201 = vsub.f32 1.0, %v161
    %v203 = vlaneseq
    %v204 = vshrl.u32 %v203, 7
    %v205 = vsub.s32 0, %v204
    %v206 = vrot.slane %v201, %v205
    %v208 = vmul.f32 %v158, %v206
    %v209 = vadd.f32 %v200, %v208
    %v210 = vpack.c.bf16 %v177, %v177
    %v211 = vld [vmem:[%s16] sm:$0xf]
    %v212 = vld [vmem:[%s16 + $0x4] sm:$0xf]
    %v213 = vld [vmem:[%s16 + $0x8] sm:$0xf]
    %v214 = vld [vmem:[%s16 + $0xc] sm:$0xf]
    %v219 = vunpack.c.l.b16 %v211
    %v220 = vunpack.c.l.b16 %v212
    %v221 = vunpack.c.l.b16 %v213
    %v222 = vunpack.c.l.b16 %v214
    %v223 = vpack.c.b16 %v220, %v219
    %v224 = vpack.c.b16 %v222, %v221
    %v228 = vsel %vm94, %v210, 0
    %230 = vmatprep.subr.bf16.mxu0 0
    %231 = vmatpush1.bf16.msra.mxu0 %v223
    %232 = vmatprep.subr.bf16.mxu0 0
    %233 = vmatpush1.bf16.msra.mxu0 %v224
    %234 = vmatprep.subr.bf16.mxu0 0
    %235 = vmatpush1.bf16.msra.mxu0 0
    %236 = vmatprep.subr.bf16.mxu0 0
    %237 = vmatpush1.bf16.msra.mxu0 0
    %238 = vmatprep.subr.bf16.mxu0 0
    %239 = vmatpush1.bf16.msra.mxu0 0
    %240 = vmatprep.subr.bf16.mxu0 0
    %241 = vmatpush1.bf16.msra.mxu0 0
    %242 = vmatprep.subr.bf16.mxu0 0
    %243 = vmatpush1.bf16.msra.mxu0 0
    %244 = vmatprep.subr.bf16.mxu0 0
    %245 = vmatpush1.bf16.msra.mxu0 0
    %246 = vmatprep.subr.bf16.mxu0 0
    %247 = vmatpush1.bf16.msra.mxu0 0
    %248 = vmatprep.subr.bf16.mxu0 0
    %249 = vmatpush1.bf16.msra.mxu0 0
    %250 = vmatprep.subr.bf16.mxu0 0
    %251 = vmatpush1.bf16.msra.mxu0 0
    %252 = vmatprep.subr.bf16.mxu0 0
    %253 = vmatpush1.bf16.msra.mxu0 0
    %254 = vmatprep.subr.bf16.mxu0 0
    %255 = vmatpush1.bf16.msra.mxu0 0
    %256 = vmatprep.subr.bf16.mxu0 0
    %257 = vmatpush1.bf16.msra.mxu0 0
    %258 = vmatprep.subr.bf16.mxu0 0
    %259 = vmatpush1.bf16.msra.mxu0 0
    %260 = vmatprep.subr.bf16.mxu0 0
    %261 = vmatpush1.bf16.msra.mxu0 0
    %262 = vmatprep.mubr.bf16.mxu0 0
    %263 = vmatmul.mubr.bf16.gmra.mrb[0].mxu0 %v228
    %v264 = vpop.f32.mrb[0].mxu0
    %v265 = vadd.f32 0.0, %v264
    %v266 = vpop.f32.mrb[0].mxu0
    %v267 = vpop.f32.mrb[0].mxu0
    %v268 = vpop.f32.mrb[0].mxu0
    %269 = vdwg.mxu0
    %270 = vst.msk [vmem:[#allocation2] sm:$0xff] %vm94, %v265
    %v271 = vpack.c.bf16 %v193, %v193
    %v272 = vld [vmem:[%s17] sm:$0xf]
    %v273 = vld [vmem:[%s17 + $0x4] sm:$0xf]
    %v274 = vld [vmem:[%s17 + $0x8] sm:$0xf]
    %v275 = vld [vmem:[%s17 + $0xc] sm:$0xf]
    %v280 = vunpack.c.l.b16 %v272
    %v281 = vunpack.c.l.b16 %v273
    %v282 = vunpack.c.l.b16 %v274
    %v283 = vunpack.c.l.b16 %v275
    %v284 = vpack.c.b16 %v281, %v280
    %v285 = vpack.c.b16 %v283, %v282
    %v289 = vsel %vm94, %v271, 0
    %291 = vmatprep.subr.bf16.mxu0 0
    %292 = vmatpush1.bf16.msra.mxu0 %v284
    %293 = vmatprep.subr.bf16.mxu0 0
    %294 = vmatpush1.bf16.msra.mxu0 %v285
    %295 = vmatprep.subr.bf16.mxu0 0
    %296 = vmatpush1.bf16.msra.mxu0 0
    %297 = vmatprep.subr.bf16.mxu0 0
    %298 = vmatpush1.bf16.msra.mxu0 0
    %299 = vmatprep.subr.bf16.mxu0 0
    %300 = vmatpush1.bf16.msra.mxu0 0
    %301 = vmatprep.subr.bf16.mxu0 0
    %302 = vmatpush1.bf16.msra.mxu0 0
    %303 = vmatprep.subr.bf16.mxu0 0
    %304 = vmatpush1.bf16.msra.mxu0 0
    %305 = vmatprep.subr.bf16.mxu0 0
    %306 = vmatpush1.bf16.msra.mxu0 0
    %307 = vmatprep.subr.bf16.mxu0 0
    %308 = vmatpush1.bf16.msra.mxu0 0
    %309 = vmatprep.subr.bf16.mxu0 0
    %310 = vmatpush1.bf16.msra.mxu0 0
    %311 = vmatprep.subr.bf16.mxu0 0
    %312 = vmatpush1.bf16.msra.mxu0 0
    %313 = vmatprep.subr.bf16.mxu0 0
    %314 = vmatpush1.bf16.msra.mxu0 0
    %315 = vmatprep.subr.bf16.mxu0 0
    %316 = vmatpush1.bf16.msra.mxu0 0
    %317 = vmatprep.subr.bf16.mxu0 0
    %318 = vmatpush1.bf16.msra.mxu0 0
    %319 = vmatprep.subr.bf16.mxu0 0
    %320 = vmatpush1.bf16.msra.mxu0 0
    %321 = vmatprep.subr.bf16.mxu0 0
    %322 = vmatpush1.bf16.msra.mxu0 0
    %323 = vmatprep.mubr.bf16.mxu0 0
    %324 = vmatmul.mubr.bf16.gmra.mrb[0].mxu0 %v289
    %v325 = vpop.f32.mrb[0].mxu0
    %v326 = vadd.f32 0.0, %v325
    %v327 = vpop.f32.mrb[0].mxu0
    %v328 = vpop.f32.mrb[0].mxu0
    %v329 = vpop.f32.mrb[0].mxu0
    %330 = vdwg.mxu0
    %331 = vst.msk [vmem:[#allocation3] sm:$0xff] %vm94, %v326
    %v332 = vpack.c.bf16 %v209, %v209
    %v333 = vld [vmem:[%s18] sm:$0xf]
    %v334 = vld [vmem:[%s18 + $0x4] sm:$0xf]
    %v335 = vld [vmem:[%s18 + $0x8] sm:$0xf]
    %v336 = vld [vmem:[%s18 + $0xc] sm:$0xf]
    %v341 = vunpack.c.l.b16 %v333
    %v342 = vunpack.c.l.b16 %v334
    %v343 = vunpack.c.l.b16 %v335
    %v344 = vunpack.c.l.b16 %v336
    %v345 = vpack.c.b16 %v342, %v341
    %v346 = vpack.c.b16 %v344, %v343
    %v350 = vsel %vm94, %v332, 0
    %352 = vmatprep.subr.bf16.mxu0 0
    %353 = vmatpush1.bf16.msra.mxu0 %v345
    %354 = vmatprep.subr.bf16.mxu0 0
    %355 = vmatpush1.bf16.msra.mxu0 %v346
    %356 = vmatprep.subr.bf16.mxu0 0
    %357 = vmatpush1.bf16.msra.mxu0 0
    %358 = vmatprep.subr.bf16.mxu0 0
    %359 = vmatpush1.bf16.msra.mxu0 0
    %360 = vmatprep.subr.bf16.mxu0 0
    %361 = vmatpush1.bf16.msra.mxu0 0
    %362 = vmatprep.subr.bf16.mxu0 0
    %363 = vmatpush1.bf16.msra.mxu0 0
    %364 = vmatprep.subr.bf16.mxu0 0
    %365 = vmatpush1.bf16.msra.mxu0 0
    %366 = vmatprep.subr.bf16.mxu0 0
    %367 = vmatpush1.bf16.msra.mxu0 0
    %368 = vmatprep.subr.bf16.mxu0 0
    %369 = vmatpush1.bf16.msra.mxu0 0
    %370 = vmatprep.subr.bf16.mxu0 0
    %371 = vmatpush1.bf16.msra.mxu0 0
    %372 = vmatprep.subr.bf16.mxu0 0
    %373 = vmatpush1.bf16.msra.mxu0 0
    %374 = vmatprep.subr.bf16.mxu0 0
    %375 = vmatpush1.bf16.msra.mxu0 0
    %376 = vmatprep.subr.bf16.mxu0 0
    %377 = vmatpush1.bf16.msra.mxu0 0
    %378 = vmatprep.subr.bf16.mxu0 0
    %379 = vmatpush1.bf16.msra.mxu0 0
    %380 = vmatprep.subr.bf16.mxu0 0
    %381 = vmatpush1.bf16.msra.mxu0 0
    %382 = vmatprep.subr.bf16.mxu0 0
    %383 = vmatpush1.bf16.msra.mxu0 0
    %384 = vmatprep.mubr.bf16.mxu0 0
    %385 = vmatmul.mubr.bf16.gmra.mrb[0].mxu0 %v350
    %v386 = vpop.f32.mrb[0].mxu0
    %v387 = vadd.f32 0.0, %v386
    %v388 = vpop.f32.mrb[0].mxu0
    %v389 = vpop.f32.mrb[0].mxu0
    %v390 = vpop.f32.mrb[0].mxu0
    %391 = vdwg.mxu0
    %v392 = vxor.u32 %v387, 2147483648
    %v393 = vmul.f32 %v392, 1.442695
    %v394 = vpow.pop %v393
    %v395 = vadd.f32 %v394, 1.0
    %v396 = vrcp.pop %v395
    %v397 = vmul.f32 1.0, %v396
    %398 = vst.msk [vmem:[#allocation4] sm:$0xff] %vm94, %v397
    %s399 = scalar_lea.vmem %s0, 8
    %v400 = vld [vmem:[%s399] sm:$0xff]
    %v401 = vld [vmem:[%s3] sm:$0x1]
    %v402 = vld [vmem:[%s4] sm:$0x1]
    %v403 = vsel %vm94, %v400, 0.0
    %404 = vadd.xlane.f32.xlu0 %v403
    %v405 = vpop.xlane.xlu0 %404
    %v406 = vmul.f32 %v405, %v98
    %v407 = vsub.f32 %v400, %v406
    %v408 = vmul.f32 %v407, %v407
    %v409 = vsel %vm94, %v408, 0.0
    %410 = vadd.xlane.f32.xlu0 %v409
    %v411 = vpop.xlane.xlu0 %410
    %v412 = vmul.f32 %v411, %v98
    %v413 = vadd.f32 %v412, 1e-05
    %v414 = vrsqrt.pop %v413
    %v415 = vmul.f32 %v407, %v414
    %v417 = vlaneseq
    %v418 = vshrl.u32 %v417, 7
    %v419 = vsub.s32 0, %v418
    %v420 = vrot.slane %v401, %v419
    %v422 = vmul.f32 %v415, %v420
    %v424 = vlaneseq
    %v425 = vshrl.u32 %v424, 7
    %v426 = vsub.s32 0, %v425
    %v427 = vrot.slane %v402, %v426
    %v429 = vadd.f32 %v422, %v427
    %v430 = vld [vmem:[%s2] sm:$0xff]
    %v431 = vadd.f32 %v429, %v430
    %v432 = vld [vmem:[%s5] sm:$0x1]
    %v433 = vld [vmem:[%s6] sm:$0x1]
    %v434 = vsel %vm94, %v431, 0.0
    %435 = vadd.xlane.f32.xlu0 %v434
    %v436 = vpop.xlane.xlu0 %435
    %v437 = vmul.f32 %v436, %v98
    %v438 = vsub.f32 %v431, %v437
    %v439 = vmul.f32 %v438, %v438
    %v440 = vsel %vm94, %v439, 0.0
    %441 = vadd.xlane.f32.xlu0 %v440
    %v442 = vpop.xlane.xlu0 %441
    %v443 = vmul.f32 %v442, %v98
    %v444 = vadd.f32 %v443, 1e-05
    %v445 = vrsqrt.pop %v444
    %v446 = vmul.f32 %v438, %v445
    %v448 = vlaneseq
    %v449 = vshrl.u32 %v448, 7
    %v450 = vsub.s32 0, %v449
    %v451 = vrot.slane %v432, %v450
    %v453 = vmul.f32 %v446, %v451
    %v455 = vlaneseq
    %v456 = vshrl.u32 %v455, 7
    %v457 = vsub.s32 0, %v456
    %v458 = vrot.slane %v433, %v457
    %v460 = vadd.f32 %v453, %v458
    %v461 = vrot.slane %v460, 7
    %v462 = vsel %vm157, 0.0, %v461
    %v463 = vld [vmem:[%s11] sm:$0x1]
    %v464 = vld [vmem:[%s12] sm:$0x1]
    %v465 = vld [vmem:[%s13] sm:$0x1]
    %v467 = vlaneseq
    %v468 = vshrl.u32 %v467, 7
    %v469 = vsub.s32 0, %v468
    %v470 = vrot.slane %v463, %v469
    %v472 = vmul.f32 %v460, %v470
    %v473 = vsub.f32 1.0, %v463
    %v475 = vlaneseq
    %v476 = vshrl.u32 %v475, 7
    %v477 = vsub.s32 0, %v476
    %v478 = vrot.slane %v473, %v477
    %v480 = vmul.f32 %v462, %v478
    %v481 = vadd.f32 %v472, %v480
    %v483 = vlaneseq
    %v484 = vshrl.u32 %v483, 7
    %v485 = vsub.s32 0, %v484
    %v486 = vrot.slane %v464, %v485
    %v488 = vmul.f32 %v460, %v486
    %v489 = vsub.f32 1.0, %v464
    %v491 = vlaneseq
    %v492 = vshrl.u32 %v491, 7
    %v493 = vsub.s32 0, %v492
    %v494 = vrot.slane %v489, %v493
    %v496 = vmul.f32 %v462, %v494
    %v497 = vadd.f32 %v488, %v496
    %v499 = vlaneseq
    %v500 = vshrl.u32 %v499, 7
    %v501 = vsub.s32 0, %v500
    %v502 = vrot.slane %v465, %v501
    %v504 = vmul.f32 %v460, %v502
    %v505 = vsub.f32 1.0, %v465
    %v507 = vlaneseq
    %v508 = vshrl.u32 %v507, 7
    %v509 = vsub.s32 0, %v508
    %v510 = vrot.slane %v505, %v509
    %v512 = vmul.f32 %v462, %v510
    %v513 = vadd.f32 %v504, %v512
    %v514 = vpack.c.bf16 %v481, %v481
    %v515 = vld [vmem:[%s16] sm:$0xf]
    %v516 = vld [vmem:[%s16 + $0x4] sm:$0xf]
    %v517 = vld [vmem:[%s16 + $0x8] sm:$0xf]
    %v518 = vld [vmem:[%s16 + $0xc] sm:$0xf]
    %v523 = vunpack.c.l.b16 %v515
    %v524 = vunpack.c.l.b16 %v516
    %v525 = vunpack.c.l.b16 %v517
    %v526 = vunpack.c.l.b16 %v518
    %v527 = vpack.c.b16 %v524, %v523
    %v528 = vpack.c.b16 %v526, %v525
    %v532 = vsel %vm94, %v514, 0
    %534 = vmatprep.subr.bf16.mxu0 0
    %535 = vmatpush1.bf16.msra.mxu0 %v527
    %536 = vmatprep.subr.bf16.mxu0 0
    %537 = vmatpush1.bf16.msra.mxu0 %v528
    %538 = vmatprep.subr.bf16.mxu0 0
    %539 = vmatpush1.bf16.msra.mxu0 0
    %540 = vmatprep.subr.bf16.mxu0 0
    %541 = vmatpush1.bf16.msra.mxu0 0
    %542 = vmatprep.subr.bf16.mxu0 0
    %543 = vmatpush1.bf16.msra.mxu0 0
    %544 = vmatprep.subr.bf16.mxu0 0
    %545 = vmatpush1.bf16.msra.mxu0 0
    %546 = vmatprep.subr.bf16.mxu0 0
    %547 = vmatpush1.bf16.msra.mxu0 0
    %548 = vmatprep.subr.bf16.mxu0 0
    %549 = vmatpush1.bf16.msra.mxu0 0
    %550 = vmatprep.subr.bf16.mxu0 0
    %551 = vmatpush1.bf16.msra.mxu0 0
    %552 = vmatprep.subr.bf16.mxu0 0
    %553 = vmatpush1.bf16.msra.mxu0 0
    %554 = vmatprep.subr.bf16.mxu0 0
    %555 = vmatpush1.bf16.msra.mxu0 0
    %556 = vmatprep.subr.bf16.mxu0 0
    %557 = vmatpush1.bf16.msra.mxu0 0
    %558 = vmatprep.subr.bf16.mxu0 0
    %559 = vmatpush1.bf16.msra.mxu0 0
    %560 = vmatprep.subr.bf16.mxu0 0
    %561 = vmatpush1.bf16.msra.mxu0 0
    %562 = vmatprep.subr.bf16.mxu0 0
    %563 = vmatpush1.bf16.msra.mxu0 0
    %564 = vmatprep.subr.bf16.mxu0 0
    %565 = vmatpush1.bf16.msra.mxu0 0
    %566 = vmatprep.mubr.bf16.mxu0 0
    %567 = vmatmul.mubr.bf16.gmra.mrb[0].mxu0 %v532
    %v568 = vpop.f32.mrb[0].mxu0
    %v569 = vadd.f32 0.0, %v568
    %v570 = vpop.f32.mrb[0].mxu0
    %v571 = vpop.f32.mrb[0].mxu0
    %v572 = vpop.f32.mrb[0].mxu0
    %573 = vdwg.mxu0
    %575 = vrot.lane.b32.xlu0 %v569, 32
    %v576 = vpop.permute.xlu0 %575
    %vm578 = vcmask 523520
    %579 = vst.msk [vmem:[#allocation2] sm:$0xff] %vm578, %v576
    %v580 = vpack.c.bf16 %v497, %v497
    %v581 = vld [vmem:[%s17] sm:$0xf]
    %v582 = vld [vmem:[%s17 + $0x4] sm:$0xf]
    %v583 = vld [vmem:[%s17 + $0x8] sm:$0xf]
    %v584 = vld [vmem:[%s17 + $0xc] sm:$0xf]
    %v589 = vunpack.c.l.b16 %v581
    %v590 = vunpack.c.l.b16 %v582
    %v591 = vunpack.c.l.b16 %v583
    %v592 = vunpack.c.l.b16 %v584
    %v593 = vpack.c.b16 %v590, %v589
    %v594 = vpack.c.b16 %v592, %v591
    %v598 = vsel %vm94, %v580, 0
    %600 = vmatprep.subr.bf16.mxu0 0
    %601 = vmatpush1.bf16.msra.mxu0 %v593
    %602 = vmatprep.subr.bf16.mxu0 0
    %603 = vmatpush1.bf16.msra.mxu0 %v594
    %604 = vmatprep.subr.bf16.mxu0 0
    %605 = vmatpush1.bf16.msra.mxu0 0
    %606 = vmatprep.subr.bf16.mxu0 0
    %607 = vmatpush1.bf16.msra.mxu0 0
    %608 = vmatprep.subr.bf16.mxu0 0
    %609 = vmatpush1.bf16.msra.mxu0 0
    %610 = vmatprep.subr.bf16.mxu0 0
    %611 = vmatpush1.bf16.msra.mxu0 0
    %612 = vmatprep.subr.bf16.mxu0 0
    %613 = vmatpush1.bf16.msra.mxu0 0
    %614 = vmatprep.subr.bf16.mxu0 0
    %615 = vmatpush1.bf16.msra.mxu0 0
    %616 = vmatprep.subr.bf16.mxu0 0
    %617 = vmatpush1.bf16.msra.mxu0 0
    %618 = vmatprep.subr.bf16.mxu0 0
    %619 = vmatpush1.bf16.msra.mxu0 0
    %620 = vmatprep.subr.bf16.mxu0 0
    %621 = vmatpush1.bf16.msra.mxu0 0
    %622 = vmatprep.subr.bf16.mxu0 0
    %623 = vmatpush1.bf16.msra.mxu0 0
    %624 = vmatprep.subr.bf16.mxu0 0
    %625 = vmatpush1.bf16.msra.mxu0 0
    %626 = vmatprep.subr.bf16.mxu0 0
    %627 = vmatpush1.bf16.msra.mxu0 0
    %628 = vmatprep.subr.bf16.mxu0 0
    %629 = vmatpush1.bf16.msra.mxu0 0
    %630 = vmatprep.subr.bf16.mxu0 0
    %631 = vmatpush1.bf16.msra.mxu0 0
    %632 = vmatprep.mubr.bf16.mxu0 0
    %633 = vmatmul.mubr.bf16.gmra.mrb[0].mxu0 %v598
    %v634 = vpop.f32.mrb[0].mxu0
    %v635 = vadd.f32 0.0, %v634
    %v636 = vpop.f32.mrb[0].mxu0
    %v637 = vpop.f32.mrb[0].mxu0
    %v638 = vpop.f32.mrb[0].mxu0
    %639 = vdwg.mxu0
    %641 = vrot.lane.b32.xlu0 %v635, 32
    %v642 = vpop.permute.xlu0 %641
    %644 = vst.msk [vmem:[#allocation3] sm:$0xff] %vm578, %v642
    %v645 = vpack.c.bf16 %v513, %v513
    %v646 = vld [vmem:[%s18] sm:$0xf]
    %v647 = vld [vmem:[%s18 + $0x4] sm:$0xf]
    %v648 = vld [vmem:[%s18 + $0x8] sm:$0xf]
    %v649 = vld [vmem:[%s18 + $0xc] sm:$0xf]
    %v654 = vunpack.c.l.b16 %v646
    %v655 = vunpack.c.l.b16 %v647
    %v656 = vunpack.c.l.b16 %v648
    %v657 = vunpack.c.l.b16 %v649
    %v658 = vpack.c.b16 %v655, %v654
    %v659 = vpack.c.b16 %v657, %v656
    %v663 = vsel %vm94, %v645, 0
    %665 = vmatprep.subr.bf16.mxu0 0
    %666 = vmatpush1.bf16.msra.mxu0 %v658
    %667 = vmatprep.subr.bf16.mxu0 0
    %668 = vmatpush1.bf16.msra.mxu0 %v659
    %669 = vmatprep.subr.bf16.mxu0 0
    %670 = vmatpush1.bf16.msra.mxu0 0
    %671 = vmatprep.subr.bf16.mxu0 0
    %672 = vmatpush1.bf16.msra.mxu0 0
    %673 = vmatprep.subr.bf16.mxu0 0
    %674 = vmatpush1.bf16.msra.mxu0 0
    %675 = vmatprep.subr.bf16.mxu0 0
    %676 = vmatpush1.bf16.msra.mxu0 0
    %677 = vmatprep.subr.bf16.mxu0 0
    %678 = vmatpush1.bf16.msra.mxu0 0
    %679 = vmatprep.subr.bf16.mxu0 0
    %680 = vmatpush1.bf16.msra.mxu0 0
    %681 = vmatprep.subr.bf16.mxu0 0
    %682 = vmatpush1.bf16.msra.mxu0 0
    %683 = vmatprep.subr.bf16.mxu0 0
    %684 = vmatpush1.bf16.msra.mxu0 0
    %685 = vmatprep.subr.bf16.mxu0 0
    %686 = vmatpush1.bf16.msra.mxu0 0
    %687 = vmatprep.subr.bf16.mxu0 0
    %688 = vmatpush1.bf16.msra.mxu0 0
    %689 = vmatprep.subr.bf16.mxu0 0
    %690 = vmatpush1.bf16.msra.mxu0 0
    %691 = vmatprep.subr.bf16.mxu0 0
    %692 = vmatpush1.bf16.msra.mxu0 0
    %693 = vmatprep.subr.bf16.mxu0 0
    %694 = vmatpush1.bf16.msra.mxu0 0
    %695 = vmatprep.subr.bf16.mxu0 0
    %696 = vmatpush1.bf16.msra.mxu0 0
    %697 = vmatprep.mubr.bf16.mxu0 0
    %698 = vmatmul.mubr.bf16.gmra.mrb[0].mxu0 %v663
    %v699 = vpop.f32.mrb[0].mxu0
    %v700 = vadd.f32 0.0, %v699
    %v701 = vpop.f32.mrb[0].mxu0
    %v702 = vpop.f32.mrb[0].mxu0
    %v703 = vpop.f32.mrb[0].mxu0
    %704 = vdwg.mxu0
    %v705 = vxor.u32 %v700, 2147483648
    %v706 = vmul.f32 %v705, 1.442695
    %v707 = vpow.pop %v706
    %v708 = vadd.f32 %v707, 1.0
    %v709 = vrcp.pop %v708
    %v710 = vmul.f32 1.0, %v709
    %712 = vrot.lane.b32.xlu0 %v710, 32
    %v713 = vpop.permute.xlu0 %712
    %715 = vst.msk [vmem:[#allocation4] sm:$0xff] %vm578, %v713
    %v716 = vld [vmem:[%s14] sm:$0x1]
    %v717 = vld [vmem:[%s15] sm:$0x1]
    %v718 = vld [vmem:[#allocation2] sm:$0x1]
    %v719 = vld [vmem:[#allocation3] sm:$0x1]
    %v720 = vadd.f32 %v717, %v718
    %v721 = vmax.f32 %v720, -1e+38
    %v722 = vsub.f32 -1e+38, %v721
    %v723 = vmul.f32 %v722, 1.442695
    %v724 = vpow.pop %v723
    %v725 = vsub.f32 %v720, %v721
    %v726 = vmul.f32 %v725, 1.442695
    %v727 = vpow.pop %v726
    %v728 = vmul.f32 %v724, 0.0
    %v729 = vmul.f32 %v727, %v719
    %v730 = vadd.f32 %v728, %v729
    %v731 = vadd.f32 %v728, %v727
    %v732 = vrcp.pop %v731
    %v733 = vmul.f32 %v731, %v732
    %v734 = vsub.f32 2.0, %v733
    %v735 = vmul.f32 %v732, %v734
    %v736 = vld [vmem:[#allocation4] sm:$0x1]
    %v737 = vmul.f32 %v736, %v730
    %v738 = vmul.f32 %v737, %v735
    %vm739 = vcmask 516096
    %740 = vst.msk [vmem:[#allocation5] sm:$0x1] %vm739, %v738
    %v741 = vadd.f32 %v716, -1e+38
    %v742 = vmax.f32 %v741, %v718
    %v743 = vsub.f32 %v741, %v742
    %v744 = vmul.f32 %v743, 1.442695
    %v745 = vpow.pop %v744
    %v746 = vsub.f32 %v718, %v742
    %v747 = vmul.f32 %v746, 1.442695
    %v748 = vpow.pop %v747
    %v749 = vmul.f32 %v745, 0.0
    %v750 = vmul.f32 %v748, %v719
    %v751 = vadd.f32 %v749, %v750
    %v752 = vadd.f32 %v749, %v748
    %v753 = vld [vmem:[#allocation2 + $0x1] sm:$0x1]
    %v754 = vld [vmem:[#allocation3 + $0x1] sm:$0x1]
    %v755 = vadd.f32 %v717, %v753
    %v756 = vmax.f32 %v742, %v755
    %v757 = vsub.f32 %v742, %v756
    %v758 = vmul.f32 %v757, 1.442695
    %v759 = vpow.pop %v758
    %v760 = vsub.f32 %v755, %v756
    %v761 = vmul.f32 %v760, 1.442695
    %v762 = vpow.pop %v761
    %v763 = vmul.f32 %v759, %v751
    %v764 = vmul.f32 %v762, %v754
    %v765 = vadd.f32 %v763, %v764
    %v766 = vmul.f32 %v759, %v752
    %v767 = vadd.f32 %v766, %v762
    %v768 = vrcp.pop %v767
    %v769 = vmul.f32 %v767, %v768
    %v770 = vsub.f32 2.0, %v769
    %v771 = vmul.f32 %v768, %v770
    %v772 = vld [vmem:[#allocation4 + $0x1] sm:$0x1]
    %v773 = vmul.f32 %v772, %v765
    %v774 = vmul.f32 %v773, %v771
    %775 = vst.msk [vmem:[#allocation5 + $0x1] sm:$0x1] %vm739, %v774
    %v776 = vadd.f32 %v716, %v742
    %v777 = vmax.f32 %v776, %v753
    %v778 = vsub.f32 %v776, %v777
    %v779 = vmul.f32 %v778, 1.442695
    %v780 = vpow.pop %v779
    %v781 = vsub.f32 %v753, %v777
    %v782 = vmul.f32 %v781, 1.442695
    %v783 = vpow.pop %v782
    %v784 = vmul.f32 %v780, %v751
    %v785 = vmul.f32 %v783, %v754
    %v786 = vadd.f32 %v784, %v785
    %v787 = vmul.f32 %v780, %v752
    %v788 = vadd.f32 %v787, %v783
    %v789 = vld [vmem:[#allocation2 + $0x2] sm:$0x1]
    %v790 = vld [vmem:[#allocation3 + $0x2] sm:$0x1]
    %v791 = vadd.f32 %v717, %v789
    %v792 = vmax.f32 %v777, %v791
    %v793 = vsub.f32 %v777, %v792
    %v794 = vmul.f32 %v793, 1.442695
    %v795 = vpow.pop %v794
    %v796 = vsub.f32 %v791, %v792
    %v797 = vmul.f32 %v796, 1.442695
    %v798 = vpow.pop %v797
    %v799 = vmul.f32 %v795, %v786
    %v800 = vmul.f32 %v798, %v790
    %v801 = vadd.f32 %v799, %v800
    %v802 = vmul.f32 %v795, %v788
    %v803 = vadd.f32 %v802, %v798
    %v804 = vrcp.pop %v803
    %v805 = vmul.f32 %v803, %v804
    %v806 = vsub.f32 2.0, %v805
    %v807 = vmul.f32 %v804, %v806
    %v808 = vld [vmem:[#allocation4 + $0x2] sm:$0x1]
    %v809 = vmul.f32 %v808, %v801
    %v810 = vmul.f32 %v809, %v807
    %811 = vst.msk [vmem:[#allocation5 + $0x2] sm:$0x1] %vm739, %v810
    %v812 = vadd.f32 %v716, %v777
    %v813 = vmax.f32 %v812, %v789
    %v814 = vsub.f32 %v812, %v813
    %v815 = vmul.f32 %v814, 1.442695
    %v816 = vpow.pop %v815
    %v817 = vsub.f32 %v789, %v813
    %v818 = vmul.f32 %v817, 1.442695
    %v819 = vpow.pop %v818
    %v820 = vmul.f32 %v816, %v786
    %v821 = vmul.f32 %v819, %v790
    %v822 = vadd.f32 %v820, %v821
    %v823 = vmul.f32 %v816, %v788
    %v824 = vadd.f32 %v823, %v819
    %v825 = vld [vmem:[#allocation2 + $0x3] sm:$0x1]
    %v826 = vld [vmem:[#allocation3 + $0x3] sm:$0x1]
    %v827 = vadd.f32 %v717, %v825
    %v828 = vmax.f32 %v813, %v827
    %v829 = vsub.f32 %v813, %v828
    %v830 = vmul.f32 %v829, 1.442695
    %v831 = vpow.pop %v830
    %v832 = vsub.f32 %v827, %v828
    %v833 = vmul.f32 %v832, 1.442695
    %v834 = vpow.pop %v833
    %v835 = vmul.f32 %v831, %v822
    %v836 = vmul.f32 %v834, %v826
    %v837 = vadd.f32 %v835, %v836
    %v838 = vmul.f32 %v831, %v824
    %v839 = vadd.f32 %v838, %v834
    %v840 = vrcp.pop %v839
    %v841 = vmul.f32 %v839, %v840
    %v842 = vsub.f32 2.0, %v841
    %v843 = vmul.f32 %v840, %v842
    %v844 = vld [vmem:[#allocation4 + $0x3] sm:$0x1]
    %v845 = vmul.f32 %v844, %v837
    %v846 = vmul.f32 %v845, %v843
    %847 = vst.msk [vmem:[#allocation5 + $0x3] sm:$0x1] %vm739, %v846
    %v848 = vadd.f32 %v716, %v813
    %v849 = vmax.f32 %v848, %v825
    %v850 = vsub.f32 %v848, %v849
    %v851 = vmul.f32 %v850, 1.442695
    %v852 = vpow.pop %v851
    %v853 = vsub.f32 %v825, %v849
    %v854 = vmul.f32 %v853, 1.442695
    %v855 = vpow.pop %v854
    %v856 = vmul.f32 %v852, %v822
    %v857 = vmul.f32 %v855, %v826
    %v858 = vadd.f32 %v856, %v857
    %v859 = vmul.f32 %v852, %v824
    %v860 = vadd.f32 %v859, %v855
    %v861 = vld [vmem:[#allocation2 + $0x4] sm:$0x1]
    %v862 = vld [vmem:[#allocation3 + $0x4] sm:$0x1]
    %v863 = vadd.f32 %v717, %v861
    %v864 = vmax.f32 %v849, %v863
    %v865 = vsub.f32 %v849, %v864
    %v866 = vmul.f32 %v865, 1.442695
    %v867 = vpow.pop %v866
    %v868 = vsub.f32 %v863, %v864
    %v869 = vmul.f32 %v868, 1.442695
    %v870 = vpow.pop %v869
    %v871 = vmul.f32 %v867, %v858
    %v872 = vmul.f32 %v870, %v862
    %v873 = vadd.f32 %v871, %v872
    %v874 = vmul.f32 %v867, %v860
    %v875 = vadd.f32 %v874, %v870
    %v876 = vrcp.pop %v875
    %v877 = vmul.f32 %v875, %v876
    %v878 = vsub.f32 2.0, %v877
    %v879 = vmul.f32 %v876, %v878
    %v880 = vld [vmem:[#allocation4 + $0x4] sm:$0x1]
    %v881 = vmul.f32 %v880, %v873
    %v882 = vmul.f32 %v881, %v879
    %883 = vst.msk [vmem:[#allocation5 + $0x4] sm:$0x1] %vm739, %v882
    %v884 = vadd.f32 %v716, %v849
    %v885 = vmax.f32 %v884, %v861
    %v886 = vsub.f32 %v884, %v885
    %v887 = vmul.f32 %v886, 1.442695
    %v888 = vpow.pop %v887
    %v889 = vsub.f32 %v861, %v885
    %v890 = vmul.f32 %v889, 1.442695
    %v891 = vpow.pop %v890
    %v892 = vmul.f32 %v888, %v858
    %v893 = vmul.f32 %v891, %v862
    %v894 = vadd.f32 %v892, %v893
    %v895 = vmul.f32 %v888, %v860
    %v896 = vadd.f32 %v895, %v891
    %v897 = vld [vmem:[#allocation2 + $0x5] sm:$0x1]
    %v898 = vld [vmem:[#allocation3 + $0x5] sm:$0x1]
    %v899 = vadd.f32 %v717, %v897
    %v900 = vmax.f32 %v885, %v899
    %v901 = vsub.f32 %v885, %v900
    %v902 = vmul.f32 %v901, 1.442695
    %v903 = vpow.pop %v902
    %v904 = vsub.f32 %v899, %v900
    %v905 = vmul.f32 %v904, 1.442695
    %v906 = vpow.pop %v905
    %v907 = vmul.f32 %v903, %v894
    %v908 = vmul.f32 %v906, %v898
    %v909 = vadd.f32 %v907, %v908
    %v910 = vmul.f32 %v903, %v896
    %v911 = vadd.f32 %v910, %v906
    %v912 = vrcp.pop %v911
    %v913 = vmul.f32 %v911, %v912
    %v914 = vsub.f32 2.0, %v913
    %v915 = vmul.f32 %v912, %v914
    %v916 = vld [vmem:[#allocation4 + $0x5] sm:$0x1]
    %v917 = vmul.f32 %v916, %v909
    %v918 = vmul.f32 %v917, %v915
    %919 = vst.msk [vmem:[#allocation5 + $0x5] sm:$0x1] %vm739, %v918
    %v920 = vadd.f32 %v716, %v885
    %v921 = vmax.f32 %v920, %v897
    %v922 = vsub.f32 %v920, %v921
    %v923 = vmul.f32 %v922, 1.442695
    %v924 = vpow.pop %v923
    %v925 = vsub.f32 %v897, %v921
    %v926 = vmul.f32 %v925, 1.442695
    %v927 = vpow.pop %v926
    %v928 = vmul.f32 %v924, %v894
    %v929 = vmul.f32 %v927, %v898
    %v930 = vadd.f32 %v928, %v929
    %v931 = vmul.f32 %v924, %v896
    %v932 = vadd.f32 %v931, %v927
    %v933 = vld [vmem:[#allocation2 + $0x6] sm:$0x1]
    %v934 = vld [vmem:[#allocation3 + $0x6] sm:$0x1]
    %v935 = vadd.f32 %v717, %v933
    %v936 = vmax.f32 %v921, %v935
    %v937 = vsub.f32 %v921, %v936
    %v938 = vmul.f32 %v937, 1.442695
    %v939 = vpow.pop %v938
    %v940 = vsub.f32 %v935, %v936
    %v941 = vmul.f32 %v940, 1.442695
    %v942 = vpow.pop %v941
    %v943 = vmul.f32 %v939, %v930
    %v944 = vmul.f32 %v942, %v934
    %v945 = vadd.f32 %v943, %v944
    %v946 = vmul.f32 %v939, %v932
    %v947 = vadd.f32 %v946, %v942
    %v948 = vrcp.pop %v947
    %v949 = vmul.f32 %v947, %v948
    %v950 = vsub.f32 2.0, %v949
    %v951 = vmul.f32 %v948, %v950
    %v952 = vld [vmem:[#allocation4 + $0x6] sm:$0x1]
    %v953 = vmul.f32 %v952, %v945
    %v954 = vmul.f32 %v953, %v951
    %955 = vst.msk [vmem:[#allocation5 + $0x6] sm:$0x1] %vm739, %v954
    %v956 = vadd.f32 %v716, %v921
    %v957 = vmax.f32 %v956, %v933
    %v958 = vsub.f32 %v956, %v957
    %v959 = vmul.f32 %v958, 1.442695
    %v960 = vpow.pop %v959
    %v961 = vsub.f32 %v933, %v957
    %v962 = vmul.f32 %v961, 1.442695
    %v963 = vpow.pop %v962
    %v964 = vmul.f32 %v960, %v930
    %v965 = vmul.f32 %v963, %v934
    %v966 = vadd.f32 %v964, %v965
    %v967 = vmul.f32 %v960, %v932
    %v968 = vadd.f32 %v967, %v963
    %v969 = vld [vmem:[#allocation2 + $0x7] sm:$0x1]
    %v970 = vld [vmem:[#allocation3 + $0x7] sm:$0x1]
    %v971 = vadd.f32 %v717, %v969
    %v972 = vmax.f32 %v957, %v971
    %v973 = vsub.f32 %v957, %v972
    %v974 = vmul.f32 %v973, 1.442695
    %v975 = vpow.pop %v974
    %v976 = vsub.f32 %v971, %v972
    %v977 = vmul.f32 %v976, 1.442695
    %v978 = vpow.pop %v977
    %v979 = vmul.f32 %v975, %v966
    %v980 = vmul.f32 %v978, %v970
    %v981 = vadd.f32 %v979, %v980
    %v982 = vmul.f32 %v975, %v968
    %v983 = vadd.f32 %v982, %v978
    %v984 = vrcp.pop %v983
    %v985 = vmul.f32 %v983, %v984
    %v986 = vsub.f32 2.0, %v985
    %v987 = vmul.f32 %v984, %v986
    %v988 = vld [vmem:[#allocation4 + $0x7] sm:$0x1]
    %v989 = vmul.f32 %v988, %v981
    %v990 = vmul.f32 %v989, %v987
    %991 = vst.msk [vmem:[#allocation5 + $0x7] sm:$0x1] %vm739, %v990
    %v992 = vld [vmem:[#allocation5] sm:$0xff]
    %v993 = vpack.c.bf16 %v992, %v992
    %v994 = vld [vmem:[%s19] sm:$0xf]
    %v995 = vld [vmem:[%s19 + $0x4] sm:$0xf]
    %v996 = vld [vmem:[%s19 + $0x8] sm:$0xf]
    %v997 = vld [vmem:[%s19 + $0xc] sm:$0xf]
    %v1002 = vunpack.c.l.b16 %v994
    %v1003 = vunpack.c.l.b16 %v995
    %v1004 = vunpack.c.l.b16 %v996
    %v1005 = vunpack.c.l.b16 %v997
    %v1006 = vpack.c.b16 %v1003, %v1002
    %v1007 = vpack.c.b16 %v1005, %v1004
    %v1011 = vsel %vm94, %v993, 0
    %1013 = vmatprep.subr.bf16.mxu0 0
    %1014 = vmatpush1.bf16.msra.mxu0 %v1006
    %1015 = vmatprep.subr.bf16.mxu0 0
    %1016 = vmatpush1.bf16.msra.mxu0 %v1007
    %1017 = vmatprep.subr.bf16.mxu0 0
    %1018 = vmatpush1.bf16.msra.mxu0 0
    %1019 = vmatprep.subr.bf16.mxu0 0
    %1020 = vmatpush1.bf16.msra.mxu0 0
    %1021 = vmatprep.subr.bf16.mxu0 0
    %1022 = vmatpush1.bf16.msra.mxu0 0
    %1023 = vmatprep.subr.bf16.mxu0 0
    %1024 = vmatpush1.bf16.msra.mxu0 0
    %1025 = vmatprep.subr.bf16.mxu0 0
    %1026 = vmatpush1.bf16.msra.mxu0 0
    %1027 = vmatprep.subr.bf16.mxu0 0
    %1028 = vmatpush1.bf16.msra.mxu0 0
    %1029 = vmatprep.subr.bf16.mxu0 0
    %1030 = vmatpush1.bf16.msra.mxu0 0
    %1031 = vmatprep.subr.bf16.mxu0 0
    %1032 = vmatpush1.bf16.msra.mxu0 0
    %1033 = vmatprep.subr.bf16.mxu0 0
    %1034 = vmatpush1.bf16.msra.mxu0 0
    %1035 = vmatprep.subr.bf16.mxu0 0
    %1036 = vmatpush1.bf16.msra.mxu0 0
    %1037 = vmatprep.subr.bf16.mxu0 0
    %1038 = vmatpush1.bf16.msra.mxu0 0
    %1039 = vmatprep.subr.bf16.mxu0 0
    %1040 = vmatpush1.bf16.msra.mxu0 0
    %1041 = vmatprep.subr.bf16.mxu0 0
    %1042 = vmatpush1.bf16.msra.mxu0 0
    %1043 = vmatprep.subr.bf16.mxu0 0
    %1044 = vmatpush1.bf16.msra.mxu0 0
    %1045 = vmatprep.mubr.bf16.mxu0 0
    %1046 = vmatmul.mubr.bf16.gmra.mrb[0].mxu0 %v1011
    %v1047 = vpop.f32.mrb[0].mxu0
    %v1048 = vadd.f32 0.0, %v1047
    %v1049 = vpop.f32.mrb[0].mxu0
    %v1050 = vpop.f32.mrb[0].mxu0
    %v1051 = vpop.f32.mrb[0].mxu0
    %1052 = vdwg.mxu0
    %v1053 = vadd.f32 %v124, %v1048
    %v1054 = vld [vmem:[%s7] sm:$0x1]
    %v1055 = vld [vmem:[%s8] sm:$0x1]
    %v1056 = vsel %vm94, %v1053, 0.0
    %1057 = vadd.xlane.f32.xlu0 %v1056
    %v1058 = vpop.xlane.xlu0 %1057
    %v1059 = vmul.f32 %v1058, %v98
    %v1060 = vsub.f32 %v1053, %v1059
    %v1061 = vmul.f32 %v1060, %v1060
    %v1062 = vsel %vm94, %v1061, 0.0
    %1063 = vadd.xlane.f32.xlu0 %v1062
    %v1064 = vpop.xlane.xlu0 %1063
    %v1065 = vmul.f32 %v1064, %v98
    %v1066 = vadd.f32 %v1065, 1e-05
    %v1067 = vrsqrt.pop %v1066
    %v1068 = vmul.f32 %v1060, %v1067
    %v1070 = vlaneseq
    %v1071 = vshrl.u32 %v1070, 7
    %v1072 = vsub.s32 0, %v1071
    %v1073 = vrot.slane %v1054, %v1072
    %v1075 = vmul.f32 %v1068, %v1073
    %v1077 = vlaneseq
    %v1078 = vshrl.u32 %v1077, 7
    %v1079 = vsub.s32 0, %v1078
    %v1080 = vrot.slane %v1055, %v1079
    %v1082 = vadd.f32 %v1075, %v1080
    %v1083 = vrot.slane %v1082, 7
    %v1084 = vsel %vm157, 0.0, %v1083
    %v1085 = vld [vmem:[%s20] sm:$0x1]
    %v1086 = vld [vmem:[%s21] sm:$0x1]
    %v1088 = vlaneseq
    %v1089 = vshrl.u32 %v1088, 7
    %v1090 = vsub.s32 0, %v1089
    %v1091 = vrot.slane %v1085, %v1090
    %v1093 = vmul.f32 %v1082, %v1091
    %v1094 = vsub.f32 1.0, %v1085
    %v1096 = vlaneseq
    %v1097 = vshrl.u32 %v1096, 7
    %v1098 = vsub.s32 0, %v1097
    %v1099 = vrot.slane %v1094, %v1098
    %v1101 = vmul.f32 %v1084, %v1099
    %v1102 = vadd.f32 %v1093, %v1101
    %v1104 = vlaneseq
    %v1105 = vshrl.u32 %v1104, 7
    %v1106 = vsub.s32 0, %v1105
    %v1107 = vrot.slane %v1086, %v1106
    %v1109 = vmul.f32 %v1082, %v1107
    %v1110 = vsub.f32 1.0, %v1086
    %v1112 = vlaneseq
    %v1113 = vshrl.u32 %v1112, 7
    %v1114 = vsub.s32 0, %v1113
    %v1115 = vrot.slane %v1110, %v1114
    %v1117 = vmul.f32 %v1084, %v1115
    %v1118 = vadd.f32 %v1109, %v1117
    %v1119 = vpack.c.bf16 %v1102, %v1102
    %v1120 = vld [vmem:[%s22] sm:$0xf]
    %v1121 = vld [vmem:[%s22 + $0x4] sm:$0xf]
    %v1122 = vld [vmem:[%s22 + $0x8] sm:$0xf]
    %v1123 = vld [vmem:[%s22 + $0xc] sm:$0xf]
    %v1128 = vunpack.c.l.b16 %v1120
    %v1129 = vunpack.c.l.b16 %v1121
    %v1130 = vunpack.c.l.b16 %v1122
    %v1131 = vunpack.c.l.b16 %v1123
    %v1132 = vpack.c.b16 %v1129, %v1128
    %v1133 = vpack.c.b16 %v1131, %v1130
    %v1137 = vsel %vm94, %v1119, 0
    %1139 = vmatprep.subr.bf16.mxu0 0
    %1140 = vmatpush1.bf16.msra.mxu0 %v1132
    %1141 = vmatprep.subr.bf16.mxu0 0
    %1142 = vmatpush1.bf16.msra.mxu0 %v1133
    %1143 = vmatprep.subr.bf16.mxu0 0
    %1144 = vmatpush1.bf16.msra.mxu0 0
    %1145 = vmatprep.subr.bf16.mxu0 0
    %1146 = vmatpush1.bf16.msra.mxu0 0
    %1147 = vmatprep.subr.bf16.mxu0 0
    %1148 = vmatpush1.bf16.msra.mxu0 0
    %1149 = vmatprep.subr.bf16.mxu0 0
    %1150 = vmatpush1.bf16.msra.mxu0 0
    %1151 = vmatprep.subr.bf16.mxu0 0
    %1152 = vmatpush1.bf16.msra.mxu0 0
    %1153 = vmatprep.subr.bf16.mxu0 0
    %1154 = vmatpush1.bf16.msra.mxu0 0
    %1155 = vmatprep.subr.bf16.mxu0 0
    %1156 = vmatpush1.bf16.msra.mxu0 0
    %1157 = vmatprep.subr.bf16.mxu0 0
    %1158 = vmatpush1.bf16.msra.mxu0 0
    %1159 = vmatprep.subr.bf16.mxu0 0
    %1160 = vmatpush1.bf16.msra.mxu0 0
    %1161 = vmatprep.subr.bf16.mxu0 0
    %1162 = vmatpush1.bf16.msra.mxu0 0
    %1163 = vmatprep.subr.bf16.mxu0 0
    %1164 = vmatpush1.bf16.msra.mxu0 0
    %1165 = vmatprep.subr.bf16.mxu0 0
    %1166 = vmatpush1.bf16.msra.mxu0 0
    %1167 = vmatprep.subr.bf16.mxu0 0
    %1168 = vmatpush1.bf16.msra.mxu0 0
    %1169 = vmatprep.subr.bf16.mxu0 0
    %1170 = vmatpush1.bf16.msra.mxu0 0
    %1171 = vmatprep.mubr.bf16.mxu0 0
    %1172 = vmatmul.mubr.bf16.gmra.mrb[0].mxu0 %v1137
    %v1173 = vpop.f32.mrb[0].mxu0
    %v1174 = vadd.f32 0.0, %v1173
    %v1175 = vpop.f32.mrb[0].mxu0
    %v1176 = vpop.f32.mrb[0].mxu0
    %v1177 = vpop.f32.mrb[0].mxu0
    %1178 = vdwg.mxu0
    %v1179 = vmax.f32 %v1174, 0.0
    %v1180 = vmul.f32 %v1179, %v1179
    %v1181 = vpack.c.bf16 %v1180, %v1180
    %v1182 = vld [vmem:[%s23] sm:$0xf]
    %v1183 = vld [vmem:[%s23 + $0x4] sm:$0xf]
    %v1184 = vld [vmem:[%s23 + $0x8] sm:$0xf]
    %v1185 = vld [vmem:[%s23 + $0xc] sm:$0xf]
    %v1186 = vld [vmem:[%s23 + $0x10] sm:$0xf]
    %v1187 = vld [vmem:[%s23 + $0x14] sm:$0xf]
    %v1188 = vld [vmem:[%s23 + $0x18] sm:$0xf]
    %v1189 = vld [vmem:[%s23 + $0x1c] sm:$0xf]
    %v1190 = vld [vmem:[%s23 + $0x20] sm:$0xf]
    %v1191 = vld [vmem:[%s23 + $0x24] sm:$0xf]
    %v1192 = vld [vmem:[%s23 + $0x28] sm:$0xf]
    %v1193 = vld [vmem:[%s23 + $0x2c] sm:$0xf]
    %v1194 = vld [vmem:[%s23 + $0x30] sm:$0xf]
    %v1195 = vld [vmem:[%s23 + $0x34] sm:$0xf]
    %v1196 = vld [vmem:[%s23 + $0x38] sm:$0xf]
    %v1197 = vld [vmem:[%s23 + $0x3c] sm:$0xf]
    %v1214 = vunpack.c.l.b16 %v1182
    %v1215 = vunpack.c.l.b16 %v1183
    %v1216 = vunpack.c.l.b16 %v1184
    %v1217 = vunpack.c.l.b16 %v1185
    %v1218 = vunpack.c.l.b16 %v1186
    %v1219 = vunpack.c.l.b16 %v1187
    %v1220 = vunpack.c.l.b16 %v1188
    %v1221 = vunpack.c.l.b16 %v1189
    %v1222 = vunpack.c.l.b16 %v1190
    %v1223 = vunpack.c.l.b16 %v1191
    %v1224 = vunpack.c.l.b16 %v1192
    %v1225 = vunpack.c.l.b16 %v1193
    %v1226 = vunpack.c.l.b16 %v1194
    %v1227 = vunpack.c.l.b16 %v1195
    %v1228 = vunpack.c.l.b16 %v1196
    %v1229 = vunpack.c.l.b16 %v1197
    %v1230 = vpack.c.b16 %v1215, %v1214
    %v1231 = vpack.c.b16 %v1217, %v1216
    %v1232 = vpack.c.b16 %v1219, %v1218
    %v1233 = vpack.c.b16 %v1221, %v1220
    %v1234 = vpack.c.b16 %v1223, %v1222
    %v1235 = vpack.c.b16 %v1225, %v1224
    %v1236 = vpack.c.b16 %v1227, %v1226
    %v1237 = vpack.c.b16 %v1229, %v1228
    %1246 = vmatprep.subr.bf16.mxu0 0
    %1247 = vmatpush1.bf16.msra.mxu0 %v1230
    %1248 = vmatprep.subr.bf16.mxu0 0
    %1249 = vmatpush1.bf16.msra.mxu0 %v1231
    %1250 = vmatprep.subr.bf16.mxu0 0
    %1251 = vmatpush1.bf16.msra.mxu0 %v1232
    %1252 = vmatprep.subr.bf16.mxu0 0
    %1253 = vmatpush1.bf16.msra.mxu0 %v1233
    %1254 = vmatprep.subr.bf16.mxu0 0
    %1255 = vmatpush1.bf16.msra.mxu0 %v1234
    %1256 = vmatprep.subr.bf16.mxu0 0
    %1257 = vmatpush1.bf16.msra.mxu0 %v1235
    %1258 = vmatprep.subr.bf16.mxu0 0
    %1259 = vmatpush1.bf16.msra.mxu0 %v1236
    %1260 = vmatprep.subr.bf16.mxu0 0
    %1261 = vmatpush1.bf16.msra.mxu0 %v1237
    %1262 = vmatprep.subr.bf16.mxu0 0
    %1263 = vmatpush1.bf16.msra.mxu0 0
    %1264 = vmatprep.subr.bf16.mxu0 0
    %1265 = vmatpush1.bf16.msra.mxu0 0
    %1266 = vmatprep.subr.bf16.mxu0 0
    %1267 = vmatpush1.bf16.msra.mxu0 0
    %1268 = vmatprep.subr.bf16.mxu0 0
    %1269 = vmatpush1.bf16.msra.mxu0 0
    %1270 = vmatprep.subr.bf16.mxu0 0
    %1271 = vmatpush1.bf16.msra.mxu0 0
    %1272 = vmatprep.subr.bf16.mxu0 0
    %1273 = vmatpush1.bf16.msra.mxu0 0
    %1274 = vmatprep.subr.bf16.mxu0 0
    %1275 = vmatpush1.bf16.msra.mxu0 0
    %1276 = vmatprep.subr.bf16.mxu0 0
    %1277 = vmatpush1.bf16.msra.mxu0 0
    %1278 = vmatprep.mubr.bf16.mxu0 0
    %1279 = vmatmul.mubr.bf16.gmra.mrb[0].mxu0 %v1181
    %v1280 = vpop.f32.mrb[0].mxu0
    %v1281 = vadd.f32 0.0, %v1280
    %v1282 = vpop.f32.mrb[0].mxu0
    %v1283 = vpop.f32.mrb[0].mxu0
    %v1284 = vpop.f32.mrb[0].mxu0
    %1285 = vdwg.mxu0
    %v1286 = vpack.c.bf16 %v1118, %v1118
    %v1287 = vld [vmem:[%s24] sm:$0xf]
    %v1288 = vld [vmem:[%s24 + $0x4] sm:$0xf]
    %v1289 = vld [vmem:[%s24 + $0x8] sm:$0xf]
    %v1290 = vld [vmem:[%s24 + $0xc] sm:$0xf]
    %v1295 = vunpack.c.l.b16 %v1287
    %v1296 = vunpack.c.l.b16 %v1288
    %v1297 = vunpack.c.l.b16 %v1289
    %v1298 = vunpack.c.l.b16 %v1290
    %v1299 = vpack.c.b16 %v1296, %v1295
    %v1300 = vpack.c.b16 %v1298, %v1297
    %v1304 = vsel %vm94, %v1286, 0
    %1306 = vmatprep.subr.bf16.mxu0 0
    %1307 = vmatpush1.bf16.msra.mxu0 %v1299
    %1308 = vmatprep.subr.bf16.mxu0 0
    %1309 = vmatpush1.bf16.msra.mxu0 %v1300
    %1310 = vmatprep.subr.bf16.mxu0 0
    %1311 = vmatpush1.bf16.msra.mxu0 0
    %1312 = vmatprep.subr.bf16.mxu0 0
    %1313 = vmatpush1.bf16.msra.mxu0 0
    %1314 = vmatprep.subr.bf16.mxu0 0
    %1315 = vmatpush1.bf16.msra.mxu0 0
    %1316 = vmatprep.subr.bf16.mxu0 0
    %1317 = vmatpush1.bf16.msra.mxu0 0
    %1318 = vmatprep.subr.bf16.mxu0 0
    %1319 = vmatpush1.bf16.msra.mxu0 0
    %1320 = vmatprep.subr.bf16.mxu0 0
    %1321 = vmatpush1.bf16.msra.mxu0 0
    %1322 = vmatprep.subr.bf16.mxu0 0
    %1323 = vmatpush1.bf16.msra.mxu0 0
    %1324 = vmatprep.subr.bf16.mxu0 0
    %1325 = vmatpush1.bf16.msra.mxu0 0
    %1326 = vmatprep.subr.bf16.mxu0 0
    %1327 = vmatpush1.bf16.msra.mxu0 0
    %1328 = vmatprep.subr.bf16.mxu0 0
    %1329 = vmatpush1.bf16.msra.mxu0 0
    %1330 = vmatprep.subr.bf16.mxu0 0
    %1331 = vmatpush1.bf16.msra.mxu0 0
    %1332 = vmatprep.subr.bf16.mxu0 0
    %1333 = vmatpush1.bf16.msra.mxu0 0
    %1334 = vmatprep.subr.bf16.mxu0 0
    %1335 = vmatpush1.bf16.msra.mxu0 0
    %1336 = vmatprep.subr.bf16.mxu0 0
    %1337 = vmatpush1.bf16.msra.mxu0 0
    %1338 = vmatprep.mubr.bf16.mxu0 0
    %1339 = vmatmul.mubr.bf16.gmra.mrb[0].mxu0 %v1304
    %v1340 = vpop.f32.mrb[0].mxu0
    %v1341 = vadd.f32 0.0, %v1340
    %v1342 = vpop.f32.mrb[0].mxu0
    %v1343 = vpop.f32.mrb[0].mxu0
    %v1344 = vpop.f32.mrb[0].mxu0
    %1345 = vdwg.mxu0
    %v1346 = vxor.u32 %v1341, 2147483648
    %v1347 = vmul.f32 %v1346, 1.442695
    %v1348 = vpow.pop %v1347
    %v1349 = vadd.f32 %v1348, 1.0
    %v1350 = vrcp.pop %v1349
    %v1351 = vmul.f32 1.0, %v1350
    %v1352 = vmul.f32 %v1351, %v1281
    %v1353 = vadd.f32 %v1053, %v1352
    %v1354 = vld [vmem:[%s9] sm:$0x1]
    %v1355 = vld [vmem:[%s10] sm:$0x1]
    %v1356 = vsel %vm94, %v1353, 0.0
    %1357 = vadd.xlane.f32.xlu0 %v1356
    %v1358 = vpop.xlane.xlu0 %1357
    %v1359 = vmul.f32 %v1358, %v98
    %v1360 = vsub.f32 %v1353, %v1359
    %v1361 = vmul.f32 %v1360, %v1360
    %v1362 = vsel %vm94, %v1361, 0.0
    %1363 = vadd.xlane.f32.xlu0 %v1362
    %v1364 = vpop.xlane.xlu0 %1363
    %v1365 = vmul.f32 %v1364, %v98
    %v1366 = vadd.f32 %v1365, 1e-05
    %v1367 = vrsqrt.pop %v1366
    %v1368 = vmul.f32 %v1360, %v1367
    %v1370 = vlaneseq
    %v1371 = vshrl.u32 %v1370, 7
    %v1372 = vsub.s32 0, %v1371
    %v1373 = vrot.slane %v1354, %v1372
    %v1375 = vmul.f32 %v1368, %v1373
    %v1377 = vlaneseq
    %v1378 = vshrl.u32 %v1377, 7
    %v1379 = vsub.s32 0, %v1378
    %v1380 = vrot.slane %v1355, %v1379
    %v1382 = vadd.f32 %v1375, %v1380
    %v1383 = vpack.c.bf16 %v1382, %v1382
    %v1384 = vld [vmem:[%s25] sm:$0xf]
    %v1385 = vld [vmem:[%s25 + $0x4] sm:$0xf]
    %v1386 = vld [vmem:[%s25 + $0x8] sm:$0xf]
    %v1387 = vld [vmem:[%s25 + $0xc] sm:$0xf]
    %v1392 = vunpack.c.l.b16 %v1384
    %v1393 = vunpack.c.l.b16 %v1385
    %v1394 = vunpack.c.l.b16 %v1386
    %v1395 = vunpack.c.l.b16 %v1387
    %v1396 = vpack.c.b16 %v1393, %v1392
    %v1397 = vpack.c.b16 %v1395, %v1394
    %v1401 = vsel %vm94, %v1383, 0
    %1403 = vmatprep.subr.bf16.mxu0 0
    %1404 = vmatpush1.bf16.msra.mxu0 %v1396
    %1405 = vmatprep.subr.bf16.mxu0 0
    %1406 = vmatpush1.bf16.msra.mxu0 %v1397
    %1407 = vmatprep.subr.bf16.mxu0 0
    %1408 = vmatpush1.bf16.msra.mxu0 0
    %1409 = vmatprep.subr.bf16.mxu0 0
    %1410 = vmatpush1.bf16.msra.mxu0 0
    %1411 = vmatprep.subr.bf16.mxu0 0
    %1412 = vmatpush1.bf16.msra.mxu0 0
    %1413 = vmatprep.subr.bf16.mxu0 0
    %1414 = vmatpush1.bf16.msra.mxu0 0
    %1415 = vmatprep.subr.bf16.mxu0 0
    %1416 = vmatpush1.bf16.msra.mxu0 0
    %1417 = vmatprep.subr.bf16.mxu0 0
    %1418 = vmatpush1.bf16.msra.mxu0 0
    %1419 = vmatprep.subr.bf16.mxu0 0
    %1420 = vmatpush1.bf16.msra.mxu0 0
    %1421 = vmatprep.subr.bf16.mxu0 0
    %1422 = vmatpush1.bf16.msra.mxu0 0
    %1423 = vmatprep.subr.bf16.mxu0 0
    %1424 = vmatpush1.bf16.msra.mxu0 0
    %1425 = vmatprep.subr.bf16.mxu0 0
    %1426 = vmatpush1.bf16.msra.mxu0 0
    %1427 = vmatprep.subr.bf16.mxu0 0
    %1428 = vmatpush1.bf16.msra.mxu0 0
    %1429 = vmatprep.subr.bf16.mxu0 0
    %1430 = vmatpush1.bf16.msra.mxu0 0
    %1431 = vmatprep.subr.bf16.mxu0 0
    %1432 = vmatpush1.bf16.msra.mxu0 0
    %1433 = vmatprep.subr.bf16.mxu0 0
    %1434 = vmatpush1.bf16.msra.mxu0 0
    %1435 = vmatprep.mubr.bf16.mxu0 0
    %1436 = vmatmul.mubr.bf16.gmra.mrb[0].mxu0 %v1401
    %v1437 = vpop.f32.mrb[0].mxu0
    %v1438 = vadd.f32 0.0, %v1437
    %v1439 = vpop.f32.mrb[0].mxu0
    %v1440 = vpop.f32.mrb[0].mxu0
    %v1441 = vpop.f32.mrb[0].mxu0
    %1442 = vdwg.mxu0
    %v1443 = vld [vmem:[%s26] sm:$0xf]
    %v1444 = vld [vmem:[%s26 + $0x4] sm:$0xf]
    %v1445 = vld [vmem:[%s26 + $0x8] sm:$0xf]
    %v1446 = vld [vmem:[%s26 + $0xc] sm:$0xf]
    %v1451 = vunpack.c.l.b16 %v1443
    %v1452 = vunpack.c.l.b16 %v1444
    %v1453 = vunpack.c.l.b16 %v1445
    %v1454 = vunpack.c.l.b16 %v1446
    %v1455 = vpack.c.b16 %v1452, %v1451
    %v1456 = vpack.c.b16 %v1454, %v1453
    %1459 = vmatprep.subr.bf16.mxu0 0
    %1460 = vmatpush1.bf16.msra.mxu0 %v1455
    %1461 = vmatprep.subr.bf16.mxu0 0
    %1462 = vmatpush1.bf16.msra.mxu0 %v1456
    %1463 = vmatprep.subr.bf16.mxu0 0
    %1464 = vmatpush1.bf16.msra.mxu0 0
    %1465 = vmatprep.subr.bf16.mxu0 0
    %1466 = vmatpush1.bf16.msra.mxu0 0
    %1467 = vmatprep.subr.bf16.mxu0 0
    %1468 = vmatpush1.bf16.msra.mxu0 0
    %1469 = vmatprep.subr.bf16.mxu0 0
    %1470 = vmatpush1.bf16.msra.mxu0 0
    %1471 = vmatprep.subr.bf16.mxu0 0
    %1472 = vmatpush1.bf16.msra.mxu0 0
    %1473 = vmatprep.subr.bf16.mxu0 0
    %1474 = vmatpush1.bf16.msra.mxu0 0
    %1475 = vmatprep.subr.bf16.mxu0 0
    %1476 = vmatpush1.bf16.msra.mxu0 0
    %1477 = vmatprep.subr.bf16.mxu0 0
    %1478 = vmatpush1.bf16.msra.mxu0 0
    %1479 = vmatprep.subr.bf16.mxu0 0
    %1480 = vmatpush1.bf16.msra.mxu0 0
    %1481 = vmatprep.subr.bf16.mxu0 0
    %1482 = vmatpush1.bf16.msra.mxu0 0
    %1483 = vmatprep.subr.bf16.mxu0 0
    %1484 = vmatpush1.bf16.msra.mxu0 0
    %1485 = vmatprep.subr.bf16.mxu0 0
    %1486 = vmatpush1.bf16.msra.mxu0 0
    %1487 = vmatprep.subr.bf16.mxu0 0
    %1488 = vmatpush1.bf16.msra.mxu0 0
    %1489 = vmatprep.subr.bf16.mxu0 0
    %1490 = vmatpush1.bf16.msra.mxu0 0
    %1491 = vmatprep.mubr.bf16.mxu0 0
    %1492 = vmatmul.mubr.bf16.gmra.mrb[0].mxu0 %v1401
    %v1493 = vpop.f32.mrb[0].mxu0
    %v1494 = vadd.f32 0.0, %v1493
    %v1495 = vpop.f32.mrb[0].mxu0
    %v1496 = vpop.f32.mrb[0].mxu0
    %v1497 = vpop.f32.mrb[0].mxu0
    %1498 = vdwg.mxu0
    %v1499 = vld [vmem:[%s1] sm:$0xff]
    %v1500 = vpack.c.bf16 %v1499, %v1499
    %v1501 = vld [vmem:[%s27] sm:$0xf]
    %v1502 = vld [vmem:[%s27 + $0x4] sm:$0xf]
    %v1503 = vld [vmem:[%s27 + $0x8] sm:$0xf]
    %v1504 = vld [vmem:[%s27 + $0xc] sm:$0xf]
    %v1509 = vunpack.c.l.b16 %v1501
    %v1510 = vunpack.c.l.b16 %v1502
    %v1511 = vunpack.c.l.b16 %v1503
    %v1512 = vunpack.c.l.b16 %v1504
    %v1513 = vpack.c.b16 %v1510, %v1509
    %v1514 = vpack.c.b16 %v1512, %v1511
    %v1518 = vsel %vm94, %v1500, 0
    %1520 = vmatprep.subr.bf16.mxu0 0
    %1521 = vmatpush1.bf16.msra.mxu0 %v1513
    %1522 = vmatprep.subr.bf16.mxu0 0
    %1523 = vmatpush1.bf16.msra.mxu0 %v1514
    %1524 = vmatprep.subr.bf16.mxu0 0
    %1525 = vmatpush1.bf16.msra.mxu0 0
    %1526 = vmatprep.subr.bf16.mxu0 0
    %1527 = vmatpush1.bf16.msra.mxu0 0
    %1528 = vmatprep.subr.bf16.mxu0 0
    %1529 = vmatpush1.bf16.msra.mxu0 0
    %1530 = vmatprep.subr.bf16.mxu0 0
    %1531 = vmatpush1.bf16.msra.mxu0 0
    %1532 = vmatprep.subr.bf16.mxu0 0
    %1533 = vmatpush1.bf16.msra.mxu0 0
    %1534 = vmatprep.subr.bf16.mxu0 0
    %1535 = vmatpush1.bf16.msra.mxu0 0
    %1536 = vmatprep.subr.bf16.mxu0 0
    %1537 = vmatpush1.bf16.msra.mxu0 0
    %1538 = vmatprep.subr.bf16.mxu0 0
    %1539 = vmatpush1.bf16.msra.mxu0 0
    %1540 = vmatprep.subr.bf16.mxu0 0
    %1541 = vmatpush1.bf16.msra.mxu0 0
    %1542 = vmatprep.subr.bf16.mxu0 0
    %1543 = vmatpush1.bf16.msra.mxu0 0
    %1544 = vmatprep.subr.bf16.mxu0 0
    %1545 = vmatpush1.bf16.msra.mxu0 0
    %1546 = vmatprep.subr.bf16.mxu0 0
    %1547 = vmatpush1.bf16.msra.mxu0 0
    %1548 = vmatprep.subr.bf16.mxu0 0
    %1549 = vmatpush1.bf16.msra.mxu0 0
    %1550 = vmatprep.subr.bf16.mxu0 0
    %1551 = vmatpush1.bf16.msra.mxu0 0
    %1552 = vmatprep.mubr.bf16.mxu0 0
    %1553 = vmatmul.mubr.bf16.gmra.mrb[0].mxu0 %v1518
    %v1554 = vpop.f32.mrb[0].mxu0
    %v1555 = vadd.f32 0.0, %v1554
    %v1556 = vpop.f32.mrb[0].mxu0
    %v1557 = vpop.f32.mrb[0].mxu0
    %v1558 = vpop.f32.mrb[0].mxu0
    %1559 = vdwg.mxu0
    %v1560 = vpack.c.bf16 %v1438, %v1438
    %v1561 = vpack.c.bf16 %v1494, %v1494
    %1562 = vmatprep.subr.bf16.mxu0 0
    %1563 = vmatpush1.bf16.xpose.msra.mxu0 %v1561
    %1564 = vmatprep.subr.bf16.mxu0 0
    %1565 = vmatpush1.bf16.xpose.msra.mxu0 0
    %1566 = vmatprep.subr.bf16.mxu0 0
    %1567 = vmatpush1.bf16.xpose.msra.mxu0 0
    %1568 = vmatprep.subr.bf16.mxu0 0
    %1569 = vmatpush1.bf16.xpose.msra.mxu0 0
    %1570 = vmatprep.subr.bf16.mxu0 0
    %1571 = vmatpush1.bf16.xpose.msra.mxu0 0
    %1572 = vmatprep.subr.bf16.mxu0 0
    %1573 = vmatpush1.bf16.xpose.msra.mxu0 0
    %1574 = vmatprep.subr.bf16.mxu0 0
    %1575 = vmatpush1.bf16.xpose.msra.mxu0 0
    %1576 = vmatprep.subr.bf16.mxu0 0
    %1577 = vmatpush1.bf16.xpose.msra.mxu0 0
    %1578 = vmatprep.subr.bf16.mxu0 0
    %1579 = vmatpush1.bf16.xpose.msra.mxu0 0
    %1580 = vmatprep.subr.bf16.mxu0 0
    %1581 = vmatpush1.bf16.xpose.msra.mxu0 0
    %1582 = vmatprep.subr.bf16.mxu0 0
    %1583 = vmatpush1.bf16.xpose.msra.mxu0 0
    %1584 = vmatprep.subr.bf16.mxu0 0
    %1585 = vmatpush1.bf16.xpose.msra.mxu0 0
    %1586 = vmatprep.subr.bf16.mxu0 0
    %1587 = vmatpush1.bf16.xpose.msra.mxu0 0
    %1588 = vmatprep.subr.bf16.mxu0 0
    %1589 = vmatpush1.bf16.xpose.msra.mxu0 0
    %1590 = vmatprep.subr.bf16.mxu0 0
    %1591 = vmatpush1.bf16.xpose.msra.mxu0 0
    %1592 = vmatprep.subr.bf16.mxu0 0
    %1593 = vmatpush1.bf16.xpose.msra.mxu0 0
    %1594 = vmatprep.mubr.bf16.mxu0 0
    %1595 = vmatmul.mubr.bf16.gmra.mrb[0].mxu0 %v1560
    %v1596 = vpop.f32.mrb[0].mxu0
    %v1597 = vadd.f32 0.0, %v1596
    %v1598 = vpop.f32.mrb[0].mxu0
    %v1599 = vpop.f32.mrb[0].mxu0
    %v1600 = vpop.f32.mrb[0].mxu0
    %1601 = vdwg.mxu0
    %v1602 = vmul.f32 %v1597, 0.25
    %v1603 = vlaneseq
    %v1604 = vand.u32 %v1603, 127
    %vm1605 = vcmp.ge.s32.totalorder %v156, %v1604
    %v1606 = vsel %vm1605, %v1602, 0.0
    %v1607 = vpack.c.bf16 %v1606, %v1606
    %v1608 = vpack.c.bf16 %v1555, %v1555
    %vm1609 = vcmask 64512
    %v1611 = vsel %vm1609, %v1607, 0
    %vm1613 = vcmask 1043456
    %v1615 = vsel %vm1613, %v1608, 0
    %1617 = vmatprep.subr.bf16.mxu0 0
    %1618 = vmatpush1.bf16.msra.mxu0 %v1615
    %1619 = vmatprep.subr.bf16.mxu0 0
    %1620 = vmatpush1.bf16.msra.mxu0 0
    %1621 = vmatprep.subr.bf16.mxu0 0
    %1622 = vmatpush1.bf16.msra.mxu0 0
    %1623 = vmatprep.subr.bf16.mxu0 0
    %1624 = vmatpush1.bf16.msra.mxu0 0
    %1625 = vmatprep.subr.bf16.mxu0 0
    %1626 = vmatpush1.bf16.msra.mxu0 0
    %1627 = vmatprep.subr.bf16.mxu0 0
    %1628 = vmatpush1.bf16.msra.mxu0 0
    %1629 = vmatprep.subr.bf16.mxu0 0
    %1630 = vmatpush1.bf16.msra.mxu0 0
    %1631 = vmatprep.subr.bf16.mxu0 0
    %1632 = vmatpush1.bf16.msra.mxu0 0
    %1633 = vmatprep.subr.bf16.mxu0 0
    %1634 = vmatpush1.bf16.msra.mxu0 0
    %1635 = vmatprep.subr.bf16.mxu0 0
    %1636 = vmatpush1.bf16.msra.mxu0 0
    %1637 = vmatprep.subr.bf16.mxu0 0
    %1638 = vmatpush1.bf16.msra.mxu0 0
    %1639 = vmatprep.subr.bf16.mxu0 0
    %1640 = vmatpush1.bf16.msra.mxu0 0
    %1641 = vmatprep.subr.bf16.mxu0 0
    %1642 = vmatpush1.bf16.msra.mxu0 0
    %1643 = vmatprep.subr.bf16.mxu0 0
    %1644 = vmatpush1.bf16.msra.mxu0 0
    %1645 = vmatprep.subr.bf16.mxu0 0
    %1646 = vmatpush1.bf16.msra.mxu0 0
    %1647 = vmatprep.subr.bf16.mxu0 0
    %1648 = vmatpush1.bf16.msra.mxu0 0
    %1649 = vmatprep.mubr.bf16.mxu0 0
    %1650 = vmatmul.mubr.bf16.gmra.mrb[0].mxu0 %v1611
    %v1651 = vpop.f32.mrb[0].mxu0
    %v1652 = vadd.f32 0.0, %v1651
    %v1653 = vpop.f32.mrb[0].mxu0
    %v1654 = vpop.f32.mrb[0].mxu0
    %v1655 = vpop.f32.mrb[0].mxu0
    %1656 = vdwg.mxu0
    %v1657 = vadd.f32 %v1353, %v1652
    %1658 = vst.msk [vmem:[#allocation6] sm:$0xff] %vm94, %v1657
    %v1659 = vld [vmem:[#allocation5] sm:$0xff]
    %v1660 = vpack.c.bf16 %v1659, %v1659
    %v1661 = vld [vmem:[%s19] sm:$0xf]
    %v1662 = vld [vmem:[%s19 + $0x4] sm:$0xf]
    %v1663 = vld [vmem:[%s19 + $0x8] sm:$0xf]
    %v1664 = vld [vmem:[%s19 + $0xc] sm:$0xf]
    %1666 = vrot.lane.b32.xlu0 %v1660, 96
    %v1667 = vpop.permute.xlu0 %1666
    %v1672 = vunpack.c.l.b16 %v1661
    %v1673 = vunpack.c.l.b16 %v1662
    %v1674 = vunpack.c.l.b16 %v1663
    %v1675 = vunpack.c.l.b16 %v1664
    %v1676 = vpack.c.b16 %v1673, %v1672
    %v1677 = vpack.c.b16 %v1675, %v1674
    %v1681 = vsel %vm94, %v1667, 0
    %1683 = vmatprep.subr.bf16.mxu0 0
    %1684 = vmatpush1.bf16.msra.mxu0 %v1676
    %1685 = vmatprep.subr.bf16.mxu0 0
    %1686 = vmatpush1.bf16.msra.mxu0 %v1677
    %1687 = vmatprep.subr.bf16.mxu0 0
    %1688 = vmatpush1.bf16.msra.mxu0 0
    %1689 = vmatprep.subr.bf16.mxu0 0
    %1690 = vmatpush1.bf16.msra.mxu0 0
    %1691 = vmatprep.subr.bf16.mxu0 0
    %1692 = vmatpush1.bf16.msra.mxu0 0
    %1693 = vmatprep.subr.bf16.mxu0 0
    %1694 = vmatpush1.bf16.msra.mxu0 0
    %1695 = vmatprep.subr.bf16.mxu0 0
    %1696 = vmatpush1.bf16.msra.mxu0 0
    %1697 = vmatprep.subr.bf16.mxu0 0
    %1698 = vmatpush1.bf16.msra.mxu0 0
    %1699 = vmatprep.subr.bf16.mxu0 0
    %1700 = vmatpush1.bf16.msra.mxu0 0
    %1701 = vmatprep.subr.bf16.mxu0 0
    %1702 = vmatpush1.bf16.msra.mxu0 0
    %1703 = vmatprep.subr.bf16.mxu0 0
    %1704 = vmatpush1.bf16.msra.mxu0 0
    %1705 = vmatprep.subr.bf16.mxu0 0
    %1706 = vmatpush1.bf16.msra.mxu0 0
    %1707 = vmatprep.subr.bf16.mxu0 0
    %1708 = vmatpush1.bf16.msra.mxu0 0
    %1709 = vmatprep.subr.bf16.mxu0 0
    %1710 = vmatpush1.bf16.msra.mxu0 0
    %1711 = vmatprep.subr.bf16.mxu0 0
    %1712 = vmatpush1.bf16.msra.mxu0 0
    %1713 = vmatprep.subr.bf16.mxu0 0
    %1714 = vmatpush1.bf16.msra.mxu0 0
    %1715 = vmatprep.mubr.bf16.mxu0 0
    %1716 = vmatmul.mubr.bf16.gmra.mrb[0].mxu0 %v1681
    %v1717 = vpop.f32.mrb[0].mxu0
    %v1718 = vadd.f32 0.0, %v1717
    %v1719 = vpop.f32.mrb[0].mxu0
    %v1720 = vpop.f32.mrb[0].mxu0
    %v1721 = vpop.f32.mrb[0].mxu0
    %1722 = vdwg.mxu0
    %v1723 = vadd.f32 %v431, %v1718
    %v1724 = vld [vmem:[%s7] sm:$0x1]
    %v1725 = vld [vmem:[%s8] sm:$0x1]
    %v1726 = vsel %vm94, %v1723, 0.0
    %1727 = vadd.xlane.f32.xlu0 %v1726
    %v1728 = vpop.xlane.xlu0 %1727
    %v1729 = vmul.f32 %v1728, %v98
    %v1730 = vsub.f32 %v1723, %v1729
    %v1731 = vmul.f32 %v1730, %v1730
    %v1732 = vsel %vm94, %v1731, 0.0
    %1733 = vadd.xlane.f32.xlu0 %v1732
    %v1734 = vpop.xlane.xlu0 %1733
    %v1735 = vmul.f32 %v1734, %v98
    %v1736 = vadd.f32 %v1735, 1e-05
    %v1737 = vrsqrt.pop %v1736
    %v1738 = vmul.f32 %v1730, %v1737
    %v1740 = vlaneseq
    %v1741 = vshrl.u32 %v1740, 7
    %v1742 = vsub.s32 0, %v1741
    %v1743 = vrot.slane %v1724, %v1742
    %v1745 = vmul.f32 %v1738, %v1743
    %v1747 = vlaneseq
    %v1748 = vshrl.u32 %v1747, 7
    %v1749 = vsub.s32 0, %v1748
    %v1750 = vrot.slane %v1725, %v1749
    %v1752 = vadd.f32 %v1745, %v1750
    %v1753 = vrot.slane %v1752, 7
    %v1754 = vsel %vm157, 0.0, %v1753
    %v1755 = vld [vmem:[%s20] sm:$0x1]
    %v1756 = vld [vmem:[%s21] sm:$0x1]
    %v1758 = vlaneseq
    %v1759 = vshrl.u32 %v1758, 7
    %v1760 = vsub.s32 0, %v1759
    %v1761 = vrot.slane %v1755, %v1760
    %v1763 = vmul.f32 %v1752, %v1761
    %v1764 = vsub.f32 1.0, %v1755
    %v1766 = vlaneseq
    %v1767 = vshrl.u32 %v1766, 7
    %v1768 = vsub.s32 0, %v1767
    %v1769 = vrot.slane %v1764, %v1768
    %v1771 = vmul.f32 %v1754, %v1769
    %v1772 = vadd.f32 %v1763, %v1771
    %v1774 = vlaneseq
    %v1775 = vshrl.u32 %v1774, 7
    %v1776 = vsub.s32 0, %v1775
    %v1777 = vrot.slane %v1756, %v1776
    %v1779 = vmul.f32 %v1752, %v1777
    %v1780 = vsub.f32 1.0, %v1756
    %v1782 = vlaneseq
    %v1783 = vshrl.u32 %v1782, 7
    %v1784 = vsub.s32 0, %v1783
    %v1785 = vrot.slane %v1780, %v1784
    %v1787 = vmul.f32 %v1754, %v1785
    %v1788 = vadd.f32 %v1779, %v1787
    %v1789 = vpack.c.bf16 %v1772, %v1772
    %v1790 = vld [vmem:[%s22] sm:$0xf]
    %v1791 = vld [vmem:[%s22 + $0x4] sm:$0xf]
    %v1792 = vld [vmem:[%s22 + $0x8] sm:$0xf]
    %v1793 = vld [vmem:[%s22 + $0xc] sm:$0xf]
    %v1798 = vunpack.c.l.b16 %v1790
    %v1799 = vunpack.c.l.b16 %v1791
    %v1800 = vunpack.c.l.b16 %v1792
    %v1801 = vunpack.c.l.b16 %v1793
    %v1802 = vpack.c.b16 %v1799, %v1798
    %v1803 = vpack.c.b16 %v1801, %v1800
    %v1807 = vsel %vm94, %v1789, 0
    %1809 = vmatprep.subr.bf16.mxu0 0
    %1810 = vmatpush1.bf16.msra.mxu0 %v1802
    %1811 = vmatprep.subr.bf16.mxu0 0
    %1812 = vmatpush1.bf16.msra.mxu0 %v1803
    %1813 = vmatprep.subr.bf16.mxu0 0
    %1814 = vmatpush1.bf16.msra.mxu0 0
    %1815 = vmatprep.subr.bf16.mxu0 0
    %1816 = vmatpush1.bf16.msra.mxu0 0
    %1817 = vmatprep.subr.bf16.mxu0 0
    %1818 = vmatpush1.bf16.msra.mxu0 0
    %1819 = vmatprep.subr.bf16.mxu0 0
    %1820 = vmatpush1.bf16.msra.mxu0 0
    %1821 = vmatprep.subr.bf16.mxu0 0
    %1822 = vmatpush1.bf16.msra.mxu0 0
    %1823 = vmatprep.subr.bf16.mxu0 0
    %1824 = vmatpush1.bf16.msra.mxu0 0
    %1825 = vmatprep.subr.bf16.mxu0 0
    %1826 = vmatpush1.bf16.msra.mxu0 0
    %1827 = vmatprep.subr.bf16.mxu0 0
    %1828 = vmatpush1.bf16.msra.mxu0 0
    %1829 = vmatprep.subr.bf16.mxu0 0
    %1830 = vmatpush1.bf16.msra.mxu0 0
    %1831 = vmatprep.subr.bf16.mxu0 0
    %1832 = vmatpush1.bf16.msra.mxu0 0
    %1833 = vmatprep.subr.bf16.mxu0 0
    %1834 = vmatpush1.bf16.msra.mxu0 0
    %1835 = vmatprep.subr.bf16.mxu0 0
    %1836 = vmatpush1.bf16.msra.mxu0 0
    %1837 = vmatprep.subr.bf16.mxu0 0
    %1838 = vmatpush1.bf16.msra.mxu0 0
    %1839 = vmatprep.subr.bf16.mxu0 0
    %1840 = vmatpush1.bf16.msra.mxu0 0
    %1841 = vmatprep.mubr.bf16.mxu0 0
    %1842 = vmatmul.mubr.bf16.gmra.mrb[0].mxu0 %v1807
    %v1843 = vpop.f32.mrb[0].mxu0
    %v1844 = vadd.f32 0.0, %v1843
    %v1845 = vpop.f32.mrb[0].mxu0
    %v1846 = vpop.f32.mrb[0].mxu0
    %v1847 = vpop.f32.mrb[0].mxu0
    %1848 = vdwg.mxu0
    %v1849 = vmax.f32 %v1844, 0.0
    %v1850 = vmul.f32 %v1849, %v1849
    %v1851 = vpack.c.bf16 %v1850, %v1850
    %v1852 = vld [vmem:[%s23] sm:$0xf]
    %v1853 = vld [vmem:[%s23 + $0x4] sm:$0xf]
    %v1854 = vld [vmem:[%s23 + $0x8] sm:$0xf]
    %v1855 = vld [vmem:[%s23 + $0xc] sm:$0xf]
    %v1856 = vld [vmem:[%s23 + $0x10] sm:$0xf]
    %v1857 = vld [vmem:[%s23 + $0x14] sm:$0xf]
    %v1858 = vld [vmem:[%s23 + $0x18] sm:$0xf]
    %v1859 = vld [vmem:[%s23 + $0x1c] sm:$0xf]
    %v1860 = vld [vmem:[%s23 + $0x20] sm:$0xf]
    %v1861 = vld [vmem:[%s23 + $0x24] sm:$0xf]
    %v1862 = vld [vmem:[%s23 + $0x28] sm:$0xf]
    %v1863 = vld [vmem:[%s23 + $0x2c] sm:$0xf]
    %v1864 = vld [vmem:[%s23 + $0x30] sm:$0xf]
    %v1865 = vld [vmem:[%s23 + $0x34] sm:$0xf]
    %v1866 = vld [vmem:[%s23 + $0x38] sm:$0xf]
    %v1867 = vld [vmem:[%s23 + $0x3c] sm:$0xf]
    %v1884 = vunpack.c.l.b16 %v1852
    %v1885 = vunpack.c.l.b16 %v1853
    %v1886 = vunpack.c.l.b16 %v1854
    %v1887 = vunpack.c.l.b16 %v1855
    %v1888 = vunpack.c.l.b16 %v1856
    %v1889 = vunpack.c.l.b16 %v1857
    %v1890 = vunpack.c.l.b16 %v1858
    %v1891 = vunpack.c.l.b16 %v1859
    %v1892 = vunpack.c.l.b16 %v1860
    %v1893 = vunpack.c.l.b16 %v1861
    %v1894 = vunpack.c.l.b16 %v1862
    %v1895 = vunpack.c.l.b16 %v1863
    %v1896 = vunpack.c.l.b16 %v1864
    %v1897 = vunpack.c.l.b16 %v1865
    %v1898 = vunpack.c.l.b16 %v1866
    %v1899 = vunpack.c.l.b16 %v1867
    %v1900 = vpack.c.b16 %v1885, %v1884
    %v1901 = vpack.c.b16 %v1887, %v1886
    %v1902 = vpack.c.b16 %v1889, %v1888
    %v1903 = vpack.c.b16 %v1891, %v1890
    %v1904 = vpack.c.b16 %v1893, %v1892
    %v1905 = vpack.c.b16 %v1895, %v1894
    %v1906 = vpack.c.b16 %v1897, %v1896
    %v1907 = vpack.c.b16 %v1899, %v1898
    %1916 = vmatprep.subr.bf16.mxu0 0
    %1917 = vmatpush1.bf16.msra.mxu0 %v1900
    %1918 = vmatprep.subr.bf16.mxu0 0
    %1919 = vmatpush1.bf16.msra.mxu0 %v1901
    %1920 = vmatprep.subr.bf16.mxu0 0
    %1921 = vmatpush1.bf16.msra.mxu0 %v1902
    %1922 = vmatprep.subr.bf16.mxu0 0
    %1923 = vmatpush1.bf16.msra.mxu0 %v1903
    %1924 = vmatprep.subr.bf16.mxu0 0
    %1925 = vmatpush1.bf16.msra.mxu0 %v1904
    %1926 = vmatprep.subr.bf16.mxu0 0
    %1927 = vmatpush1.bf16.msra.mxu0 %v1905
    %1928 = vmatprep.subr.bf16.mxu0 0
    %1929 = vmatpush1.bf16.msra.mxu0 %v1906
    %1930 = vmatprep.subr.bf16.mxu0 0
    %1931 = vmatpush1.bf16.msra.mxu0 %v1907
    %1932 = vmatprep.subr.bf16.mxu0 0
    %1933 = vmatpush1.bf16.msra.mxu0 0
    %1934 = vmatprep.subr.bf16.mxu0 0
    %1935 = vmatpush1.bf16.msra.mxu0 0
    %1936 = vmatprep.subr.bf16.mxu0 0
    %1937 = vmatpush1.bf16.msra.mxu0 0
    %1938 = vmatprep.subr.bf16.mxu0 0
    %1939 = vmatpush1.bf16.msra.mxu0 0
    %1940 = vmatprep.subr.bf16.mxu0 0
    %1941 = vmatpush1.bf16.msra.mxu0 0
    %1942 = vmatprep.subr.bf16.mxu0 0
    %1943 = vmatpush1.bf16.msra.mxu0 0
    %1944 = vmatprep.subr.bf16.mxu0 0
    %1945 = vmatpush1.bf16.msra.mxu0 0
    %1946 = vmatprep.subr.bf16.mxu0 0
    %1947 = vmatpush1.bf16.msra.mxu0 0
    %1948 = vmatprep.mubr.bf16.mxu0 0
    %1949 = vmatmul.mubr.bf16.gmra.mrb[0].mxu0 %v1851
    %v1950 = vpop.f32.mrb[0].mxu0
    %v1951 = vadd.f32 0.0, %v1950
    %v1952 = vpop.f32.mrb[0].mxu0
    %v1953 = vpop.f32.mrb[0].mxu0
    %v1954 = vpop.f32.mrb[0].mxu0
    %1955 = vdwg.mxu0
    %v1956 = vpack.c.bf16 %v1788, %v1788
    %v1957 = vld [vmem:[%s24] sm:$0xf]
    %v1958 = vld [vmem:[%s24 + $0x4] sm:$0xf]
    %v1959 = vld [vmem:[%s24 + $0x8] sm:$0xf]
    %v1960 = vld [vmem:[%s24 + $0xc] sm:$0xf]
    %v1965 = vunpack.c.l.b16 %v1957
    %v1966 = vunpack.c.l.b16 %v1958
    %v1967 = vunpack.c.l.b16 %v1959
    %v1968 = vunpack.c.l.b16 %v1960
    %v1969 = vpack.c.b16 %v1966, %v1965
    %v1970 = vpack.c.b16 %v1968, %v1967
    %v1974 = vsel %vm94, %v1956, 0
    %1976 = vmatprep.subr.bf16.mxu0 0
    %1977 = vmatpush1.bf16.msra.mxu0 %v1969
    %1978 = vmatprep.subr.bf16.mxu0 0
    %1979 = vmatpush1.bf16.msra.mxu0 %v1970
    %1980 = vmatprep.subr.bf16.mxu0 0
    %1981 = vmatpush1.bf16.msra.mxu0 0
    %1982 = vmatprep.subr.bf16.mxu0 0
    %1983 = vmatpush1.bf16.msra.mxu0 0
    %1984 = vmatprep.subr.bf16.mxu0 0
    %1985 = vmatpush1.bf16.msra.mxu0 0
    %1986 = vmatprep.subr.bf16.mxu0 0
    %1987 = vmatpush1.bf16.msra.mxu0 0
    %1988 = vmatprep.subr.bf16.mxu0 0
    %1989 = vmatpush1.bf16.msra.mxu0 0
    %1990 = vmatprep.subr.bf16.mxu0 0
    %1991 = vmatpush1.bf16.msra.mxu0 0
    %1992 = vmatprep.subr.bf16.mxu0 0
    %1993 = vmatpush1.bf16.msra.mxu0 0
    %1994 = vmatprep.subr.bf16.mxu0 0
    %1995 = vmatpush1.bf16.msra.mxu0 0
    %1996 = vmatprep.subr.bf16.mxu0 0
    %1997 = vmatpush1.bf16.msra.mxu0 0
    %1998 = vmatprep.subr.bf16.mxu0 0
    %1999 = vmatpush1.bf16.msra.mxu0 0
    %2000 = vmatprep.subr.bf16.mxu0 0
    %2001 = vmatpush1.bf16.msra.mxu0 0
    %2002 = vmatprep.subr.bf16.mxu0 0
    %2003 = vmatpush1.bf16.msra.mxu0 0
    %2004 = vmatprep.subr.bf16.mxu0 0
    %2005 = vmatpush1.bf16.msra.mxu0 0
    %2006 = vmatprep.subr.bf16.mxu0 0
    %2007 = vmatpush1.bf16.msra.mxu0 0
    %2008 = vmatprep.mubr.bf16.mxu0 0
    %2009 = vmatmul.mubr.bf16.gmra.mrb[0].mxu0 %v1974
    %v2010 = vpop.f32.mrb[0].mxu0
    %v2011 = vadd.f32 0.0, %v2010
    %v2012 = vpop.f32.mrb[0].mxu0
    %v2013 = vpop.f32.mrb[0].mxu0
    %v2014 = vpop.f32.mrb[0].mxu0
    %2015 = vdwg.mxu0
    %v2016 = vxor.u32 %v2011, 2147483648
    %v2017 = vmul.f32 %v2016, 1.442695
    %v2018 = vpow.pop %v2017
    %v2019 = vadd.f32 %v2018, 1.0
    %v2020 = vrcp.pop %v2019
    %v2021 = vmul.f32 1.0, %v2020
    %v2022 = vmul.f32 %v2021, %v1951
    %v2023 = vadd.f32 %v1723, %v2022
    %v2024 = vld [vmem:[%s9] sm:$0x1]
    %v2025 = vld [vmem:[%s10] sm:$0x1]
    %v2026 = vsel %vm94, %v2023, 0.0
    %2027 = vadd.xlane.f32.xlu0 %v2026
    %v2028 = vpop.xlane.xlu0 %2027
    %v2029 = vmul.f32 %v2028, %v98
    %v2030 = vsub.f32 %v2023, %v2029
    %v2031 = vmul.f32 %v2030, %v2030
    %v2032 = vsel %vm94, %v2031, 0.0
    %2033 = vadd.xlane.f32.xlu0 %v2032
    %v2034 = vpop.xlane.xlu0 %2033
    %v2035 = vmul.f32 %v2034, %v98
    %v2036 = vadd.f32 %v2035, 1e-05
    %v2037 = vrsqrt.pop %v2036
    %v2038 = vmul.f32 %v2030, %v2037
    %v2040 = vlaneseq
    %v2041 = vshrl.u32 %v2040, 7
    %v2042 = vsub.s32 0, %v2041
    %v2043 = vrot.slane %v2024, %v2042
    %v2045 = vmul.f32 %v2038, %v2043
    %v2047 = vlaneseq
    %v2048 = vshrl.u32 %v2047, 7
    %v2049 = vsub.s32 0, %v2048
    %v2050 = vrot.slane %v2025, %v2049
    %v2052 = vadd.f32 %v2045, %v2050
    %v2053 = vpack.c.bf16 %v2052, %v2052
    %v2054 = vld [vmem:[%s25] sm:$0xf]
    %v2055 = vld [vmem:[%s25 + $0x4] sm:$0xf]
    %v2056 = vld [vmem:[%s25 + $0x8] sm:$0xf]
    %v2057 = vld [vmem:[%s25 + $0xc] sm:$0xf]
    %v2062 = vunpack.c.l.b16 %v2054
    %v2063 = vunpack.c.l.b16 %v2055
    %v2064 = vunpack.c.l.b16 %v2056
    %v2065 = vunpack.c.l.b16 %v2057
    %v2066 = vpack.c.b16 %v2063, %v2062
    %v2067 = vpack.c.b16 %v2065, %v2064
    %v2071 = vsel %vm94, %v2053, 0
    %2073 = vmatprep.subr.bf16.mxu0 0
    %2074 = vmatpush1.bf16.msra.mxu0 %v2066
    %2075 = vmatprep.subr.bf16.mxu0 0
    %2076 = vmatpush1.bf16.msra.mxu0 %v2067
    %2077 = vmatprep.subr.bf16.mxu0 0
    %2078 = vmatpush1.bf16.msra.mxu0 0
    %2079 = vmatprep.subr.bf16.mxu0 0
    %2080 = vmatpush1.bf16.msra.mxu0 0
    %2081 = vmatprep.subr.bf16.mxu0 0
    %2082 = vmatpush1.bf16.msra.mxu0 0
    %2083 = vmatprep.subr.bf16.mxu0 0
    %2084 = vmatpush1.bf16.msra.mxu0 0
    %2085 = vmatprep.subr.bf16.mxu0 0
    %2086 = vmatpush1.bf16.msra.mxu0 0
    %2087 = vmatprep.subr.bf16.mxu0 0
    %2088 = vmatpush1.bf16.msra.mxu0 0
    %2089 = vmatprep.subr.bf16.mxu0 0
    %2090 = vmatpush1.bf16.msra.mxu0 0
    %2091 = vmatprep.subr.bf16.mxu0 0
    %2092 = vmatpush1.bf16.msra.mxu0 0
    %2093 = vmatprep.subr.bf16.mxu0 0
    %2094 = vmatpush1.bf16.msra.mxu0 0
    %2095 = vmatprep.subr.bf16.mxu0 0
    %2096 = vmatpush1.bf16.msra.mxu0 0
    %2097 = vmatprep.subr.bf16.mxu0 0
    %2098 = vmatpush1.bf16.msra.mxu0 0
    %2099 = vmatprep.subr.bf16.mxu0 0
    %2100 = vmatpush1.bf16.msra.mxu0 0
    %2101 = vmatprep.subr.bf16.mxu0 0
    %2102 = vmatpush1.bf16.msra.mxu0 0
    %2103 = vmatprep.subr.bf16.mxu0 0
    %2104 = vmatpush1.bf16.msra.mxu0 0
    %2105 = vmatprep.mubr.bf16.mxu0 0
    %2106 = vmatmul.mubr.bf16.gmra.mrb[0].mxu0 %v2071
    %v2107 = vpop.f32.mrb[0].mxu0
    %v2108 = vadd.f32 0.0, %v2107
    %v2109 = vpop.f32.mrb[0].mxu0
    %v2110 = vpop.f32.mrb[0].mxu0
    %v2111 = vpop.f32.mrb[0].mxu0
    %2112 = vdwg.mxu0
    %v2113 = vld [vmem:[%s26] sm:$0xf]
    %v2114 = vld [vmem:[%s26 + $0x4] sm:$0xf]
    %v2115 = vld [vmem:[%s26 + $0x8] sm:$0xf]
    %v2116 = vld [vmem:[%s26 + $0xc] sm:$0xf]
    %v2121 = vunpack.c.l.b16 %v2113
    %v2122 = vunpack.c.l.b16 %v2114
    %v2123 = vunpack.c.l.b16 %v2115
    %v2124 = vunpack.c.l.b16 %v2116
    %v2125 = vpack.c.b16 %v2122, %v2121
    %v2126 = vpack.c.b16 %v2124, %v2123
    %2129 = vmatprep.subr.bf16.mxu0 0
    %2130 = vmatpush1.bf16.msra.mxu0 %v2125
    %2131 = vmatprep.subr.bf16.mxu0 0
    %2132 = vmatpush1.bf16.msra.mxu0 %v2126
    %2133 = vmatprep.subr.bf16.mxu0 0
    %2134 = vmatpush1.bf16.msra.mxu0 0
    %2135 = vmatprep.subr.bf16.mxu0 0
    %2136 = vmatpush1.bf16.msra.mxu0 0
    %2137 = vmatprep.subr.bf16.mxu0 0
    %2138 = vmatpush1.bf16.msra.mxu0 0
    %2139 = vmatprep.subr.bf16.mxu0 0
    %2140 = vmatpush1.bf16.msra.mxu0 0
    %2141 = vmatprep.subr.bf16.mxu0 0
    %2142 = vmatpush1.bf16.msra.mxu0 0
    %2143 = vmatprep.subr.bf16.mxu0 0
    %2144 = vmatpush1.bf16.msra.mxu0 0
    %2145 = vmatprep.subr.bf16.mxu0 0
    %2146 = vmatpush1.bf16.msra.mxu0 0
    %2147 = vmatprep.subr.bf16.mxu0 0
    %2148 = vmatpush1.bf16.msra.mxu0 0
    %2149 = vmatprep.subr.bf16.mxu0 0
    %2150 = vmatpush1.bf16.msra.mxu0 0
    %2151 = vmatprep.subr.bf16.mxu0 0
    %2152 = vmatpush1.bf16.msra.mxu0 0
    %2153 = vmatprep.subr.bf16.mxu0 0
    %2154 = vmatpush1.bf16.msra.mxu0 0
    %2155 = vmatprep.subr.bf16.mxu0 0
    %2156 = vmatpush1.bf16.msra.mxu0 0
    %2157 = vmatprep.subr.bf16.mxu0 0
    %2158 = vmatpush1.bf16.msra.mxu0 0
    %2159 = vmatprep.subr.bf16.mxu0 0
    %2160 = vmatpush1.bf16.msra.mxu0 0
    %2161 = vmatprep.mubr.bf16.mxu0 0
    %2162 = vmatmul.mubr.bf16.gmra.mrb[0].mxu0 %v2071
    %v2163 = vpop.f32.mrb[0].mxu0
    %v2164 = vadd.f32 0.0, %v2163
    %v2165 = vpop.f32.mrb[0].mxu0
    %v2166 = vpop.f32.mrb[0].mxu0
    %v2167 = vpop.f32.mrb[0].mxu0
    %2168 = vdwg.mxu0
    %s2169 = scalar_lea.vmem %s1, 8
    %v2170 = vld [vmem:[%s2169] sm:$0xff]
    %v2171 = vpack.c.bf16 %v2170, %v2170
    %v2172 = vld [vmem:[%s27] sm:$0xf]
    %v2173 = vld [vmem:[%s27 + $0x4] sm:$0xf]
    %v2174 = vld [vmem:[%s27 + $0x8] sm:$0xf]
    %v2175 = vld [vmem:[%s27 + $0xc] sm:$0xf]
    %v2180 = vunpack.c.l.b16 %v2172
    %v2181 = vunpack.c.l.b16 %v2173
    %v2182 = vunpack.c.l.b16 %v2174
    %v2183 = vunpack.c.l.b16 %v2175
    %v2184 = vpack.c.b16 %v2181, %v2180
    %v2185 = vpack.c.b16 %v2183, %v2182
    %v2189 = vsel %vm94, %v2171, 0
    %2191 = vmatprep.subr.bf16.mxu0 0
    %2192 = vmatpush1.bf16.msra.mxu0 %v2184
    %2193 = vmatprep.subr.bf16.mxu0 0
    %2194 = vmatpush1.bf16.msra.mxu0 %v2185
    %2195 = vmatprep.subr.bf16.mxu0 0
    %2196 = vmatpush1.bf16.msra.mxu0 0
    %2197 = vmatprep.subr.bf16.mxu0 0
    %2198 = vmatpush1.bf16.msra.mxu0 0
    %2199 = vmatprep.subr.bf16.mxu0 0
    %2200 = vmatpush1.bf16.msra.mxu0 0
    %2201 = vmatprep.subr.bf16.mxu0 0
    %2202 = vmatpush1.bf16.msra.mxu0 0
    %2203 = vmatprep.subr.bf16.mxu0 0
    %2204 = vmatpush1.bf16.msra.mxu0 0
    %2205 = vmatprep.subr.bf16.mxu0 0
    %2206 = vmatpush1.bf16.msra.mxu0 0
    %2207 = vmatprep.subr.bf16.mxu0 0
    %2208 = vmatpush1.bf16.msra.mxu0 0
    %2209 = vmatprep.subr.bf16.mxu0 0
    %2210 = vmatpush1.bf16.msra.mxu0 0
    %2211 = vmatprep.subr.bf16.mxu0 0
    %2212 = vmatpush1.bf16.msra.mxu0 0
    %2213 = vmatprep.subr.bf16.mxu0 0
    %2214 = vmatpush1.bf16.msra.mxu0 0
    %2215 = vmatprep.subr.bf16.mxu0 0
    %2216 = vmatpush1.bf16.msra.mxu0 0
    %2217 = vmatprep.subr.bf16.mxu0 0
    %2218 = vmatpush1.bf16.msra.mxu0 0
    %2219 = vmatprep.subr.bf16.mxu0 0
    %2220 = vmatpush1.bf16.msra.mxu0 0
    %2221 = vmatprep.subr.bf16.mxu0 0
    %2222 = vmatpush1.bf16.msra.mxu0 0
    %2223 = vmatprep.mubr.bf16.mxu0 0
    %2224 = vmatmul.mubr.bf16.gmra.mrb[0].mxu0 %v2189
    %v2225 = vpop.f32.mrb[0].mxu0
    %v2226 = vadd.f32 0.0, %v2225
    %v2227 = vpop.f32.mrb[0].mxu0
    %v2228 = vpop.f32.mrb[0].mxu0
    %v2229 = vpop.f32.mrb[0].mxu0
    %2230 = vdwg.mxu0
    %v2231 = vpack.c.bf16 %v2108, %v2108
    %v2232 = vpack.c.bf16 %v2164, %v2164
    %2233 = vmatprep.subr.bf16.mxu0 0
    %2234 = vmatpush1.bf16.xpose.msra.mxu0 %v2232
    %2235 = vmatprep.subr.bf16.mxu0 0
    %2236 = vmatpush1.bf16.xpose.msra.mxu0 0
    %2237 = vmatprep.subr.bf16.mxu0 0
    %2238 = vmatpush1.bf16.xpose.msra.mxu0 0
    %2239 = vmatprep.subr.bf16.mxu0 0
    %2240 = vmatpush1.bf16.xpose.msra.mxu0 0
    %2241 = vmatprep.subr.bf16.mxu0 0
    %2242 = vmatpush1.bf16.xpose.msra.mxu0 0
    %2243 = vmatprep.subr.bf16.mxu0 0
    %2244 = vmatpush1.bf16.xpose.msra.mxu0 0
    %2245 = vmatprep.subr.bf16.mxu0 0
    %2246 = vmatpush1.bf16.xpose.msra.mxu0 0
    %2247 = vmatprep.subr.bf16.mxu0 0
    %2248 = vmatpush1.bf16.xpose.msra.mxu0 0
    %2249 = vmatprep.subr.bf16.mxu0 0
    %2250 = vmatpush1.bf16.xpose.msra.mxu0 0
    %2251 = vmatprep.subr.bf16.mxu0 0
    %2252 = vmatpush1.bf16.xpose.msra.mxu0 0
    %2253 = vmatprep.subr.bf16.mxu0 0
    %2254 = vmatpush1.bf16.xpose.msra.mxu0 0
    %2255 = vmatprep.subr.bf16.mxu0 0
    %2256 = vmatpush1.bf16.xpose.msra.mxu0 0
    %2257 = vmatprep.subr.bf16.mxu0 0
    %2258 = vmatpush1.bf16.xpose.msra.mxu0 0
    %2259 = vmatprep.subr.bf16.mxu0 0
    %2260 = vmatpush1.bf16.xpose.msra.mxu0 0
    %2261 = vmatprep.subr.bf16.mxu0 0
    %2262 = vmatpush1.bf16.xpose.msra.mxu0 0
    %2263 = vmatprep.subr.bf16.mxu0 0
    %2264 = vmatpush1.bf16.xpose.msra.mxu0 0
    %2265 = vmatprep.mubr.bf16.mxu0 0
    %2266 = vmatmul.mubr.bf16.gmra.mrb[0].mxu0 %v2231
    %v2267 = vpop.f32.mrb[0].mxu0
    %v2268 = vadd.f32 0.0, %v2267
    %v2269 = vpop.f32.mrb[0].mxu0
    %v2270 = vpop.f32.mrb[0].mxu0
    %v2271 = vpop.f32.mrb[0].mxu0
    %2272 = vdwg.mxu0
    %v2273 = vmul.f32 %v2268, 0.25
    %v2274 = vsel %vm1605, %v2273, 0.0
    %v2275 = vpack.c.bf16 %v2274, %v2274
    %v2276 = vpack.c.bf16 %v2226, %v2226
    %v2278 = vsel %vm1609, %v2275, 0
    %v2281 = vsel %vm1613, %v2276, 0
    %2283 = vmatprep.subr.bf16.mxu0 0
    %2284 = vmatpush1.bf16.msra.mxu0 %v2281
    %2285 = vmatprep.subr.bf16.mxu0 0
    %2286 = vmatpush1.bf16.msra.mxu0 0
    %2287 = vmatprep.subr.bf16.mxu0 0
    %2288 = vmatpush1.bf16.msra.mxu0 0
    %2289 = vmatprep.subr.bf16.mxu0 0
    %2290 = vmatpush1.bf16.msra.mxu0 0
    %2291 = vmatprep.subr.bf16.mxu0 0
    %2292 = vmatpush1.bf16.msra.mxu0 0
    %2293 = vmatprep.subr.bf16.mxu0 0
    %2294 = vmatpush1.bf16.msra.mxu0 0
    %2295 = vmatprep.subr.bf16.mxu0 0
    %2296 = vmatpush1.bf16.msra.mxu0 0
    %2297 = vmatprep.subr.bf16.mxu0 0
    %2298 = vmatpush1.bf16.msra.mxu0 0
    %2299 = vmatprep.subr.bf16.mxu0 0
    %2300 = vmatpush1.bf16.msra.mxu0 0
    %2301 = vmatprep.subr.bf16.mxu0 0
    %2302 = vmatpush1.bf16.msra.mxu0 0
    %2303 = vmatprep.subr.bf16.mxu0 0
    %2304 = vmatpush1.bf16.msra.mxu0 0
    %2305 = vmatprep.subr.bf16.mxu0 0
    %2306 = vmatpush1.bf16.msra.mxu0 0
    %2307 = vmatprep.subr.bf16.mxu0 0
    %2308 = vmatpush1.bf16.msra.mxu0 0
    %2309 = vmatprep.subr.bf16.mxu0 0
    %2310 = vmatpush1.bf16.msra.mxu0 0
    %2311 = vmatprep.subr.bf16.mxu0 0
    %2312 = vmatpush1.bf16.msra.mxu0 0
    %2313 = vmatprep.subr.bf16.mxu0 0
    %2314 = vmatpush1.bf16.msra.mxu0 0
    %2315 = vmatprep.mubr.bf16.mxu0 0
    %2316 = vmatmul.mubr.bf16.gmra.mrb[0].mxu0 %v2278
    %v2317 = vpop.f32.mrb[0].mxu0
    %v2318 = vadd.f32 0.0, %v2317
    %v2319 = vpop.f32.mrb[0].mxu0
    %v2320 = vpop.f32.mrb[0].mxu0
    %v2321 = vpop.f32.mrb[0].mxu0
    %2322 = vdwg.mxu0
    %v2323 = vadd.f32 %v2023, %v2318
    %s2324 = scalar_lea.vmem [#allocation6], 8
    %2325 = vst.msk [vmem:[%s2324] sm:$0xff] %vm94, %v2323
    // Predicated region
    $region114: #{block_forward.1} parent=1 // pred_check
      _
    $region115: #{block_forward.1} parent=1 // pred_check_branch
      %2327 = sbr.rel (0) target = $region117
    $region116: #{block_forward.1} parent=1 // pred_region
      %s2329 = ssub.s32 256, 256
      %2330 = vsyncadd [#allocation7], %s2329
      %s2331 = sshll.u32 [#allocation6], 4
      %s2332 = int_to_ptr.vmem [resolvable:$true] %s2331
      %2337 = dma.vmem_to_hbm [thread:$0]  %s2332, 256, %s28, [#allocation7], 128, 128, 8
    $region117: #{block_forward.1} parent=1 // pred_fallthru
      _
    // Predicated region
    $region118: #{block_forward.1} parent=1 // pred_check
      _
    $region119: #{block_forward.1} parent=1 // pred_check_branch
      %2339 = sbr.rel (0) target = $region121
    $region120: #{block_forward.1} parent=1 // pred_region
      %2340 = dma.done [#allocation7], 256
    $region121: #{block_forward.1} parent=1 // pred_fallthru
      _
    %2341 = vsyncpa [#allocation7], 1

</llo_original>
